<compile_context>
chip_gen: v6e
topology: v6e:2x2x1
jax: 0.10.0
libtpu: 0.0.40
codegen_flags: <defaults>
</compile_context>

<pallas_src>
import jax
import jax.numpy as jnp
from jax.experimental import pallas as pl
from jax.experimental.pallas import tpu as pltpu


# ConvTranspose2d(k=4, s=2, p=1): output row oh = 2*m + ph only touches two
# kernel rows.  With the input zero-padded by 1:
#   ph=0: taps at padded rows (m+1, kh=1) and (m+0, kh=3)
#   ph=1: taps at padded rows (m+1, kh=2) and (m+2, kh=0)
_ROW_OFF = ((1, 0), (1, 2))   # [parity][tap] -> row offset into 1-zero-padded input
_KTAP = ((1, 3), (2, 0))      # [parity][tap] -> ConvTranspose2d kernel index
_PARITIES = ((0, 0), (0, 1), (1, 0), (1, 1))
_TAPS = ((0, 0), (0, 1), (1, 0), (1, 1))


def _round_up(v, m):
    return -(-v // m) * m


# ------------------------------ Pallas kernel --------------------------------

def _outblock_kernel(xp_ref, w_ref, b_ref, o_ref):
    """One batch image: transposed-conv (4x4, s2, p1) + bias + tanh.

    xp_ref: (1, H+2, W+2, Cin)  bf16  zero-padded NHWC input
    w_ref : (4, 4, Cin, cpad)   bf16  [parity, tap] weight matrices (0-padded cols)
    b_ref : (1, 4*cpad)         f32   bias tiled per parity (0-padded cols)
    o_ref : (1, H*W, 4*cpad)    bf16  parity-packed tanh output
    """
    _, hp2, wp2, cin = xp_ref.shape
    h, w = hp2 - 2, wp2 - 2
    cpad = w_ref.shape[-1]

    parts = []
    for p_idx, (ph, pw) in enumerate(_PARITIES):
        acc = jnp.zeros((h * w, cpad), jnp.float32)
        for t_idx, (dh, dw) in enumerate(_TAPS):
            r0 = _ROW_OFF[ph][dh]
            c0 = _ROW_OFF[pw][dw]
            # Shifted window of the resident input tile -> im2col column block,
            # built entirely in VMEM (never materialized in HBM).
            tap = xp_ref[0, r0:r0 + h, c0:c0 + w, :].reshape(h * w, cin)
            acc = acc + jnp.dot(tap, w_ref[p_idx, t_idx],
                                preferred_element_type=jnp.float32)
        parts.append(acc)

    y = jnp.concatenate(parts, axis=-1) + b_ref[...]     # (H*W, 4*cpad) f32
    o_ref[0] = jnp.tanh(y).astype(o_ref.dtype)           # single lane-dense store


def _outblock_pallas(xp, wk, bcomb, B, H, W):
    cin = xp.shape[-1]
    cpad = wk.shape[-1]
    lanes = 4 * cpad

    return pl.pallas_call(
        _outblock_kernel,
        out_shape=jax.ShapeDtypeStruct((B, H * W, lanes), jnp.bfloat16),
        grid_spec=pltpu.PrefetchScalarGridSpec(
            num_scalar_prefetch=0,
            grid=(B,),
            in_specs=[
                pl.BlockSpec((1, H + 2, W + 2, cin), lambda b: (b, 0, 0, 0)),
                pl.BlockSpec((4, 4, cin, cpad), lambda b: (0, 0, 0, 0)),
                pl.BlockSpec((1, lanes), lambda b: (0, 0)),
            ],
            out_specs=pl.BlockSpec((1, H * W, lanes), lambda b: (b, 0, 0)),
        ),
        compiler_params=pltpu.CompilerParams(
            dimension_semantics=("parallel",),
        ),
    )(xp, wk, bcomb)


# ------------------------------ JAX glue --------------------------------------

def _parity_tap_weights(w, cpad):
    """ConvTranspose2d weight (Cin, Cout, 4, 4) -> (4 parity, 4 tap, Cin, cpad) bf16."""
    c_out = w.shape[1]
    mats = []
    for ph, pw in _PARITIES:
        taps = []
        for dh, dw in _TAPS:
            taps.append(w[:, :, _KTAP[ph][dh], _KTAP[pw][dw]])   # (Cin, Cout)
        mats.append(jnp.stack(taps, axis=0))                      # (4, Cin, Cout)
    wk = jnp.stack(mats, axis=0)                                  # (4, 4, Cin, Cout)
    wk = jnp.pad(wk, ((0, 0), (0, 0), (0, 0), (0, cpad - c_out)))
    return wk.astype(jnp.bfloat16)


def spectral_normalize(w, iters=50):
    # TODO(synk): PyTorch spectral_norm runs one power iteration per forward with
    # a persistent random u buffer; here a converged power iteration is applied
    # once at parameter construction (dim=1 reshape, as PyTorch uses for
    # ConvTranspose2d), so values match the converged estimate, not step-for-step.
    m = jnp.transpose(w, (1, 0, 2, 3)).reshape(w.shape[1], -1).astype(jnp.float32)
    u = jnp.full((m.shape[0],), 1.0 / jnp.sqrt(m.shape[0]), jnp.float32)
    v = m.T @ u
    v = v / (jnp.linalg.norm(v) + 1e-12)
    for _ in range(iters):
        u = m @ v
        u = u / (jnp.linalg.norm(u) + 1e-12)
        v = m.T @ u
        v = v / (jnp.linalg.norm(v) + 1e-12)
    sigma = u @ (m @ v)
    return w / sigma


def out_block_forward(x_nchw, w, b):
    """OutBlock forward: ConvTranspose2d(Cin, Cout, 4, 2, 1) + Tanh.

    x: (B, Cin, H, W) f32, w: (Cin, Cout, 4, 4) (already spectrally normalized),
    b: (Cout,).  Returns (B, Cout, 2H, 2W) f32.
    """
    B, _, H, W = x_nchw.shape
    c_out = w.shape[1]
    cpad = _round_up(c_out, 32)          # per-parity lane slice; 4*cpad % 128 == 0

    x = jnp.transpose(x_nchw, (0, 2, 3, 1)).astype(jnp.bfloat16)     # NHWC bf16
    xp = jnp.pad(x, ((0, 0), (1, 1), (1, 1), (0, 0)))                # spatial halo

    wk = _parity_tap_weights(w, cpad)                                 # (4,4,Cin,cpad)
    bcomb = jnp.tile(jnp.pad(b.astype(jnp.float32), (0, cpad - c_out)), 4)[None, :]

    y = _outblock_pallas(xp, wk, bcomb, B, H, W)                      # (B,H*W,4*cpad)
    y = y.reshape(B, H, W, 2, 2, cpad)[..., :c_out].astype(jnp.float32)
    y = jnp.transpose(y, (0, 1, 3, 2, 4, 5)).reshape(B, 2 * H, 2 * W, c_out)
    return jnp.transpose(y, (0, 3, 1, 2))                             # NCHW f32


def ref_out_block(x_nchw, w, b):
    """Pure-JAX/XLA reference (f32): transposed conv as lhs-dilated conv + tanh."""
    wf = jnp.transpose(w[:, :, ::-1, ::-1], (1, 0, 2, 3))             # (Cout,Cin,4,4)
    y = jax.lax.conv_general_dilated(
        x_nchw, wf, window_strides=(1, 1), padding=((2, 2), (2, 2)),
        lhs_dilation=(2, 2), dimension_numbers=("NCHW", "OIHW", "NCHW"))
    return jnp.tanh(y + b[None, :, None, None])


if __name__ == "__main__":
    key = jax.random.PRNGKey(0)
    kx, kw, kb = jax.random.split(key, 3)

    B, CH_IN, CH_OUT, H, W = 2, 64, 3, 16, 16
    x = jax.random.normal(kx, (B, CH_IN, H, W), jnp.float32)
    w = spectral_normalize(
        jax.random.normal(kw, (CH_IN, CH_OUT, 4, 4), jnp.float32) * 0.02)
    b = jax.random.normal(kb, (CH_OUT,), jnp.float32) * 0.01

    out = jax.block_until_ready(out_block_forward(x, w, b))
    assert out.shape == (B, CH_OUT, 2 * H, 2 * W), out.shape
    assert bool(jnp.all(jnp.isfinite(out)))

    # Numerical check against the XLA reference (bf16-matmul tolerance).
    ref = ref_out_block(x, w, b)
    err = float(jnp.max(jnp.abs(out - ref)))
    assert err < 5e-2, f"max abs err {err}"

    print("KERNEL_OK")
</pallas_src>

<mosaic_0001>
module attributes {stable_mosaic.version = 11 : i64} {
  func.func @_outblock_kernel(%arg0: i32, %arg1: memref<1x18x18x64xbf16, #tpu.memory_space<vmem>>, %arg2: memref<4x4x64x32xbf16, #tpu.memory_space<vmem>>, %arg3: memref<1x128xf32, #tpu.memory_space<vmem>>, %arg4: memref<1x256x128xbf16, #tpu.memory_space<vmem>>) attributes {dimension_semantics = [#tpu.dimension_semantics<parallel>], iteration_bounds = array<i64: 2>, scalar_prefetch = 0 : i64, scratch_operands = 0 : i64, tpu.core_type = #tpu.core_type<tc>, window_params = [{transform_indices = @transform_0, window_bounds = array<i64: 1, 18, 18, 64>}, {pipeline_mode = #tpu.pipeline_mode<synchronous>, transform_indices = @transform_1, window_bounds = array<i64: 4, 4, 64, 32>}, {pipeline_mode = #tpu.pipeline_mode<synchronous>, transform_indices = @transform_2, window_bounds = array<i64: 1, 128>}, {transform_indices = @transform_3, window_bounds = array<i64: 1, 256, 128>}]} {
    %cst = arith.constant 0.000000e+00 : f32
    %0 = vector.broadcast %cst : f32 to vector<256x32xf32>
    %c0 = arith.constant 0 : index
    %c1 = arith.constant 1 : index
    %c1_0 = arith.constant 1 : index
    %c0_1 = arith.constant 0 : index
    %1 = vector.load %arg1[%c0, %c1, %c1_0, %c0_1] : memref<1x18x18x64xbf16, #tpu.memory_space<vmem>>, vector<1x16x16x64xbf16>
    %2 = vector.shape_cast %1 : vector<1x16x16x64xbf16> to vector<16x16x64xbf16>
    %3 = vector.shape_cast %2 : vector<16x16x64xbf16> to vector<256x64xbf16>
    %c0_2 = arith.constant 0 : index
    %c0_3 = arith.constant 0 : index
    %c0_4 = arith.constant 0 : index
    %c0_5 = arith.constant 0 : index
    %4 = vector.load %arg2[%c0_2, %c0_3, %c0_4, %c0_5] : memref<4x4x64x32xbf16, #tpu.memory_space<vmem>>, vector<1x1x64x32xbf16>
    %5 = vector.shape_cast %4 : vector<1x1x64x32xbf16> to vector<64x32xbf16>
    %cst_6 = arith.constant dense<0.000000e+00> : vector<256x32xf32>
    %6 = tpu.matmul %3, %5, %cst_6 {dimension_numbers = #tpu.dot_dimension_numbers<[1], [0], [0], [1], [0, 0, 1, 1], [], []>} : vector<256x64xbf16>, vector<64x32xbf16>, vector<256x32xf32> -> vector<256x32xf32>
    %7 = arith.addf %0, %6 : vector<256x32xf32>
    %c0_7 = arith.constant 0 : index
    %c1_8 = arith.constant 1 : index
    %c0_9 = arith.constant 0 : index
    %c0_10 = arith.constant 0 : index
    %8 = vector.load %arg1[%c0_7, %c1_8, %c0_9, %c0_10] : memref<1x18x18x64xbf16, #tpu.memory_space<vmem>>, vector<1x16x16x64xbf16>
    %9 = vector.shape_cast %8 : vector<1x16x16x64xbf16> to vector<16x16x64xbf16>
    %10 = vector.shape_cast %9 : vector<16x16x64xbf16> to vector<256x64xbf16>
    %c0_11 = arith.constant 0 : index
    %c1_12 = arith.constant 1 : index
    %c0_13 = arith.constant 0 : index
    %c0_14 = arith.constant 0 : index
    %11 = vector.load %arg2[%c0_11, %c1_12, %c0_13, %c0_14] : memref<4x4x64x32xbf16, #tpu.memory_space<vmem>>, vector<1x1x64x32xbf16>
    %12 = vector.shape_cast %11 : vector<1x1x64x32xbf16> to vector<64x32xbf16>
    %cst_15 = arith.constant dense<0.000000e+00> : vector<256x32xf32>
    %13 = tpu.matmul %10, %12, %cst_15 {dimension_numbers = #tpu.dot_dimension_numbers<[1], [0], [0], [1], [0, 0, 1, 1], [], []>} : vector<256x64xbf16>, vector<64x32xbf16>, vector<256x32xf32> -> vector<256x32xf32>
    %14 = arith.addf %7, %13 : vector<256x32xf32>
    %c0_16 = arith.constant 0 : index
    %c0_17 = arith.constant 0 : index
    %c1_18 = arith.constant 1 : index
    %c0_19 = arith.constant 0 : index
    %15 = vector.load %arg1[%c0_16, %c0_17, %c1_18, %c0_19] : memref<1x18x18x64xbf16, #tpu.memory_space<vmem>>, vector<1x16x16x64xbf16>
    %16 = vector.shape_cast %15 : vector<1x16x16x64xbf16> to vector<16x16x64xbf16>
    %17 = vector.shape_cast %16 : vector<16x16x64xbf16> to vector<256x64xbf16>
    %c0_20 = arith.constant 0 : index
    %c2 = arith.constant 2 : index
    %c0_21 = arith.constant 0 : index
    %c0_22 = arith.constant 0 : index
    %18 = vector.load %arg2[%c0_20, %c2, %c0_21, %c0_22] : memref<4x4x64x32xbf16, #tpu.memory_space<vmem>>, vector<1x1x64x32xbf16>
    %19 = vector.shape_cast %18 : vector<1x1x64x32xbf16> to vector<64x32xbf16>
    %cst_23 = arith.constant dense<0.000000e+00> : vector<256x32xf32>
    %20 = tpu.matmul %17, %19, %cst_23 {dimension_numbers = #tpu.dot_dimension_numbers<[1], [0], [0], [1], [0, 0, 1, 1], [], []>} : vector<256x64xbf16>, vector<64x32xbf16>, vector<256x32xf32> -> vector<256x32xf32>
    %21 = arith.addf %14, %20 : vector<256x32xf32>
    %c0_24 = arith.constant 0 : index
    %c0_25 = arith.constant 0 : index
    %c0_26 = arith.constant 0 : index
    %c0_27 = arith.constant 0 : index
    %22 = vector.load %arg1[%c0_24, %c0_25, %c0_26, %c0_27] : memref<1x18x18x64xbf16, #tpu.memory_space<vmem>>, vector<1x16x16x64xbf16>
    %23 = vector.shape_cast %22 : vector<1x16x16x64xbf16> to vector<16x16x64xbf16>
    %24 = vector.shape_cast %23 : vector<16x16x64xbf16> to vector<256x64xbf16>
    %c0_28 = arith.constant 0 : index
    %c3 = arith.constant 3 : index
    %c0_29 = arith.constant 0 : index
    %c0_30 = arith.constant 0 : index
    %25 = vector.load %arg2[%c0_28, %c3, %c0_29, %c0_30] : memref<4x4x64x32xbf16, #tpu.memory_space<vmem>>, vector<1x1x64x32xbf16>
    %26 = vector.shape_cast %25 : vector<1x1x64x32xbf16> to vector<64x32xbf16>
    %cst_31 = arith.constant dense<0.000000e+00> : vector<256x32xf32>
    %27 = tpu.matmul %24, %26, %cst_31 {dimension_numbers = #tpu.dot_dimension_numbers<[1], [0], [0], [1], [0, 0, 1, 1], [], []>} : vector<256x64xbf16>, vector<64x32xbf16>, vector<256x32xf32> -> vector<256x32xf32>
    %28 = arith.addf %21, %27 : vector<256x32xf32>
    %cst_32 = arith.constant 0.000000e+00 : f32
    %29 = vector.broadcast %cst_32 : f32 to vector<256x32xf32>
    %c0_33 = arith.constant 0 : index
    %c1_34 = arith.constant 1 : index
    %c1_35 = arith.constant 1 : index
    %c0_36 = arith.constant 0 : index
    %30 = vector.load %arg1[%c0_33, %c1_34, %c1_35, %c0_36] : memref<1x18x18x64xbf16, #tpu.memory_space<vmem>>, vector<1x16x16x64xbf16>
    %31 = vector.shape_cast %30 : vector<1x16x16x64xbf16> to vector<16x16x64xbf16>
    %32 = vector.shape_cast %31 : vector<16x16x64xbf16> to vector<256x64xbf16>
    %c1_37 = arith.constant 1 : index
    %c0_38 = arith.constant 0 : index
    %c0_39 = arith.constant 0 : index
    %c0_40 = arith.constant 0 : index
    %33 = vector.load %arg2[%c1_37, %c0_38, %c0_39, %c0_40] : memref<4x4x64x32xbf16, #tpu.memory_space<vmem>>, vector<1x1x64x32xbf16>
    %34 = vector.shape_cast %33 : vector<1x1x64x32xbf16> to vector<64x32xbf16>
    %cst_41 = arith.constant dense<0.000000e+00> : vector<256x32xf32>
    %35 = tpu.matmul %32, %34, %cst_41 {dimension_numbers = #tpu.dot_dimension_numbers<[1], [0], [0], [1], [0, 0, 1, 1], [], []>} : vector<256x64xbf16>, vector<64x32xbf16>, vector<256x32xf32> -> vector<256x32xf32>
    %36 = arith.addf %29, %35 : vector<256x32xf32>
    %c0_42 = arith.constant 0 : index
    %c1_43 = arith.constant 1 : index
    %c2_44 = arith.constant 2 : index
    %c0_45 = arith.constant 0 : index
    %37 = vector.load %arg1[%c0_42, %c1_43, %c2_44, %c0_45] : memref<1x18x18x64xbf16, #tpu.memory_space<vmem>>, vector<1x16x16x64xbf16>
    %38 = vector.shape_cast %37 : vector<1x16x16x64xbf16> to vector<16x16x64xbf16>
    %39 = vector.shape_cast %38 : vector<16x16x64xbf16> to vector<256x64xbf16>
    %c1_46 = arith.constant 1 : index
    %c1_47 = arith.constant 1 : index
    %c0_48 = arith.constant 0 : index
    %c0_49 = arith.constant 0 : index
    %40 = vector.load %arg2[%c1_46, %c1_47, %c0_48, %c0_49] : memref<4x4x64x32xbf16, #tpu.memory_space<vmem>>, vector<1x1x64x32xbf16>
    %41 = vector.shape_cast %40 : vector<1x1x64x32xbf16> to vector<64x32xbf16>
    %cst_50 = arith.constant dense<0.000000e+00> : vector<256x32xf32>
    %42 = tpu.matmul %39, %41, %cst_50 {dimension_numbers = #tpu.dot_dimension_numbers<[1], [0], [0], [1], [0, 0, 1, 1], [], []>} : vector<256x64xbf16>, vector<64x32xbf16>, vector<256x32xf32> -> vector<256x32xf32>
    %43 = arith.addf %36, %42 : vector<256x32xf32>
    %c0_51 = arith.constant 0 : index
    %c0_52 = arith.constant 0 : index
    %c1_53 = arith.constant 1 : index
    %c0_54 = arith.constant 0 : index
    %44 = vector.load %arg1[%c0_51, %c0_52, %c1_53, %c0_54] : memref<1x18x18x64xbf16, #tpu.memory_space<vmem>>, vector<1x16x16x64xbf16>
    %45 = vector.shape_cast %44 : vector<1x16x16x64xbf16> to vector<16x16x64xbf16>
    %46 = vector.shape_cast %45 : vector<16x16x64xbf16> to vector<256x64xbf16>
    %c1_55 = arith.constant 1 : index
    %c2_56 = arith.constant 2 : index
    %c0_57 = arith.constant 0 : index
    %c0_58 = arith.constant 0 : index
    %47 = vector.load %arg2[%c1_55, %c2_56, %c0_57, %c0_58] : memref<4x4x64x32xbf16, #tpu.memory_space<vmem>>, vector<1x1x64x32xbf16>
    %48 = vector.shape_cast %47 : vector<1x1x64x32xbf16> to vector<64x32xbf16>
    %cst_59 = arith.constant dense<0.000000e+00> : vector<256x32xf32>
    %49 = tpu.matmul %46, %48, %cst_59 {dimension_numbers = #tpu.dot_dimension_numbers<[1], [0], [0], [1], [0, 0, 1, 1], [], []>} : vector<256x64xbf16>, vector<64x32xbf16>, vector<256x32xf32> -> vector<256x32xf32>
    %50 = arith.addf %43, %49 : vector<256x32xf32>
    %c0_60 = arith.constant 0 : index
    %c0_61 = arith.constant 0 : index
    %c2_62 = arith.constant 2 : index
    %c0_63 = arith.constant 0 : index
    %51 = vector.load %arg1[%c0_60, %c0_61, %c2_62, %c0_63] : memref<1x18x18x64xbf16, #tpu.memory_space<vmem>>, vector<1x16x16x64xbf16>
    %52 = vector.shape_cast %51 : vector<1x16x16x64xbf16> to vector<16x16x64xbf16>
    %53 = vector.shape_cast %52 : vector<16x16x64xbf16> to vector<256x64xbf16>
    %c1_64 = arith.constant 1 : index
    %c3_65 = arith.constant 3 : index
    %c0_66 = arith.constant 0 : index
    %c0_67 = arith.constant 0 : index
    %54 = vector.load %arg2[%c1_64, %c3_65, %c0_66, %c0_67] : memref<4x4x64x32xbf16, #tpu.memory_space<vmem>>, vector<1x1x64x32xbf16>
    %55 = vector.shape_cast %54 : vector<1x1x64x32xbf16> to vector<64x32xbf16>
    %cst_68 = arith.constant dense<0.000000e+00> : vector<256x32xf32>
    %56 = tpu.matmul %53, %55, %cst_68 {dimension_numbers = #tpu.dot_dimension_numbers<[1], [0], [0], [1], [0, 0, 1, 1], [], []>} : vector<256x64xbf16>, vector<64x32xbf16>, vector<256x32xf32> -> vector<256x32xf32>
    %57 = arith.addf %50, %56 : vector<256x32xf32>
    %cst_69 = arith.constant 0.000000e+00 : f32
    %58 = vector.broadcast %cst_69 : f32 to vector<256x32xf32>
    %c0_70 = arith.constant 0 : index
    %c1_71 = arith.constant 1 : index
    %c1_72 = arith.constant 1 : index
    %c0_73 = arith.constant 0 : index
    %59 = vector.load %arg1[%c0_70, %c1_71, %c1_72, %c0_73] : memref<1x18x18x64xbf16, #tpu.memory_space<vmem>>, vector<1x16x16x64xbf16>
    %60 = vector.shape_cast %59 : vector<1x16x16x64xbf16> to vector<16x16x64xbf16>
    %61 = vector.shape_cast %60 : vector<16x16x64xbf16> to vector<256x64xbf16>
    %c2_74 = arith.constant 2 : index
    %c0_75 = arith.constant 0 : index
    %c0_76 = arith.constant 0 : index
    %c0_77 = arith.constant 0 : index
    %62 = vector.load %arg2[%c2_74, %c0_75, %c0_76, %c0_77] : memref<4x4x64x32xbf16, #tpu.memory_space<vmem>>, vector<1x1x64x32xbf16>
    %63 = vector.shape_cast %62 : vector<1x1x64x32xbf16> to vector<64x32xbf16>
    %cst_78 = arith.constant dense<0.000000e+00> : vector<256x32xf32>
    %64 = tpu.matmul %61, %63, %cst_78 {dimension_numbers = #tpu.dot_dimension_numbers<[1], [0], [0], [1], [0, 0, 1, 1], [], []>} : vector<256x64xbf16>, vector<64x32xbf16>, vector<256x32xf32> -> vector<256x32xf32>
    %65 = arith.addf %58, %64 : vector<256x32xf32>
    %c0_79 = arith.constant 0 : index
    %c1_80 = arith.constant 1 : index
    %c0_81 = arith.constant 0 : index
    %c0_82 = arith.constant 0 : index
    %66 = vector.load %arg1[%c0_79, %c1_80, %c0_81, %c0_82] : memref<1x18x18x64xbf16, #tpu.memory_space<vmem>>, vector<1x16x16x64xbf16>
    %67 = vector.shape_cast %66 : vector<1x16x16x64xbf16> to vector<16x16x64xbf16>
    %68 = vector.shape_cast %67 : vector<16x16x64xbf16> to vector<256x64xbf16>
    %c2_83 = arith.constant 2 : index
    %c1_84 = arith.constant 1 : index
    %c0_85 = arith.constant 0 : index
    %c0_86 = arith.constant 0 : index
    %69 = vector.load %arg2[%c2_83, %c1_84, %c0_85, %c0_86] : memref<4x4x64x32xbf16, #tpu.memory_space<vmem>>, vector<1x1x64x32xbf16>
    %70 = vector.shape_cast %69 : vector<1x1x64x32xbf16> to vector<64x32xbf16>
    %cst_87 = arith.constant dense<0.000000e+00> : vector<256x32xf32>
    %71 = tpu.matmul %68, %70, %cst_87 {dimension_numbers = #tpu.dot_dimension_numbers<[1], [0], [0], [1], [0, 0, 1, 1], [], []>} : vector<256x64xbf16>, vector<64x32xbf16>, vector<256x32xf32> -> vector<256x32xf32>
    %72 = arith.addf %65, %71 : vector<256x32xf32>
    %c0_88 = arith.constant 0 : index
    %c2_89 = arith.constant 2 : index
    %c1_90 = arith.constant 1 : index
    %c0_91 = arith.constant 0 : index
    %73 = vector.load %arg1[%c0_88, %c2_89, %c1_90, %c0_91] : memref<1x18x18x64xbf16, #tpu.memory_space<vmem>>, vector<1x16x16x64xbf16>
    %74 = vector.shape_cast %73 : vector<1x16x16x64xbf16> to vector<16x16x64xbf16>
    %75 = vector.shape_cast %74 : vector<16x16x64xbf16> to vector<256x64xbf16>
    %c2_92 = arith.constant 2 : index
    %c2_93 = arith.constant 2 : index
    %c0_94 = arith.constant 0 : index
    %c0_95 = arith.constant 0 : index
    %76 = vector.load %arg2[%c2_92, %c2_93, %c0_94, %c0_95] : memref<4x4x64x32xbf16, #tpu.memory_space<vmem>>, vector<1x1x64x32xbf16>
    %77 = vector.shape_cast %76 : vector<1x1x64x32xbf16> to vector<64x32xbf16>
    %cst_96 = arith.constant dense<0.000000e+00> : vector<256x32xf32>
    %78 = tpu.matmul %75, %77, %cst_96 {dimension_numbers = #tpu.dot_dimension_numbers<[1], [0], [0], [1], [0, 0, 1, 1], [], []>} : vector<256x64xbf16>, vector<64x32xbf16>, vector<256x32xf32> -> vector<256x32xf32>
    %79 = arith.addf %72, %78 : vector<256x32xf32>
    %c0_97 = arith.constant 0 : index
    %c2_98 = arith.constant 2 : index
    %c0_99 = arith.constant 0 : index
    %c0_100 = arith.constant 0 : index
    %80 = vector.load %arg1[%c0_97, %c2_98, %c0_99, %c0_100] : memref<1x18x18x64xbf16, #tpu.memory_space<vmem>>, vector<1x16x16x64xbf16>
    %81 = vector.shape_cast %80 : vector<1x16x16x64xbf16> to vector<16x16x64xbf16>
    %82 = vector.shape_cast %81 : vector<16x16x64xbf16> to vector<256x64xbf16>
    %c2_101 = arith.constant 2 : index
    %c3_102 = arith.constant 3 : index
    %c0_103 = arith.constant 0 : index
    %c0_104 = arith.constant 0 : index
    %83 = vector.load %arg2[%c2_101, %c3_102, %c0_103, %c0_104] : memref<4x4x64x32xbf16, #tpu.memory_space<vmem>>, vector<1x1x64x32xbf16>
    %84 = vector.shape_cast %83 : vector<1x1x64x32xbf16> to vector<64x32xbf16>
    %cst_105 = arith.constant dense<0.000000e+00> : vector<256x32xf32>
    %85 = tpu.matmul %82, %84, %cst_105 {dimension_numbers = #tpu.dot_dimension_numbers<[1], [0], [0], [1], [0, 0, 1, 1], [], []>} : vector<256x64xbf16>, vector<64x32xbf16>, vector<256x32xf32> -> vector<256x32xf32>
    %86 = arith.addf %79, %85 : vector<256x32xf32>
    %cst_106 = arith.constant 0.000000e+00 : f32
    %87 = vector.broadcast %cst_106 : f32 to vector<256x32xf32>
    %c0_107 = arith.constant 0 : index
    %c1_108 = arith.constant 1 : index
    %c1_109 = arith.constant 1 : index
    %c0_110 = arith.constant 0 : index
    %88 = vector.load %arg1[%c0_107, %c1_108, %c1_109, %c0_110] : memref<1x18x18x64xbf16, #tpu.memory_space<vmem>>, vector<1x16x16x64xbf16>
    %89 = vector.shape_cast %88 : vector<1x16x16x64xbf16> to vector<16x16x64xbf16>
    %90 = vector.shape_cast %89 : vector<16x16x64xbf16> to vector<256x64xbf16>
    %c3_111 = arith.constant 3 : index
    %c0_112 = arith.constant 0 : index
    %c0_113 = arith.constant 0 : index
    %c0_114 = arith.constant 0 : index
    %91 = vector.load %arg2[%c3_111, %c0_112, %c0_113, %c0_114] : memref<4x4x64x32xbf16, #tpu.memory_space<vmem>>, vector<1x1x64x32xbf16>
    %92 = vector.shape_cast %91 : vector<1x1x64x32xbf16> to vector<64x32xbf16>
    %cst_115 = arith.constant dense<0.000000e+00> : vector<256x32xf32>
    %93 = tpu.matmul %90, %92, %cst_115 {dimension_numbers = #tpu.dot_dimension_numbers<[1], [0], [0], [1], [0, 0, 1, 1], [], []>} : vector<256x64xbf16>, vector<64x32xbf16>, vector<256x32xf32> -> vector<256x32xf32>
    %94 = arith.addf %87, %93 : vector<256x32xf32>
    %c0_116 = arith.constant 0 : index
    %c1_117 = arith.constant 1 : index
    %c2_118 = arith.constant 2 : index
    %c0_119 = arith.constant 0 : index
    %95 = vector.load %arg1[%c0_116, %c1_117, %c2_118, %c0_119] : memref<1x18x18x64xbf16, #tpu.memory_space<vmem>>, vector<1x16x16x64xbf16>
    %96 = vector.shape_cast %95 : vector<1x16x16x64xbf16> to vector<16x16x64xbf16>
    %97 = vector.shape_cast %96 : vector<16x16x64xbf16> to vector<256x64xbf16>
    %c3_120 = arith.constant 3 : index
    %c1_121 = arith.constant 1 : index
    %c0_122 = arith.constant 0 : index
    %c0_123 = arith.constant 0 : index
    %98 = vector.load %arg2[%c3_120, %c1_121, %c0_122, %c0_123] : memref<4x4x64x32xbf16, #tpu.memory_space<vmem>>, vector<1x1x64x32xbf16>
    %99 = vector.shape_cast %98 : vector<1x1x64x32xbf16> to vector<64x32xbf16>
    %cst_124 = arith.constant dense<0.000000e+00> : vector<256x32xf32>
    %100 = tpu.matmul %97, %99, %cst_124 {dimension_numbers = #tpu.dot_dimension_numbers<[1], [0], [0], [1], [0, 0, 1, 1], [], []>} : vector<256x64xbf16>, vector<64x32xbf16>, vector<256x32xf32> -> vector<256x32xf32>
    %101 = arith.addf %94, %100 : vector<256x32xf32>
    %c0_125 = arith.constant 0 : index
    %c2_126 = arith.constant 2 : index
    %c1_127 = arith.constant 1 : index
    %c0_128 = arith.constant 0 : index
    %102 = vector.load %arg1[%c0_125, %c2_126, %c1_127, %c0_128] : memref<1x18x18x64xbf16, #tpu.memory_space<vmem>>, vector<1x16x16x64xbf16>
    %103 = vector.shape_cast %102 : vector<1x16x16x64xbf16> to vector<16x16x64xbf16>
    %104 = vector.shape_cast %103 : vector<16x16x64xbf16> to vector<256x64xbf16>
    %c3_129 = arith.constant 3 : index
    %c2_130 = arith.constant 2 : index
    %c0_131 = arith.constant 0 : index
    %c0_132 = arith.constant 0 : index
    %105 = vector.load %arg2[%c3_129, %c2_130, %c0_131, %c0_132] : memref<4x4x64x32xbf16, #tpu.memory_space<vmem>>, vector<1x1x64x32xbf16>
    %106 = vector.shape_cast %105 : vector<1x1x64x32xbf16> to vector<64x32xbf16>
    %cst_133 = arith.constant dense<0.000000e+00> : vector<256x32xf32>
    %107 = tpu.matmul %104, %106, %cst_133 {dimension_numbers = #tpu.dot_dimension_numbers<[1], [0], [0], [1], [0, 0, 1, 1], [], []>} : vector<256x64xbf16>, vector<64x32xbf16>, vector<256x32xf32> -> vector<256x32xf32>
    %108 = arith.addf %101, %107 : vector<256x32xf32>
    %c0_134 = arith.constant 0 : index
    %c2_135 = arith.constant 2 : index
    %c2_136 = arith.constant 2 : index
    %c0_137 = arith.constant 0 : index
    %109 = vector.load %arg1[%c0_134, %c2_135, %c2_136, %c0_137] : memref<1x18x18x64xbf16, #tpu.memory_space<vmem>>, vector<1x16x16x64xbf16>
    %110 = vector.shape_cast %109 : vector<1x16x16x64xbf16> to vector<16x16x64xbf16>
    %111 = vector.shape_cast %110 : vector<16x16x64xbf16> to vector<256x64xbf16>
    %c3_138 = arith.constant 3 : index
    %c3_139 = arith.constant 3 : index
    %c0_140 = arith.constant 0 : index
    %c0_141 = arith.constant 0 : index
    %112 = vector.load %arg2[%c3_138, %c3_139, %c0_140, %c0_141] : memref<4x4x64x32xbf16, #tpu.memory_space<vmem>>, vector<1x1x64x32xbf16>
    %113 = vector.shape_cast %112 : vector<1x1x64x32xbf16> to vector<64x32xbf16>
    %cst_142 = arith.constant dense<0.000000e+00> : vector<256x32xf32>
    %114 = tpu.matmul %111, %113, %cst_142 {dimension_numbers = #tpu.dot_dimension_numbers<[1], [0], [0], [1], [0, 0, 1, 1], [], []>} : vector<256x64xbf16>, vector<64x32xbf16>, vector<256x32xf32> -> vector<256x32xf32>
    %115 = arith.addf %108, %114 : vector<256x32xf32>
    %116 = tpu.concatenate %28, %57, %86, %115 in 1 : vector<256x32xf32>, vector<256x32xf32>, vector<256x32xf32>, vector<256x32xf32> -> vector<256x128xf32>
    %c0_143 = arith.constant 0 : index
    %c0_144 = arith.constant 0 : index
    %117 = vector.load %arg3[%c0_143, %c0_144] : memref<1x128xf32, #tpu.memory_space<vmem>>, vector<1x128xf32>
    %118 = vector.broadcast %117 : vector<1x128xf32> to vector<256x128xf32>
    %119 = arith.addf %116, %118 : vector<256x128xf32>
    %120 = math.tanh %119 : vector<256x128xf32>
    %121 = arith.truncf %120 : vector<256x128xf32> to vector<256x128xbf16>
    %c0_145 = arith.constant 0 : index
    %c0_146 = arith.constant 0 : index
    %c0_147 = arith.constant 0 : index
    %122 = vector.load %arg4[%c0_145, %c0_146, %c0_147] : memref<1x256x128xbf16, #tpu.memory_space<vmem>>, vector<1x256x128xbf16>
    %123 = vector.shape_cast %122 : vector<1x256x128xbf16> to vector<256x128xbf16>
    %124 = vector.shape_cast %121 : vector<256x128xbf16> to vector<1x256x128xbf16>
    tpu.vector_store %arg4[%c0_145, %c0_146, %c0_147], %124 {strides = array<i32>} : memref<1x256x128xbf16, #tpu.memory_space<vmem>>, vector<1x256x128xbf16>,
    return
  }
  func.func @transform_0(%arg0: i32) -> (i32, i32, i32, i32) {
    %c0_i32 = arith.constant 0 : i32
    %c0_i32_0 = arith.constant 0 : i32
    %c0_i32_1 = arith.constant 0 : i32
    %c0_i32_2 = arith.constant 0 : i32
    return %arg0, %c0_i32, %c0_i32_0, %c0_i32_1 : i32, i32, i32, i32
  }
  func.func @transform_1(%arg0: i32) -> (i32, i32, i32, i32) {
    %c0_i32 = arith.constant 0 : i32
    %c0_i32_0 = arith.constant 0 : i32
    %c0_i32_1 = arith.constant 0 : i32
    %c0_i32_2 = arith.constant 0 : i32
    %c0_i32_3 = arith.constant 0 : i32
    return %c0_i32, %c0_i32_0, %c0_i32_1, %c0_i32_2 : i32, i32, i32, i32
  }
  func.func @transform_2(%arg0: i32) -> (i32, i32) {
    %c0_i32 = arith.constant 0 : i32
    %c0_i32_0 = arith.constant 0 : i32
    %c0_i32_1 = arith.constant 0 : i32
    return %c0_i32, %c0_i32_0 : i32, i32
  }
  func.func @transform_3(%arg0: i32) -> (i32, i32, i32) {
    %c0_i32 = arith.constant 0 : i32
    %c0_i32_0 = arith.constant 0 : i32
    %c0_i32_1 = arith.constant 0 : i32
    return %arg0, %c0_i32, %c0_i32_0 : i32, i32, i32
  }
}

</mosaic_0001>

<llo_original>
// kernel: tpu_custom_call.1
$region0: #{tpu_custom_call.1}
  #allocation0 [shape = 'u32[]', space=smem, size = 0x4, offset = 0x4, fixed_abs, tag = 'smem constant byte address 0x4 - core index']
  #allocation1 [shape = 'u32[144,128]{1,0:T(1,128)}', space=vmem, size = 0x12000, scoped, tag = 'internal scratch']
  %s0 = inlined_call_operand.vmem [shape: bf16[2,18,18,64], index: 0, kind: input, shape index: {}]
  %s1 = inlined_call_operand.vmem [shape: bf16[4,4,64,32], index: 1, kind: input, shape index: {}]
  %s2 = inlined_call_operand.vmem [shape: f32[1,128], index: 2, kind: input, shape index: {}]
  %s3 = inlined_call_operand.hbm [shape: bf16[2,256,128], index: 3, kind: output, shape index: {}]
  %s4 = sld [smem:[#allocation0]]
  $region45: #{tpu_custom_call.1} parent=0
    _
  %s6 = ssub.s32 1, %s4
  %s7 = scalar_select 0, %s6, %s4
  $region1: #{tpu_custom_call.1} parent=0
    #allocation2 [shape = 'u8[131072]{0}', space=vmem, size = 0x20000, scoped, tag = 'output window, operand 0']
    #allocation3 [shape = 's32[2]{0}', space=sflag, size = 0x8, scoped, tag = 'scoped memory for tpu_custom_call.1']
    %8 = vsyncpa [#allocation3], 0
    %s9 = scalar_lea.sflag [#allocation3], 1
    %10 = vsyncpa %s9, 0
    loop: start=0, step=1, limit=4
    $region2: #{tpu_custom_call.1} parent=1 // loop_pre_header
      _
    $region3: #{tpu_custom_call.1} parent=1 // loop_header
      %s12 = sphi 0, %s16
      %p13 = scmp.ge.s32.totalorder %s12, 4
      %s22 = sphi 0, %s24
      %s25 = sphi 0, %s22
      %s26 = sphi 0, %s25
      %s42 = sphi 0, %s26
      %s46 = sphi 0, %s46
      %s48 = sphi 0, %s46
      %s49 = sphi 0, %s48
      %s63 = sphi 0, %s49
      %s67 = sphi 0, %s67
      %s69 = sphi 0, %s67
      %s70 = sphi 0, %s69
      %s84 = sphi 0, %s70
      %s90 = sphi 0, %s92
      %s93 = sphi 0, %s90
      %s94 = sphi 0, %s93
      %s110 = sphi 0, %s94
    $region4: #{tpu_custom_call.1} parent=1 // loop_header_branch
      %15 = sbr.rel (%p13) target = $region8
    $region5: #{tpu_custom_call.1} parent=1 // loop_body
      %s17 = ssub.s32 %s12, 1
      %s18 = ssub.s32 %s12, 2
      %s19 = sadd.s32 %s12, 1
      %s20 = ssub.s32 %s12, %s19
      %p21 = scmp.eq.s32.totalorder %s20, 0
      %s23 = sadd.s32 %s22, 1
      %s24 = scalar_select %p21, %s22, %s23
      %p27 = pneg %p21
      %p28 = scmp.eq.s32.totalorder %s12, 1
      %p29 = por %p27, %p28
      %p30 = scmp.ne.s32.totalorder %s22, %s25
      %p31 = scmp.eq.s32.totalorder %s12, 0
      %p32 = por %p30, %p31
      %p33 = scmp.ne.s32.totalorder %s22, %s25
      %p34 = scmp.eq.s32.totalorder %s17, 1
      %p35 = por %p33, %p34
      %p36 = scmp.ne.s32.totalorder %s25, %s26
      %p37 = scmp.eq.s32.totalorder %s17, 0
      %p38 = por %p36, %p37
      %p39 = scmp.ne.s32.totalorder %s25, %s26
      %p40 = scmp.eq.s32.totalorder %s18, 1
      %p41 = por %p39, %p40
      %p43 = scmp.ne.s32.totalorder %s26, %s42
      %p44 = scmp.eq.s32.totalorder %s18, 0
      %p45 = por %p43, %p44
      %s47 = sadd.s32 %s46, 1
      %p50 = scmp.eq.s32.totalorder %s12, 1
      %p51 = scmp.ne.s32.totalorder %s46, %s48
      %p52 = scmp.eq.s32.totalorder %s12, 0
      %p53 = por %p51, %p52
      %p54 = scmp.ne.s32.totalorder %s46, %s48
      %p55 = scmp.eq.s32.totalorder %s17, 1
      %p56 = por %p54, %p55
      %p57 = scmp.ne.s32.totalorder %s48, %s49
      %p58 = scmp.eq.s32.totalorder %s17, 0
      %p59 = por %p57, %p58
      %p60 = scmp.ne.s32.totalorder %s48, %s49
      %p61 = scmp.eq.s32.totalorder %s18, 1
      %p62 = por %p60, %p61
      %p64 = scmp.ne.s32.totalorder %s49, %s63
      %p65 = scmp.eq.s32.totalorder %s18, 0
      %p66 = por %p64, %p65
      %s68 = sadd.s32 %s67, 1
      %p71 = scmp.eq.s32.totalorder %s12, 1
      %p72 = scmp.ne.s32.totalorder %s67, %s69
      %p73 = scmp.eq.s32.totalorder %s12, 0
      %p74 = por %p72, %p73
      %p75 = scmp.ne.s32.totalorder %s67, %s69
      %p76 = scmp.eq.s32.totalorder %s17, 1
      %p77 = por %p75, %p76
      %p78 = scmp.ne.s32.totalorder %s69, %s70
      %p79 = scmp.eq.s32.totalorder %s17, 0
      %p80 = por %p78, %p79
      %p81 = scmp.ne.s32.totalorder %s69, %s70
      %p82 = scmp.eq.s32.totalorder %s18, 1
      %p83 = por %p81, %p82
      %p85 = scmp.ne.s32.totalorder %s70, %s84
      %p86 = scmp.eq.s32.totalorder %s18, 0
      %p87 = por %p85, %p86
      %s88 = ssub.s32 %s12, %s19
      %p89 = scmp.eq.s32.totalorder %s88, 0
      %s91 = sadd.s32 %s90, 1
      %s92 = scalar_select %p89, %s90, %s91
      %p95 = pneg %p89
      %p96 = scmp.eq.s32.totalorder %s12, 1
      %p97 = por %p95, %p96
      %p98 = scmp.ne.s32.totalorder %s90, %s93
      %p99 = scmp.eq.s32.totalorder %s12, 0
      %p100 = por %p98, %p99
      %p101 = scmp.ne.s32.totalorder %s90, %s93
      %p102 = scmp.eq.s32.totalorder %s17, 1
      %p103 = por %p101, %p102
      %p104 = scmp.ne.s32.totalorder %s93, %s94
      %p105 = scmp.eq.s32.totalorder %s17, 0
      %p106 = por %p104, %p105
      %p107 = scmp.ne.s32.totalorder %s93, %s94
      %p108 = scmp.eq.s32.totalorder %s18, 1
      %p109 = por %p107, %p108
      %p111 = scmp.ne.s32.totalorder %s94, %s110
      %p112 = scmp.eq.s32.totalorder %s18, 0
      %p113 = por %p111, %p112
      %p114 = scmp.le.s32.totalorder 1, %s12
      %p115 = scmp.lt.s32.totalorder %s12, 3
      %p116 = pnand %p114, %p115
      %p117 = pneg %p116
      // Predicated region
      $region9: #{tpu_custom_call.1} parent=5 // pred_check
        _
      $region10: #{tpu_custom_call.1} parent=5 // pred_check_branch
        %119 = sbr.rel (%p116) target = $region12
      $region11: #{tpu_custom_call.1} parent=5 // pred_region
        %s120 = ssub.s32 %s12, 1
        // Predicated region
        $region13: #{tpu_custom_call.1} parent=11 // pred_check
          %p121 = pneg %p59
        $region14: #{tpu_custom_call.1} parent=11 // pred_check_branch
          %123 = sbr.rel (%p121) target = $region16
        $region15: #{tpu_custom_call.1} parent=11 // pred_region
          _
        $region16: #{tpu_custom_call.1} parent=11 // pred_fallthru
          _
        // Predicated region
        $region17: #{tpu_custom_call.1} parent=11 // pred_check
          %p124 = pneg %p80
        $region18: #{tpu_custom_call.1} parent=11 // pred_check_branch
          %126 = sbr.rel (%p124) target = $region20
        $region19: #{tpu_custom_call.1} parent=11 // pred_region
          _
        $region20: #{tpu_custom_call.1} parent=11 // pred_fallthru
          _
      $region12: #{tpu_custom_call.1} parent=5 // pred_fallthru
        _
      %p127 = scmp.lt.s32.totalorder %s12, 2
      // Predicated region
      $region21: #{tpu_custom_call.1} parent=5 // pred_check
        %p128 = pneg %p127
      $region22: #{tpu_custom_call.1} parent=5 // pred_check_branch
        %130 = sbr.rel (%p128) target = $region24
      $region23: #{tpu_custom_call.1} parent=5 // pred_region
        // Predicated region
        $region25: #{tpu_custom_call.1} parent=23 // pred_check
          %p131 = pneg %p32
        $region26: #{tpu_custom_call.1} parent=23 // pred_check_branch
          %133 = sbr.rel (%p131) target = $region28
        $region27: #{tpu_custom_call.1} parent=23 // pred_region
          %p134 = scmp.lt.s32.totalorder %s12, 1
          %s135 = scalar_select %p134, %s12, 1
          %s136 = smul.addr %s135, 54
          %s137 = smul.addr %s136, 4
          %s138 = scalar_lea.vmem %s0, %s137
        $region28: #{tpu_custom_call.1} parent=23 // pred_fallthru
          _
      $region24: #{tpu_custom_call.1} parent=5 // pred_fallthru
        _
      %p139 = scmp.le.s32.totalorder 1, %s12
      %p140 = scmp.lt.s32.totalorder %s12, 3
      %p141 = pnand %p139, %p140
      %p142 = pneg %p141
      // Predicated region
      $region29: #{tpu_custom_call.1} parent=5 // pred_check
        _
      $region30: #{tpu_custom_call.1} parent=5 // pred_check_branch
        %144 = sbr.rel (%p141) target = $region32
      $region31: #{tpu_custom_call.1} parent=5 // pred_region
        %s145 = ssub.s32 %s12, 1
        %p146 = scmp.lt.s32.totalorder %s17, 1
        %s147 = scalar_select %p146, %s17, 1
        %s148 = smul.addr %s147, 54
        %s149 = smul.addr %s148, 4
        %s150 = scalar_lea.vmem %s0, %s149
        %p151 = pneg %p38
        %p152 = pneg %p35
        %p153 = pneg %p59
        %p154 = pneg %p56
        %p155 = pneg %p80
        %p156 = pneg %p77
        %p157 = pneg %p106
        %p158 = pneg %p103
        %s159 = sand.u32 %s93, 1
        %s160 = scalar_lea.sflag [#allocation3], %s159
        %s161 = sand.u32 %s93, 1
        %s162 = smul.addr %s161, 128
        %s163 = scalar_lea.vmem [#allocation2], %s162
        %p164 = scmp.lt.s32.totalorder %s17, 1
        %s165 = scalar_select %p164, %s17, 1
        %s166 = smul.addr %s165, 54
        %s167 = smul.addr %s166, 4
        %s168 = scalar_lea.vmem %s0, %s167
        %s170 = scalar_lea.vmem %s168, 12
        %v171 = vld [vmem:[%s170] sm:$0xf]
        %v172 = vld [vmem:[%s170 + $0x4] sm:$0xf]
        %v173 = vld [vmem:[%s170 + $0x8] sm:$0x1]
        %v174 = vld [vmem:[%s170 + $0xc] sm:$0xf]
        %v175 = vld [vmem:[%s170 + $0x10] sm:$0xf]
        %v176 = vld [vmem:[%s170 + $0x14] sm:$0x1]
        %v177 = vld [vmem:[%s170 + $0x18] sm:$0xf]
        %v178 = vld [vmem:[%s170 + $0x1c] sm:$0xf]
        %v179 = vld [vmem:[%s170 + $0x20] sm:$0x1]
        %v180 = vld [vmem:[%s170 + $0x24] sm:$0xf]
        %v181 = vld [vmem:[%s170 + $0x28] sm:$0xf]
        %v182 = vld [vmem:[%s170 + $0x2c] sm:$0x1]
        %v183 = vld [vmem:[%s170 + $0x30] sm:$0xf]
        %v184 = vld [vmem:[%s170 + $0x34] sm:$0xf]
        %v185 = vld [vmem:[%s170 + $0x38] sm:$0x1]
        %v186 = vld [vmem:[%s170 + $0x3c] sm:$0xf]
        %v187 = vld [vmem:[%s170 + $0x40] sm:$0xf]
        %v188 = vld [vmem:[%s170 + $0x44] sm:$0x1]
        %v189 = vld [vmem:[%s170 + $0x48] sm:$0xf]
        %v190 = vld [vmem:[%s170 + $0x4c] sm:$0xf]
        %v191 = vld [vmem:[%s170 + $0x50] sm:$0x1]
        %v192 = vld [vmem:[%s170 + $0x54] sm:$0xf]
        %v193 = vld [vmem:[%s170 + $0x58] sm:$0xf]
        %v194 = vld [vmem:[%s170 + $0x5c] sm:$0x1]
        %v195 = vld [vmem:[%s170 + $0x60] sm:$0xf]
        %v196 = vld [vmem:[%s170 + $0x64] sm:$0xf]
        %v197 = vld [vmem:[%s170 + $0x68] sm:$0x1]
        %v198 = vld [vmem:[%s170 + $0x6c] sm:$0xf]
        %v199 = vld [vmem:[%s170 + $0x70] sm:$0xf]
        %v200 = vld [vmem:[%s170 + $0x74] sm:$0x1]
        %v201 = vld [vmem:[%s170 + $0x78] sm:$0xf]
        %v202 = vld [vmem:[%s170 + $0x7c] sm:$0xf]
        %v203 = vld [vmem:[%s170 + $0x80] sm:$0x1]
        %v204 = vld [vmem:[%s170 + $0x84] sm:$0xf]
        %v205 = vld [vmem:[%s170 + $0x88] sm:$0xf]
        %v206 = vld [vmem:[%s170 + $0x8c] sm:$0x1]
        %v207 = vld [vmem:[%s170 + $0x90] sm:$0xf]
        %v208 = vld [vmem:[%s170 + $0x94] sm:$0xf]
        %v209 = vld [vmem:[%s170 + $0x98] sm:$0x1]
        %v210 = vld [vmem:[%s170 + $0x9c] sm:$0xf]
        %v211 = vld [vmem:[%s170 + $0xa0] sm:$0xf]
        %v212 = vld [vmem:[%s170 + $0xa4] sm:$0x1]
        %v213 = vld [vmem:[%s170 + $0xa8] sm:$0xf]
        %v214 = vld [vmem:[%s170 + $0xac] sm:$0xf]
        %v215 = vld [vmem:[%s170 + $0xb0] sm:$0x1]
        %v216 = vld [vmem:[%s170 + $0xb4] sm:$0xf]
        %v217 = vld [vmem:[%s170 + $0xb8] sm:$0xf]
        %v218 = vld [vmem:[%s170 + $0xbc] sm:$0x1]
        %vm219 = vsmask.f32 3328
        %vm220 = vsmask.f32 7440
        %vm221 = vmor %vm219, %vm220
        %v223 = vshrl.u32 %v171, 16
        %v225 = vrot.slane %v223, 4
        %v226 = vshll.u32 %v171, 16
        %v228 = vrot.slane %v226, 5
        %v229 = vor.u32 %v225, %v228
        %v230 = vrot.slane %v229, 4
        %v232 = vshll.u32 %v172, 16
        %v234 = vrot.slane %v232, 5
        %v235 = vsel %vm221, %v230, %v234
        %v236 = vshrl.u32 %v172, 16
        %v238 = vrot.slane %v236, 4
        %v239 = vor.u32 %v238, %v234
        %v240 = vrot.slane %v239, 4
        %v242 = vshll.u32 %v173, 16
        %v244 = vrot.slane %v242, 5
        %v245 = vsel %vm221, %v240, %v244
        %v247 = vshrl.u32 %v174, 16
        %v249 = vrot.slane %v247, 4
        %v250 = vshll.u32 %v174, 16
        %v252 = vrot.slane %v250, 5
        %v253 = vor.u32 %v249, %v252
        %v254 = vrot.slane %v253, 4
        %v256 = vshll.u32 %v175, 16
        %v258 = vrot.slane %v256, 5
        %v259 = vsel %vm221, %v254, %v258
        %v260 = vshrl.u32 %v175, 16
        %v262 = vrot.slane %v260, 4
        %v263 = vor.u32 %v262, %v258
        %v264 = vrot.slane %v263, 4
        %v266 = vshll.u32 %v176, 16
        %v268 = vrot.slane %v266, 5
        %v269 = vsel %vm221, %v264, %v268
        %v271 = vshrl.u32 %v177, 16
        %v273 = vrot.slane %v271, 4
        %v274 = vshll.u32 %v177, 16
        %v276 = vrot.slane %v274, 5
        %v277 = vor.u32 %v273, %v276
        %v278 = vrot.slane %v277, 4
        %v280 = vshll.u32 %v178, 16
        %v282 = vrot.slane %v280, 5
        %v283 = vsel %vm221, %v278, %v282
        %v284 = vshrl.u32 %v178, 16
        %v286 = vrot.slane %v284, 4
        %v287 = vor.u32 %v286, %v282
        %v288 = vrot.slane %v287, 4
        %v290 = vshll.u32 %v179, 16
        %v292 = vrot.slane %v290, 5
        %v293 = vsel %vm221, %v288, %v292
        %v295 = vshrl.u32 %v180, 16
        %v297 = vrot.slane %v295, 4
        %v298 = vshll.u32 %v180, 16
        %v300 = vrot.slane %v298, 5
        %v301 = vor.u32 %v297, %v300
        %v302 = vrot.slane %v301, 4
        %v304 = vshll.u32 %v181, 16
        %v306 = vrot.slane %v304, 5
        %v307 = vsel %vm221, %v302, %v306
        %v308 = vshrl.u32 %v181, 16
        %v310 = vrot.slane %v308, 4
        %v311 = vor.u32 %v310, %v306
        %v312 = vrot.slane %v311, 4
        %v314 = vshll.u32 %v182, 16
        %v316 = vrot.slane %v314, 5
        %v317 = vsel %vm221, %v312, %v316
        %v319 = vshrl.u32 %v183, 16
        %v321 = vrot.slane %v319, 4
        %v322 = vshll.u32 %v183, 16
        %v324 = vrot.slane %v322, 5
        %v325 = vor.u32 %v321, %v324
        %v326 = vrot.slane %v325, 4
        %v328 = vshll.u32 %v184, 16
        %v330 = vrot.slane %v328, 5
        %v331 = vsel %vm221, %v326, %v330
        %v332 = vshrl.u32 %v184, 16
        %v334 = vrot.slane %v332, 4
        %v335 = vor.u32 %v334, %v330
        %v336 = vrot.slane %v335, 4
        %v338 = vshll.u32 %v185, 16
        %v340 = vrot.slane %v338, 5
        %v341 = vsel %vm221, %v336, %v340
        %v343 = vshrl.u32 %v186, 16
        %v345 = vrot.slane %v343, 4
        %v346 = vshll.u32 %v186, 16
        %v348 = vrot.slane %v346, 5
        %v349 = vor.u32 %v345, %v348
        %v350 = vrot.slane %v349, 4
        %v352 = vshll.u32 %v187, 16
        %v354 = vrot.slane %v352, 5
        %v355 = vsel %vm221, %v350, %v354
        %v356 = vshrl.u32 %v187, 16
        %v358 = vrot.slane %v356, 4
        %v359 = vor.u32 %v358, %v354
        %v360 = vrot.slane %v359, 4
        %v362 = vshll.u32 %v188, 16
        %v364 = vrot.slane %v362, 5
        %v365 = vsel %vm221, %v360, %v364
        %v367 = vshrl.u32 %v189, 16
        %v369 = vrot.slane %v367, 4
        %v370 = vshll.u32 %v189, 16
        %v372 = vrot.slane %v370, 5
        %v373 = vor.u32 %v369, %v372
        %v374 = vrot.slane %v373, 4
        %v376 = vshll.u32 %v190, 16
        %v378 = vrot.slane %v376, 5
        %v379 = vsel %vm221, %v374, %v378
        %v380 = vshrl.u32 %v190, 16
        %v382 = vrot.slane %v380, 4
        %v383 = vor.u32 %v382, %v378
        %v384 = vrot.slane %v383, 4
        %v386 = vshll.u32 %v191, 16
        %v388 = vrot.slane %v386, 5
        %v389 = vsel %vm221, %v384, %v388
        %v391 = vshrl.u32 %v192, 16
        %v393 = vrot.slane %v391, 4
        %v394 = vshll.u32 %v192, 16
        %v396 = vrot.slane %v394, 5
        %v397 = vor.u32 %v393, %v396
        %v398 = vrot.slane %v397, 4
        %v400 = vshll.u32 %v193, 16
        %v402 = vrot.slane %v400, 5
        %v403 = vsel %vm221, %v398, %v402
        %v404 = vshrl.u32 %v193, 16
        %v406 = vrot.slane %v404, 4
        %v407 = vor.u32 %v406, %v402
        %v408 = vrot.slane %v407, 4
        %v410 = vshll.u32 %v194, 16
        %v412 = vrot.slane %v410, 5
        %v413 = vsel %vm221, %v408, %v412
        %v415 = vshrl.u32 %v195, 16
        %v417 = vrot.slane %v415, 4
        %v418 = vshll.u32 %v195, 16
        %v420 = vrot.slane %v418, 5
        %v421 = vor.u32 %v417, %v420
        %v422 = vrot.slane %v421, 4
        %v424 = vshll.u32 %v196, 16
        %v426 = vrot.slane %v424, 5
        %v427 = vsel %vm221, %v422, %v426
        %v428 = vshrl.u32 %v196, 16
        %v430 = vrot.slane %v428, 4
        %v431 = vor.u32 %v430, %v426
        %v432 = vrot.slane %v431, 4
        %v434 = vshll.u32 %v197, 16
        %v436 = vrot.slane %v434, 5
        %v437 = vsel %vm221, %v432, %v436
        %v439 = vshrl.u32 %v198, 16
        %v441 = vrot.slane %v439, 4
        %v442 = vshll.u32 %v198, 16
        %v444 = vrot.slane %v442, 5
        %v445 = vor.u32 %v441, %v444
        %v446 = vrot.slane %v445, 4
        %v448 = vshll.u32 %v199, 16
        %v450 = vrot.slane %v448, 5
        %v451 = vsel %vm221, %v446, %v450
        %v452 = vshrl.u32 %v199, 16
        %v454 = vrot.slane %v452, 4
        %v455 = vor.u32 %v454, %v450
        %v456 = vrot.slane %v455, 4
        %v458 = vshll.u32 %v200, 16
        %v460 = vrot.slane %v458, 5
        %v461 = vsel %vm221, %v456, %v460
        %v463 = vshrl.u32 %v201, 16
        %v465 = vrot.slane %v463, 4
        %v466 = vshll.u32 %v201, 16
        %v468 = vrot.slane %v466, 5
        %v469 = vor.u32 %v465, %v468
        %v470 = vrot.slane %v469, 4
        %v472 = vshll.u32 %v202, 16
        %v474 = vrot.slane %v472, 5
        %v475 = vsel %vm221, %v470, %v474
        %v476 = vshrl.u32 %v202, 16
        %v478 = vrot.slane %v476, 4
        %v479 = vor.u32 %v478, %v474
        %v480 = vrot.slane %v479, 4
        %v482 = vshll.u32 %v203, 16
        %v484 = vrot.slane %v482, 5
        %v485 = vsel %vm221, %v480, %v484
        %v487 = vshrl.u32 %v204, 16
        %v489 = vrot.slane %v487, 4
        %v490 = vshll.u32 %v204, 16
        %v492 = vrot.slane %v490, 5
        %v493 = vor.u32 %v489, %v492
        %v494 = vrot.slane %v493, 4
        %v496 = vshll.u32 %v205, 16
        %v498 = vrot.slane %v496, 5
        %v499 = vsel %vm221, %v494, %v498
        %v500 = vshrl.u32 %v205, 16
        %v502 = vrot.slane %v500, 4
        %v503 = vor.u32 %v502, %v498
        %v504 = vrot.slane %v503, 4
        %v506 = vshll.u32 %v206, 16
        %v508 = vrot.slane %v506, 5
        %v509 = vsel %vm221, %v504, %v508
        %v511 = vshrl.u32 %v207, 16
        %v513 = vrot.slane %v511, 4
        %v514 = vshll.u32 %v207, 16
        %v516 = vrot.slane %v514, 5
        %v517 = vor.u32 %v513, %v516
        %v518 = vrot.slane %v517, 4
        %v520 = vshll.u32 %v208, 16
        %v522 = vrot.slane %v520, 5
        %v523 = vsel %vm221, %v518, %v522
        %v524 = vshrl.u32 %v208, 16
        %v526 = vrot.slane %v524, 4
        %v527 = vor.u32 %v526, %v522
        %v528 = vrot.slane %v527, 4
        %v530 = vshll.u32 %v209, 16
        %v532 = vrot.slane %v530, 5
        %v533 = vsel %vm221, %v528, %v532
        %v535 = vshrl.u32 %v210, 16
        %v537 = vrot.slane %v535, 4
        %v538 = vshll.u32 %v210, 16
        %v540 = vrot.slane %v538, 5
        %v541 = vor.u32 %v537, %v540
        %v542 = vrot.slane %v541, 4
        %v544 = vshll.u32 %v211, 16
        %v546 = vrot.slane %v544, 5
        %v547 = vsel %vm221, %v542, %v546
        %v548 = vshrl.u32 %v211, 16
        %v550 = vrot.slane %v548, 4
        %v551 = vor.u32 %v550, %v546
        %v552 = vrot.slane %v551, 4
        %v554 = vshll.u32 %v212, 16
        %v556 = vrot.slane %v554, 5
        %v557 = vsel %vm221, %v552, %v556
        %v559 = vshrl.u32 %v213, 16
        %v561 = vrot.slane %v559, 4
        %v562 = vshll.u32 %v213, 16
        %v564 = vrot.slane %v562, 5
        %v565 = vor.u32 %v561, %v564
        %v566 = vrot.slane %v565, 4
        %v568 = vshll.u32 %v214, 16
        %v570 = vrot.slane %v568, 5
        %v571 = vsel %vm221, %v566, %v570
        %v572 = vshrl.u32 %v214, 16
        %v574 = vrot.slane %v572, 4
        %v575 = vor.u32 %v574, %v570
        %v576 = vrot.slane %v575, 4
        %v578 = vshll.u32 %v215, 16
        %v580 = vrot.slane %v578, 5
        %v581 = vsel %vm221, %v576, %v580
        %v583 = vshrl.u32 %v216, 16
        %v585 = vrot.slane %v583, 4
        %v586 = vshll.u32 %v216, 16
        %v588 = vrot.slane %v586, 5
        %v589 = vor.u32 %v585, %v588
        %v590 = vrot.slane %v589, 4
        %v592 = vshll.u32 %v217, 16
        %v594 = vrot.slane %v592, 5
        %v595 = vsel %vm221, %v590, %v594
        %v596 = vshrl.u32 %v217, 16
        %v598 = vrot.slane %v596, 4
        %v599 = vor.u32 %v598, %v594
        %v600 = vrot.slane %v599, 4
        %v602 = vshll.u32 %v218, 16
        %v604 = vrot.slane %v602, 5
        %v605 = vsel %vm221, %v600, %v604
        %v606 = vld [vmem:[%s1] sm:$0xf]
        %v607 = vld [vmem:[%s1 + $0x4] sm:$0xf]
        %v608 = vld [vmem:[%s1 + $0x8] sm:$0xf]
        %v609 = vld [vmem:[%s1 + $0xc] sm:$0xf]
        %v610 = vld [vmem:[%s1 + $0x10] sm:$0xf]
        %v611 = vld [vmem:[%s1 + $0x14] sm:$0xf]
        %v612 = vld [vmem:[%s1 + $0x18] sm:$0xf]
        %v613 = vld [vmem:[%s1 + $0x1c] sm:$0xf]
        %s614 = scalar_lea.vmem %s1, 32
        %v615 = vld [vmem:[%s614] sm:$0xf]
        %v616 = vld [vmem:[%s614 + $0x4] sm:$0xf]
        %v617 = vld [vmem:[%s614 + $0x8] sm:$0xf]
        %v618 = vld [vmem:[%s614 + $0xc] sm:$0xf]
        %v619 = vld [vmem:[%s614 + $0x10] sm:$0xf]
        %v620 = vld [vmem:[%s614 + $0x14] sm:$0xf]
        %v621 = vld [vmem:[%s614 + $0x18] sm:$0xf]
        %v622 = vld [vmem:[%s614 + $0x1c] sm:$0xf]
        %v655 = vunpack.c.l.b16 %v171
        %v656 = vunpack.c.l.b16 %v172
        %v657 = vunpack.c.l.b16 %v174
        %v658 = vunpack.c.l.b16 %v175
        %v659 = vunpack.c.l.b16 %v177
        %v660 = vunpack.c.l.b16 %v178
        %v661 = vunpack.c.l.b16 %v180
        %v662 = vunpack.c.l.b16 %v181
        %v663 = vunpack.c.l.b16 %v183
        %v664 = vunpack.c.l.b16 %v184
        %v665 = vunpack.c.l.b16 %v186
        %v666 = vunpack.c.l.b16 %v187
        %v667 = vunpack.c.l.b16 %v189
        %v668 = vunpack.c.l.b16 %v190
        %v669 = vunpack.c.l.b16 %v192
        %v670 = vunpack.c.l.b16 %v193
        %v671 = vunpack.c.l.b16 %v195
        %v672 = vunpack.c.l.b16 %v196
        %v673 = vunpack.c.l.b16 %v198
        %v674 = vunpack.c.l.b16 %v199
        %v675 = vunpack.c.l.b16 %v201
        %v676 = vunpack.c.l.b16 %v202
        %v677 = vunpack.c.l.b16 %v204
        %v678 = vunpack.c.l.b16 %v205
        %v679 = vunpack.c.l.b16 %v207
        %v680 = vunpack.c.l.b16 %v208
        %v681 = vunpack.c.l.b16 %v210
        %v682 = vunpack.c.l.b16 %v211
        %v683 = vunpack.c.l.b16 %v213
        %v684 = vunpack.c.l.b16 %v214
        %v685 = vunpack.c.l.b16 %v216
        %v686 = vunpack.c.l.b16 %v217
        %v687 = vpack.c.b16 %v656, %v655
        %v688 = vpack.c.b16 %v658, %v657
        %v689 = vpack.c.b16 %v660, %v659
        %v690 = vpack.c.b16 %v662, %v661
        %v691 = vpack.c.b16 %v664, %v663
        %v692 = vpack.c.b16 %v666, %v665
        %v693 = vpack.c.b16 %v668, %v667
        %v694 = vpack.c.b16 %v670, %v669
        %v695 = vpack.c.b16 %v672, %v671
        %v696 = vpack.c.b16 %v674, %v673
        %v697 = vpack.c.b16 %v676, %v675
        %v698 = vpack.c.b16 %v678, %v677
        %v699 = vpack.c.b16 %v680, %v679
        %v700 = vpack.c.b16 %v682, %v681
        %v701 = vpack.c.b16 %v684, %v683
        %v702 = vpack.c.b16 %v686, %v685
        %v711 = vunpack.c.l.b16 %v615
        %v712 = vunpack.c.l.b16 %v616
        %v713 = vunpack.c.l.b16 %v617
        %v714 = vunpack.c.l.b16 %v618
        %v715 = vunpack.c.l.b16 %v619
        %v716 = vunpack.c.l.b16 %v620
        %v717 = vunpack.c.l.b16 %v621
        %v718 = vunpack.c.l.b16 %v622
        %v719 = vpack.c.b16 %v712, %v711
        %v720 = vpack.c.b16 %v714, %v713
        %v721 = vpack.c.b16 %v716, %v715
        %v722 = vpack.c.b16 %v718, %v717
        %vm727 = vcmask 523264
        %v729 = vsel %vm727, %v687, 0
        %v732 = vsel %vm727, %v688, 0
        %v735 = vsel %vm727, %v689, 0
        %v738 = vsel %vm727, %v690, 0
        %v741 = vsel %vm727, %v691, 0
        %v744 = vsel %vm727, %v692, 0
        %v747 = vsel %vm727, %v693, 0
        %v750 = vsel %vm727, %v694, 0
        %v753 = vsel %vm727, %v695, 0
        %v756 = vsel %vm727, %v696, 0
        %v759 = vsel %vm727, %v697, 0
        %v762 = vsel %vm727, %v698, 0
        %v765 = vsel %vm727, %v699, 0
        %v768 = vsel %vm727, %v700, 0
        %v771 = vsel %vm727, %v701, 0
        %v774 = vsel %vm727, %v702, 0
        %776 = vmatprep.subr.bf16.mxu0 0
        %777 = vmatpush1.bf16.msra.mxu0 0
        %778 = vmatprep.subr.bf16.mxu0 0
        %779 = vmatpush1.bf16.msra.mxu0 0
        %780 = vmatprep.subr.bf16.mxu0 0
        %781 = vmatpush1.bf16.msra.mxu0 0
        %782 = vmatprep.subr.bf16.mxu0 0
        %783 = vmatpush1.bf16.msra.mxu0 0
        %784 = vmatprep.subr.bf16.mxu0 0
        %785 = vmatpush1.bf16.msra.mxu0 %v722
        %786 = vmatprep.subr.bf16.mxu0 0
        %787 = vmatpush1.bf16.msra.mxu0 %v721
        %788 = vmatprep.subr.bf16.mxu0 0
        %789 = vmatpush1.bf16.msra.mxu0 %v720
        %790 = vmatprep.subr.bf16.mxu0 0
        %791 = vmatpush1.bf16.msra.mxu0 %v719
        %792 = vmatprep.subr.bf16.mxu0 0
        %793 = vmatpush2.bf16.msra.mxu0 0
        %794 = vmatprep.subr.bf16.mxu0 0
        %795 = vmatpush2.bf16.msra.mxu0 0
        %796 = vmatprep.subr.bf16.mxu0 0
        %797 = vmatpush2.bf16.msra.mxu0 0
        %798 = vmatprep.subr.bf16.mxu0 0
        %799 = vmatpush2.bf16.msra.mxu0 0
        %800 = vmatprep.subr.bf16.mxu0 0
        %801 = vmatpush2.bf16.msra.mxu0 0
        %802 = vmatprep.subr.bf16.mxu0 0
        %803 = vmatpush2.bf16.msra.mxu0 0
        %804 = vmatprep.subr.bf16.mxu0 0
        %805 = vmatpush2.bf16.msra.mxu0 0
        %806 = vmatprep.subr.bf16.mxu0 0
        %807 = vmatpush2.bf16.msra.mxu0 0
        %808 = vmatprep.mubr.bf16.mxu0 0
        %809 = vmatmul.mubr.bf16.gmra.mxu0 %v729
        %v810 = vpop.f32.mrf.mxu0
        %v811 = vadd.f32 0.0, %v810
        %v812 = vpop.f32.mrf.mxu0
        %v813 = vpop.f32.mrf.mxu0
        %v814 = vadd.f32 0.0, %v813
        %v815 = vpop.f32.mrf.mxu0
        %816 = vmatprep.mubr.bf16.mxu0 0
        %817 = vmatmul.mubr.bf16.gmra.mxu0 %v732
        %v818 = vpop.f32.mrf.mxu0
        %v819 = vadd.f32 0.0, %v818
        %v820 = vpop.f32.mrf.mxu0
        %v821 = vpop.f32.mrf.mxu0
        %v822 = vadd.f32 0.0, %v821
        %v823 = vpop.f32.mrf.mxu0
        %824 = vmatprep.mubr.bf16.mxu0 0
        %825 = vmatmul.mubr.bf16.gmra.mxu0 %v735
        %v826 = vpop.f32.mrf.mxu0
        %v827 = vadd.f32 0.0, %v826
        %v828 = vpop.f32.mrf.mxu0
        %v829 = vpop.f32.mrf.mxu0
        %v830 = vadd.f32 0.0, %v829
        %v831 = vpop.f32.mrf.mxu0
        %832 = vmatprep.mubr.bf16.mxu0 0
        %833 = vmatmul.mubr.bf16.gmra.mxu0 %v738
        %v834 = vpop.f32.mrf.mxu0
        %v835 = vadd.f32 0.0, %v834
        %v836 = vpop.f32.mrf.mxu0
        %v837 = vpop.f32.mrf.mxu0
        %v838 = vadd.f32 0.0, %v837
        %v839 = vpop.f32.mrf.mxu0
        %840 = vmatprep.mubr.bf16.mxu0 0
        %841 = vmatmul.mubr.bf16.gmra.mxu0 %v741
        %v842 = vpop.f32.mrf.mxu0
        %v843 = vadd.f32 0.0, %v842
        %v844 = vpop.f32.mrf.mxu0
        %v845 = vpop.f32.mrf.mxu0
        %v846 = vadd.f32 0.0, %v845
        %v847 = vpop.f32.mrf.mxu0
        %848 = vmatprep.mubr.bf16.mxu0 0
        %849 = vmatmul.mubr.bf16.gmra.mxu0 %v744
        %v850 = vpop.f32.mrf.mxu0
        %v851 = vadd.f32 0.0, %v850
        %v852 = vpop.f32.mrf.mxu0
        %v853 = vpop.f32.mrf.mxu0
        %v854 = vadd.f32 0.0, %v853
        %v855 = vpop.f32.mrf.mxu0
        %856 = vmatprep.mubr.bf16.mxu0 0
        %857 = vmatmul.mubr.bf16.gmra.mxu0 %v747
        %v858 = vpop.f32.mrf.mxu0
        %v859 = vadd.f32 0.0, %v858
        %v860 = vpop.f32.mrf.mxu0
        %v861 = vpop.f32.mrf.mxu0
        %v862 = vadd.f32 0.0, %v861
        %v863 = vpop.f32.mrf.mxu0
        %864 = vmatprep.mubr.bf16.mxu0 0
        %865 = vmatmul.mubr.bf16.gmra.mxu0 %v750
        %v866 = vpop.f32.mrf.mxu0
        %v867 = vadd.f32 0.0, %v866
        %v868 = vpop.f32.mrf.mxu0
        %v869 = vpop.f32.mrf.mxu0
        %v870 = vadd.f32 0.0, %v869
        %v871 = vpop.f32.mrf.mxu0
        %872 = vmatprep.mubr.bf16.mxu0 0
        %873 = vmatmul.mubr.bf16.gmra.mxu0 %v753
        %v874 = vpop.f32.mrf.mxu0
        %v875 = vadd.f32 0.0, %v874
        %v876 = vpop.f32.mrf.mxu0
        %v877 = vpop.f32.mrf.mxu0
        %v878 = vadd.f32 0.0, %v877
        %v879 = vpop.f32.mrf.mxu0
        %880 = vmatprep.mubr.bf16.mxu0 0
        %881 = vmatmul.mubr.bf16.gmra.mxu0 %v756
        %v882 = vpop.f32.mrf.mxu0
        %v883 = vadd.f32 0.0, %v882
        %v884 = vpop.f32.mrf.mxu0
        %v885 = vpop.f32.mrf.mxu0
        %v886 = vadd.f32 0.0, %v885
        %v887 = vpop.f32.mrf.mxu0
        %888 = vmatprep.mubr.bf16.mxu0 0
        %889 = vmatmul.mubr.bf16.gmra.mxu0 %v759
        %v890 = vpop.f32.mrf.mxu0
        %v891 = vadd.f32 0.0, %v890
        %v892 = vpop.f32.mrf.mxu0
        %v893 = vpop.f32.mrf.mxu0
        %v894 = vadd.f32 0.0, %v893
        %v895 = vpop.f32.mrf.mxu0
        %896 = vmatprep.mubr.bf16.mxu0 0
        %897 = vmatmul.mubr.bf16.gmra.mxu0 %v762
        %v898 = vpop.f32.mrf.mxu0
        %v899 = vadd.f32 0.0, %v898
        %v900 = vpop.f32.mrf.mxu0
        %v901 = vpop.f32.mrf.mxu0
        %v902 = vadd.f32 0.0, %v901
        %v903 = vpop.f32.mrf.mxu0
        %904 = vmatprep.mubr.bf16.mxu0 0
        %905 = vmatmul.mubr.bf16.gmra.mxu0 %v765
        %v906 = vpop.f32.mrf.mxu0
        %v907 = vadd.f32 0.0, %v906
        %v908 = vpop.f32.mrf.mxu0
        %v909 = vpop.f32.mrf.mxu0
        %v910 = vadd.f32 0.0, %v909
        %v911 = vpop.f32.mrf.mxu0
        %912 = vmatprep.mubr.bf16.mxu0 0
        %913 = vmatmul.mubr.bf16.gmra.mxu0 %v768
        %v914 = vpop.f32.mrf.mxu0
        %v915 = vadd.f32 0.0, %v914
        %v916 = vpop.f32.mrf.mxu0
        %v917 = vpop.f32.mrf.mxu0
        %v918 = vadd.f32 0.0, %v917
        %v919 = vpop.f32.mrf.mxu0
        %920 = vmatprep.mubr.bf16.mxu0 0
        %921 = vmatmul.mubr.bf16.gmra.mxu0 %v771
        %v922 = vpop.f32.mrf.mxu0
        %v923 = vadd.f32 0.0, %v922
        %v924 = vpop.f32.mrf.mxu0
        %v925 = vpop.f32.mrf.mxu0
        %v926 = vadd.f32 0.0, %v925
        %v927 = vpop.f32.mrf.mxu0
        %928 = vmatprep.mubr.bf16.mxu0 0
        %929 = vmatmul.mubr.bf16.gmra.mxu0 %v774
        %v930 = vpop.f32.mrf.mxu0
        %v931 = vadd.f32 0.0, %v930
        %v932 = vpop.f32.mrf.mxu0
        %v933 = vpop.f32.mrf.mxu0
        %v934 = vadd.f32 0.0, %v933
        %v935 = vpop.f32.mrf.mxu0
        %936 = vdwg.mxu0
        %v937 = vunpack.c.l.b16 %v235
        %v938 = vunpack.c.l.b16 %v245
        %v939 = vunpack.c.l.b16 %v259
        %v940 = vunpack.c.l.b16 %v269
        %v941 = vunpack.c.l.b16 %v283
        %v942 = vunpack.c.l.b16 %v293
        %v943 = vunpack.c.l.b16 %v307
        %v944 = vunpack.c.l.b16 %v317
        %v945 = vunpack.c.l.b16 %v331
        %v946 = vunpack.c.l.b16 %v341
        %v947 = vunpack.c.l.b16 %v355
        %v948 = vunpack.c.l.b16 %v365
        %v949 = vunpack.c.l.b16 %v379
        %v950 = vunpack.c.l.b16 %v389
        %v951 = vunpack.c.l.b16 %v403
        %v952 = vunpack.c.l.b16 %v413
        %v953 = vunpack.c.l.b16 %v427
        %v954 = vunpack.c.l.b16 %v437
        %v955 = vunpack.c.l.b16 %v451
        %v956 = vunpack.c.l.b16 %v461
        %v957 = vunpack.c.l.b16 %v475
        %v958 = vunpack.c.l.b16 %v485
        %v959 = vunpack.c.l.b16 %v499
        %v960 = vunpack.c.l.b16 %v509
        %v961 = vunpack.c.l.b16 %v523
        %v962 = vunpack.c.l.b16 %v533
        %v963 = vunpack.c.l.b16 %v547
        %v964 = vunpack.c.l.b16 %v557
        %v965 = vunpack.c.l.b16 %v571
        %v966 = vunpack.c.l.b16 %v581
        %v967 = vunpack.c.l.b16 %v595
        %v968 = vunpack.c.l.b16 %v605
        %v969 = vpack.c.b16 %v938, %v937
        %v970 = vpack.c.b16 %v940, %v939
        %v971 = vpack.c.b16 %v942, %v941
        %v972 = vpack.c.b16 %v944, %v943
        %v973 = vpack.c.b16 %v946, %v945
        %v974 = vpack.c.b16 %v948, %v947
        %v975 = vpack.c.b16 %v950, %v949
        %v976 = vpack.c.b16 %v952, %v951
        %v977 = vpack.c.b16 %v954, %v953
        %v978 = vpack.c.b16 %v956, %v955
        %v979 = vpack.c.b16 %v958, %v957
        %v980 = vpack.c.b16 %v960, %v959
        %v981 = vpack.c.b16 %v962, %v961
        %v982 = vpack.c.b16 %v964, %v963
        %v983 = vpack.c.b16 %v966, %v965
        %v984 = vpack.c.b16 %v968, %v967
        %v993 = vunpack.c.l.b16 %v606
        %v994 = vunpack.c.l.b16 %v607
        %v995 = vunpack.c.l.b16 %v608
        %v996 = vunpack.c.l.b16 %v609
        %v997 = vunpack.c.l.b16 %v610
        %v998 = vunpack.c.l.b16 %v611
        %v999 = vunpack.c.l.b16 %v612
        %v1000 = vunpack.c.l.b16 %v613
        %v1001 = vpack.c.b16 %v994, %v993
        %v1002 = vpack.c.b16 %v996, %v995
        %v1003 = vpack.c.b16 %v998, %v997
        %v1004 = vpack.c.b16 %v1000, %v999
        %v1010 = vsel %vm727, %v969, 0
        %v1013 = vsel %vm727, %v970, 0
        %v1016 = vsel %vm727, %v971, 0
        %v1019 = vsel %vm727, %v972, 0
        %v1022 = vsel %vm727, %v973, 0
        %v1025 = vsel %vm727, %v974, 0
        %v1028 = vsel %vm727, %v975, 0
        %v1031 = vsel %vm727, %v976, 0
        %v1034 = vsel %vm727, %v977, 0
        %v1037 = vsel %vm727, %v978, 0
        %v1040 = vsel %vm727, %v979, 0
        %v1043 = vsel %vm727, %v980, 0
        %v1046 = vsel %vm727, %v981, 0
        %v1049 = vsel %vm727, %v982, 0
        %v1052 = vsel %vm727, %v983, 0
        %v1055 = vsel %vm727, %v984, 0
        %1057 = vmatprep.subr.bf16.mxu0 0
        %1058 = vmatpush1.bf16.msra.mxu0 0
        %1059 = vmatprep.subr.bf16.mxu0 0
        %1060 = vmatpush1.bf16.msra.mxu0 0
        %1061 = vmatprep.subr.bf16.mxu0 0
        %1062 = vmatpush1.bf16.msra.mxu0 0
        %1063 = vmatprep.subr.bf16.mxu0 0
        %1064 = vmatpush1.bf16.msra.mxu0 0
        %1065 = vmatprep.subr.bf16.mxu0 0
        %1066 = vmatpush1.bf16.msra.mxu0 %v1004
        %1067 = vmatprep.subr.bf16.mxu0 0
        %1068 = vmatpush1.bf16.msra.mxu0 %v1003
        %1069 = vmatprep.subr.bf16.mxu0 0
        %1070 = vmatpush1.bf16.msra.mxu0 %v1002
        %1071 = vmatprep.subr.bf16.mxu0 0
        %1072 = vmatpush1.bf16.msra.mxu0 %v1001
        %1073 = vmatprep.subr.bf16.mxu0 0
        %1074 = vmatpush2.bf16.msra.mxu0 0
        %1075 = vmatprep.subr.bf16.mxu0 0
        %1076 = vmatpush2.bf16.msra.mxu0 0
        %1077 = vmatprep.subr.bf16.mxu0 0
        %1078 = vmatpush2.bf16.msra.mxu0 0
        %1079 = vmatprep.subr.bf16.mxu0 0
        %1080 = vmatpush2.bf16.msra.mxu0 0
        %1081 = vmatprep.subr.bf16.mxu0 0
        %1082 = vmatpush2.bf16.msra.mxu0 0
        %1083 = vmatprep.subr.bf16.mxu0 0
        %1084 = vmatpush2.bf16.msra.mxu0 0
        %1085 = vmatprep.subr.bf16.mxu0 0
        %1086 = vmatpush2.bf16.msra.mxu0 0
        %1087 = vmatprep.subr.bf16.mxu0 0
        %1088 = vmatpush2.bf16.msra.mxu0 0
        %1089 = vmatprep.mubr.bf16.mxu0 0
        %1090 = vmatmul.mubr.bf16.gmra.mxu0 %v1010
        %v1091 = vpop.f32.mrf.mxu0
        %v1092 = vadd.f32 %v811, %v1091
        %v1093 = vpop.f32.mrf.mxu0
        %v1094 = vpop.f32.mrf.mxu0
        %v1095 = vadd.f32 %v814, %v1094
        %v1096 = vpop.f32.mrf.mxu0
        %1097 = vmatprep.mubr.bf16.mxu0 0
        %1098 = vmatmul.mubr.bf16.gmra.mxu0 %v1013
        %v1099 = vpop.f32.mrf.mxu0
        %v1100 = vadd.f32 %v819, %v1099
        %v1101 = vpop.f32.mrf.mxu0
        %v1102 = vpop.f32.mrf.mxu0
        %v1103 = vadd.f32 %v822, %v1102
        %v1104 = vpop.f32.mrf.mxu0
        %1105 = vmatprep.mubr.bf16.mxu0 0
        %1106 = vmatmul.mubr.bf16.gmra.mxu0 %v1016
        %v1107 = vpop.f32.mrf.mxu0
        %v1108 = vadd.f32 %v827, %v1107
        %v1109 = vpop.f32.mrf.mxu0
        %v1110 = vpop.f32.mrf.mxu0
        %v1111 = vadd.f32 %v830, %v1110
        %v1112 = vpop.f32.mrf.mxu0
        %1113 = vmatprep.mubr.bf16.mxu0 0
        %1114 = vmatmul.mubr.bf16.gmra.mxu0 %v1019
        %v1115 = vpop.f32.mrf.mxu0
        %v1116 = vadd.f32 %v835, %v1115
        %v1117 = vpop.f32.mrf.mxu0
        %v1118 = vpop.f32.mrf.mxu0
        %v1119 = vadd.f32 %v838, %v1118
        %v1120 = vpop.f32.mrf.mxu0
        %1121 = vmatprep.mubr.bf16.mxu0 0
        %1122 = vmatmul.mubr.bf16.gmra.mxu0 %v1022
        %v1123 = vpop.f32.mrf.mxu0
        %v1124 = vadd.f32 %v843, %v1123
        %v1125 = vpop.f32.mrf.mxu0
        %v1126 = vpop.f32.mrf.mxu0
        %v1127 = vadd.f32 %v846, %v1126
        %v1128 = vpop.f32.mrf.mxu0
        %1129 = vmatprep.mubr.bf16.mxu0 0
        %1130 = vmatmul.mubr.bf16.gmra.mxu0 %v1025
        %v1131 = vpop.f32.mrf.mxu0
        %v1132 = vadd.f32 %v851, %v1131
        %v1133 = vpop.f32.mrf.mxu0
        %v1134 = vpop.f32.mrf.mxu0
        %v1135 = vadd.f32 %v854, %v1134
        %v1136 = vpop.f32.mrf.mxu0
        %1137 = vmatprep.mubr.bf16.mxu0 0
        %1138 = vmatmul.mubr.bf16.gmra.mxu0 %v1028
        %v1139 = vpop.f32.mrf.mxu0
        %v1140 = vadd.f32 %v859, %v1139
        %v1141 = vpop.f32.mrf.mxu0
        %v1142 = vpop.f32.mrf.mxu0
        %v1143 = vadd.f32 %v862, %v1142
        %v1144 = vpop.f32.mrf.mxu0
        %1145 = vmatprep.mubr.bf16.mxu0 0
        %1146 = vmatmul.mubr.bf16.gmra.mxu0 %v1031
        %v1147 = vpop.f32.mrf.mxu0
        %v1148 = vadd.f32 %v867, %v1147
        %v1149 = vpop.f32.mrf.mxu0
        %v1150 = vpop.f32.mrf.mxu0
        %v1151 = vadd.f32 %v870, %v1150
        %v1152 = vpop.f32.mrf.mxu0
        %1153 = vmatprep.mubr.bf16.mxu0 0
        %1154 = vmatmul.mubr.bf16.gmra.mxu0 %v1034
        %v1155 = vpop.f32.mrf.mxu0
        %v1156 = vadd.f32 %v875, %v1155
        %v1157 = vpop.f32.mrf.mxu0
        %v1158 = vpop.f32.mrf.mxu0
        %v1159 = vadd.f32 %v878, %v1158
        %v1160 = vpop.f32.mrf.mxu0
        %1161 = vmatprep.mubr.bf16.mxu0 0
        %1162 = vmatmul.mubr.bf16.gmra.mxu0 %v1037
        %v1163 = vpop.f32.mrf.mxu0
        %v1164 = vadd.f32 %v883, %v1163
        %v1165 = vpop.f32.mrf.mxu0
        %v1166 = vpop.f32.mrf.mxu0
        %v1167 = vadd.f32 %v886, %v1166
        %v1168 = vpop.f32.mrf.mxu0
        %1169 = vmatprep.mubr.bf16.mxu0 0
        %1170 = vmatmul.mubr.bf16.gmra.mxu0 %v1040
        %v1171 = vpop.f32.mrf.mxu0
        %v1172 = vadd.f32 %v891, %v1171
        %v1173 = vpop.f32.mrf.mxu0
        %v1174 = vpop.f32.mrf.mxu0
        %v1175 = vadd.f32 %v894, %v1174
        %v1176 = vpop.f32.mrf.mxu0
        %1177 = vmatprep.mubr.bf16.mxu0 0
        %1178 = vmatmul.mubr.bf16.gmra.mxu0 %v1043
        %v1179 = vpop.f32.mrf.mxu0
        %v1180 = vadd.f32 %v899, %v1179
        %v1181 = vpop.f32.mrf.mxu0
        %v1182 = vpop.f32.mrf.mxu0
        %v1183 = vadd.f32 %v902, %v1182
        %v1184 = vpop.f32.mrf.mxu0
        %1185 = vmatprep.mubr.bf16.mxu0 0
        %1186 = vmatmul.mubr.bf16.gmra.mxu0 %v1046
        %v1187 = vpop.f32.mrf.mxu0
        %v1188 = vadd.f32 %v907, %v1187
        %v1189 = vpop.f32.mrf.mxu0
        %v1190 = vpop.f32.mrf.mxu0
        %v1191 = vadd.f32 %v910, %v1190
        %v1192 = vpop.f32.mrf.mxu0
        %1193 = vmatprep.mubr.bf16.mxu0 0
        %1194 = vmatmul.mubr.bf16.gmra.mxu0 %v1049
        %v1195 = vpop.f32.mrf.mxu0
        %v1196 = vadd.f32 %v915, %v1195
        %v1197 = vpop.f32.mrf.mxu0
        %v1198 = vpop.f32.mrf.mxu0
        %v1199 = vadd.f32 %v918, %v1198
        %v1200 = vpop.f32.mrf.mxu0
        %1201 = vmatprep.mubr.bf16.mxu0 0
        %1202 = vmatmul.mubr.bf16.gmra.mxu0 %v1052
        %v1203 = vpop.f32.mrf.mxu0
        %v1204 = vadd.f32 %v923, %v1203
        %v1205 = vpop.f32.mrf.mxu0
        %v1206 = vpop.f32.mrf.mxu0
        %v1207 = vadd.f32 %v926, %v1206
        %v1208 = vpop.f32.mrf.mxu0
        %1209 = vmatprep.mubr.bf16.mxu0 0
        %1210 = vmatmul.mubr.bf16.gmra.mxu0 %v1055
        %v1211 = vpop.f32.mrf.mxu0
        %v1212 = vadd.f32 %v931, %v1211
        %v1213 = vpop.f32.mrf.mxu0
        %v1214 = vpop.f32.mrf.mxu0
        %v1215 = vadd.f32 %v934, %v1214
        %v1216 = vpop.f32.mrf.mxu0
        %1217 = vdwg.mxu0
        %v1218 = vld [vmem:[%s168] sm:$0xf]
        %v1219 = vld [vmem:[%s168 + $0x4] sm:$0xf]
        %v1220 = vld [vmem:[%s168 + $0x8] sm:$0x1]
        %v1221 = vld [vmem:[%s168 + $0xc] sm:$0xf]
        %v1222 = vld [vmem:[%s168 + $0x10] sm:$0xf]
        %v1223 = vld [vmem:[%s168 + $0x14] sm:$0x1]
        %v1224 = vld [vmem:[%s168 + $0x18] sm:$0xf]
        %v1225 = vld [vmem:[%s168 + $0x1c] sm:$0xf]
        %v1226 = vld [vmem:[%s168 + $0x20] sm:$0x1]
        %v1227 = vld [vmem:[%s168 + $0x24] sm:$0xf]
        %v1228 = vld [vmem:[%s168 + $0x28] sm:$0xf]
        %v1229 = vld [vmem:[%s168 + $0x2c] sm:$0x1]
        %v1230 = vld [vmem:[%s168 + $0x30] sm:$0xf]
        %v1231 = vld [vmem:[%s168 + $0x34] sm:$0xf]
        %v1232 = vld [vmem:[%s168 + $0x38] sm:$0x1]
        %v1233 = vld [vmem:[%s168 + $0x3c] sm:$0xf]
        %v1234 = vld [vmem:[%s168 + $0x40] sm:$0xf]
        %v1235 = vld [vmem:[%s168 + $0x44] sm:$0x1]
        %v1236 = vld [vmem:[%s168 + $0x48] sm:$0xf]
        %v1237 = vld [vmem:[%s168 + $0x4c] sm:$0xf]
        %v1238 = vld [vmem:[%s168 + $0x50] sm:$0x1]
        %v1239 = vld [vmem:[%s168 + $0x54] sm:$0xf]
        %v1240 = vld [vmem:[%s168 + $0x58] sm:$0xf]
        %v1241 = vld [vmem:[%s168 + $0x5c] sm:$0x1]
        %v1242 = vld [vmem:[%s168 + $0x60] sm:$0xf]
        %v1243 = vld [vmem:[%s168 + $0x64] sm:$0xf]
        %v1244 = vld [vmem:[%s168 + $0x68] sm:$0x1]
        %v1245 = vld [vmem:[%s168 + $0x6c] sm:$0xf]
        %v1246 = vld [vmem:[%s168 + $0x70] sm:$0xf]
        %v1247 = vld [vmem:[%s168 + $0x74] sm:$0x1]
        %v1248 = vld [vmem:[%s168 + $0x78] sm:$0xf]
        %v1249 = vld [vmem:[%s168 + $0x7c] sm:$0xf]
        %v1250 = vld [vmem:[%s168 + $0x80] sm:$0x1]
        %v1251 = vld [vmem:[%s168 + $0x84] sm:$0xf]
        %v1252 = vld [vmem:[%s168 + $0x88] sm:$0xf]
        %v1253 = vld [vmem:[%s168 + $0x8c] sm:$0x1]
        %v1254 = vld [vmem:[%s168 + $0x90] sm:$0xf]
        %v1255 = vld [vmem:[%s168 + $0x94] sm:$0xf]
        %v1256 = vld [vmem:[%s168 + $0x98] sm:$0x1]
        %v1257 = vld [vmem:[%s168 + $0x9c] sm:$0xf]
        %v1258 = vld [vmem:[%s168 + $0xa0] sm:$0xf]
        %v1259 = vld [vmem:[%s168 + $0xa4] sm:$0x1]
        %v1260 = vld [vmem:[%s168 + $0xa8] sm:$0xf]
        %v1261 = vld [vmem:[%s168 + $0xac] sm:$0xf]
        %v1262 = vld [vmem:[%s168 + $0xb0] sm:$0x1]
        %v1263 = vld [vmem:[%s168 + $0xb4] sm:$0xf]
        %v1264 = vld [vmem:[%s168 + $0xb8] sm:$0xf]
        %v1265 = vld [vmem:[%s168 + $0xbc] sm:$0x1]
        %v1267 = vshrl.u32 %v1218, 16
        %v1269 = vrot.slane %v1267, 4
        %v1270 = vshll.u32 %v1218, 16
        %v1272 = vrot.slane %v1270, 5
        %v1273 = vor.u32 %v1269, %v1272
        %v1274 = vrot.slane %v1273, 4
        %v1276 = vshll.u32 %v1219, 16
        %v1278 = vrot.slane %v1276, 5
        %v1279 = vsel %vm221, %v1274, %v1278
        %v1280 = vshrl.u32 %v1219, 16
        %v1282 = vrot.slane %v1280, 4
        %v1283 = vor.u32 %v1282, %v1278
        %v1284 = vrot.slane %v1283, 4
        %v1286 = vshll.u32 %v1220, 16
        %v1288 = vrot.slane %v1286, 5
        %v1289 = vsel %vm221, %v1284, %v1288
        %v1291 = vshrl.u32 %v1221, 16
        %v1293 = vrot.slane %v1291, 4
        %v1294 = vshll.u32 %v1221, 16
        %v1296 = vrot.slane %v1294, 5
        %v1297 = vor.u32 %v1293, %v1296
        %v1298 = vrot.slane %v1297, 4
        %v1300 = vshll.u32 %v1222, 16
        %v1302 = vrot.slane %v1300, 5
        %v1303 = vsel %vm221, %v1298, %v1302
        %v1304 = vshrl.u32 %v1222, 16
        %v1306 = vrot.slane %v1304, 4
        %v1307 = vor.u32 %v1306, %v1302
        %v1308 = vrot.slane %v1307, 4
        %v1310 = vshll.u32 %v1223, 16
        %v1312 = vrot.slane %v1310, 5
        %v1313 = vsel %vm221, %v1308, %v1312
        %v1315 = vshrl.u32 %v1224, 16
        %v1317 = vrot.slane %v1315, 4
        %v1318 = vshll.u32 %v1224, 16
        %v1320 = vrot.slane %v1318, 5
        %v1321 = vor.u32 %v1317, %v1320
        %v1322 = vrot.slane %v1321, 4
        %v1324 = vshll.u32 %v1225, 16
        %v1326 = vrot.slane %v1324, 5
        %v1327 = vsel %vm221, %v1322, %v1326
        %v1328 = vshrl.u32 %v1225, 16
        %v1330 = vrot.slane %v1328, 4
        %v1331 = vor.u32 %v1330, %v1326
        %v1332 = vrot.slane %v1331, 4
        %v1334 = vshll.u32 %v1226, 16
        %v1336 = vrot.slane %v1334, 5
        %v1337 = vsel %vm221, %v1332, %v1336
        %v1339 = vshrl.u32 %v1227, 16
        %v1341 = vrot.slane %v1339, 4
        %v1342 = vshll.u32 %v1227, 16
        %v1344 = vrot.slane %v1342, 5
        %v1345 = vor.u32 %v1341, %v1344
        %v1346 = vrot.slane %v1345, 4
        %v1348 = vshll.u32 %v1228, 16
        %v1350 = vrot.slane %v1348, 5
        %v1351 = vsel %vm221, %v1346, %v1350
        %v1352 = vshrl.u32 %v1228, 16
        %v1354 = vrot.slane %v1352, 4
        %v1355 = vor.u32 %v1354, %v1350
        %v1356 = vrot.slane %v1355, 4
        %v1358 = vshll.u32 %v1229, 16
        %v1360 = vrot.slane %v1358, 5
        %v1361 = vsel %vm221, %v1356, %v1360
        %v1363 = vshrl.u32 %v1230, 16
        %v1365 = vrot.slane %v1363, 4
        %v1366 = vshll.u32 %v1230, 16
        %v1368 = vrot.slane %v1366, 5
        %v1369 = vor.u32 %v1365, %v1368
        %v1370 = vrot.slane %v1369, 4
        %v1372 = vshll.u32 %v1231, 16
        %v1374 = vrot.slane %v1372, 5
        %v1375 = vsel %vm221, %v1370, %v1374
        %v1376 = vshrl.u32 %v1231, 16
        %v1378 = vrot.slane %v1376, 4
        %v1379 = vor.u32 %v1378, %v1374
        %v1380 = vrot.slane %v1379, 4
        %v1382 = vshll.u32 %v1232, 16
        %v1384 = vrot.slane %v1382, 5
        %v1385 = vsel %vm221, %v1380, %v1384
        %v1387 = vshrl.u32 %v1233, 16
        %v1389 = vrot.slane %v1387, 4
        %v1390 = vshll.u32 %v1233, 16
        %v1392 = vrot.slane %v1390, 5
        %v1393 = vor.u32 %v1389, %v1392
        %v1394 = vrot.slane %v1393, 4
        %v1396 = vshll.u32 %v1234, 16
        %v1398 = vrot.slane %v1396, 5
        %v1399 = vsel %vm221, %v1394, %v1398
        %v1400 = vshrl.u32 %v1234, 16
        %v1402 = vrot.slane %v1400, 4
        %v1403 = vor.u32 %v1402, %v1398
        %v1404 = vrot.slane %v1403, 4
        %v1406 = vshll.u32 %v1235, 16
        %v1408 = vrot.slane %v1406, 5
        %v1409 = vsel %vm221, %v1404, %v1408
        %v1411 = vshrl.u32 %v1236, 16
        %v1413 = vrot.slane %v1411, 4
        %v1414 = vshll.u32 %v1236, 16
        %v1416 = vrot.slane %v1414, 5
        %v1417 = vor.u32 %v1413, %v1416
        %v1418 = vrot.slane %v1417, 4
        %v1420 = vshll.u32 %v1237, 16
        %v1422 = vrot.slane %v1420, 5
        %v1423 = vsel %vm221, %v1418, %v1422
        %v1424 = vshrl.u32 %v1237, 16
        %v1426 = vrot.slane %v1424, 4
        %v1427 = vor.u32 %v1426, %v1422
        %v1428 = vrot.slane %v1427, 4
        %v1430 = vshll.u32 %v1238, 16
        %v1432 = vrot.slane %v1430, 5
        %v1433 = vsel %vm221, %v1428, %v1432
        %v1435 = vshrl.u32 %v1239, 16
        %v1437 = vrot.slane %v1435, 4
        %v1438 = vshll.u32 %v1239, 16
        %v1440 = vrot.slane %v1438, 5
        %v1441 = vor.u32 %v1437, %v1440
        %v1442 = vrot.slane %v1441, 4
        %v1444 = vshll.u32 %v1240, 16
        %v1446 = vrot.slane %v1444, 5
        %v1447 = vsel %vm221, %v1442, %v1446
        %v1448 = vshrl.u32 %v1240, 16
        %v1450 = vrot.slane %v1448, 4
        %v1451 = vor.u32 %v1450, %v1446
        %v1452 = vrot.slane %v1451, 4
        %v1454 = vshll.u32 %v1241, 16
        %v1456 = vrot.slane %v1454, 5
        %v1457 = vsel %vm221, %v1452, %v1456
        %v1459 = vshrl.u32 %v1242, 16
        %v1461 = vrot.slane %v1459, 4
        %v1462 = vshll.u32 %v1242, 16
        %v1464 = vrot.slane %v1462, 5
        %v1465 = vor.u32 %v1461, %v1464
        %v1466 = vrot.slane %v1465, 4
        %v1468 = vshll.u32 %v1243, 16
        %v1470 = vrot.slane %v1468, 5
        %v1471 = vsel %vm221, %v1466, %v1470
        %v1472 = vshrl.u32 %v1243, 16
        %v1474 = vrot.slane %v1472, 4
        %v1475 = vor.u32 %v1474, %v1470
        %v1476 = vrot.slane %v1475, 4
        %v1478 = vshll.u32 %v1244, 16
        %v1480 = vrot.slane %v1478, 5
        %v1481 = vsel %vm221, %v1476, %v1480
        %v1483 = vshrl.u32 %v1245, 16
        %v1485 = vrot.slane %v1483, 4
        %v1486 = vshll.u32 %v1245, 16
        %v1488 = vrot.slane %v1486, 5
        %v1489 = vor.u32 %v1485, %v1488
        %v1490 = vrot.slane %v1489, 4
        %v1492 = vshll.u32 %v1246, 16
        %v1494 = vrot.slane %v1492, 5
        %v1495 = vsel %vm221, %v1490, %v1494
        %v1496 = vshrl.u32 %v1246, 16
        %v1498 = vrot.slane %v1496, 4
        %v1499 = vor.u32 %v1498, %v1494
        %v1500 = vrot.slane %v1499, 4
        %v1502 = vshll.u32 %v1247, 16
        %v1504 = vrot.slane %v1502, 5
        %v1505 = vsel %vm221, %v1500, %v1504
        %v1507 = vshrl.u32 %v1248, 16
        %v1509 = vrot.slane %v1507, 4
        %v1510 = vshll.u32 %v1248, 16
        %v1512 = vrot.slane %v1510, 5
        %v1513 = vor.u32 %v1509, %v1512
        %v1514 = vrot.slane %v1513, 4
        %v1516 = vshll.u32 %v1249, 16
        %v1518 = vrot.slane %v1516, 5
        %v1519 = vsel %vm221, %v1514, %v1518
        %v1520 = vshrl.u32 %v1249, 16
        %v1522 = vrot.slane %v1520, 4
        %v1523 = vor.u32 %v1522, %v1518
        %v1524 = vrot.slane %v1523, 4
        %v1526 = vshll.u32 %v1250, 16
        %v1528 = vrot.slane %v1526, 5
        %v1529 = vsel %vm221, %v1524, %v1528
        %v1531 = vshrl.u32 %v1251, 16
        %v1533 = vrot.slane %v1531, 4
        %v1534 = vshll.u32 %v1251, 16
        %v1536 = vrot.slane %v1534, 5
        %v1537 = vor.u32 %v1533, %v1536
        %v1538 = vrot.slane %v1537, 4
        %v1540 = vshll.u32 %v1252, 16
        %v1542 = vrot.slane %v1540, 5
        %v1543 = vsel %vm221, %v1538, %v1542
        %v1544 = vshrl.u32 %v1252, 16
        %v1546 = vrot.slane %v1544, 4
        %v1547 = vor.u32 %v1546, %v1542
        %v1548 = vrot.slane %v1547, 4
        %v1550 = vshll.u32 %v1253, 16
        %v1552 = vrot.slane %v1550, 5
        %v1553 = vsel %vm221, %v1548, %v1552
        %v1555 = vshrl.u32 %v1254, 16
        %v1557 = vrot.slane %v1555, 4
        %v1558 = vshll.u32 %v1254, 16
        %v1560 = vrot.slane %v1558, 5
        %v1561 = vor.u32 %v1557, %v1560
        %v1562 = vrot.slane %v1561, 4
        %v1564 = vshll.u32 %v1255, 16
        %v1566 = vrot.slane %v1564, 5
        %v1567 = vsel %vm221, %v1562, %v1566
        %v1568 = vshrl.u32 %v1255, 16
        %v1570 = vrot.slane %v1568, 4
        %v1571 = vor.u32 %v1570, %v1566
        %v1572 = vrot.slane %v1571, 4
        %v1574 = vshll.u32 %v1256, 16
        %v1576 = vrot.slane %v1574, 5
        %v1577 = vsel %vm221, %v1572, %v1576
        %v1579 = vshrl.u32 %v1257, 16
        %v1581 = vrot.slane %v1579, 4
        %v1582 = vshll.u32 %v1257, 16
        %v1584 = vrot.slane %v1582, 5
        %v1585 = vor.u32 %v1581, %v1584
        %v1586 = vrot.slane %v1585, 4
        %v1588 = vshll.u32 %v1258, 16
        %v1590 = vrot.slane %v1588, 5
        %v1591 = vsel %vm221, %v1586, %v1590
        %v1592 = vshrl.u32 %v1258, 16
        %v1594 = vrot.slane %v1592, 4
        %v1595 = vor.u32 %v1594, %v1590
        %v1596 = vrot.slane %v1595, 4
        %v1598 = vshll.u32 %v1259, 16
        %v1600 = vrot.slane %v1598, 5
        %v1601 = vsel %vm221, %v1596, %v1600
        %v1603 = vshrl.u32 %v1260, 16
        %v1605 = vrot.slane %v1603, 4
        %v1606 = vshll.u32 %v1260, 16
        %v1608 = vrot.slane %v1606, 5
        %v1609 = vor.u32 %v1605, %v1608
        %v1610 = vrot.slane %v1609, 4
        %v1612 = vshll.u32 %v1261, 16
        %v1614 = vrot.slane %v1612, 5
        %v1615 = vsel %vm221, %v1610, %v1614
        %v1616 = vshrl.u32 %v1261, 16
        %v1618 = vrot.slane %v1616, 4
        %v1619 = vor.u32 %v1618, %v1614
        %v1620 = vrot.slane %v1619, 4
        %v1622 = vshll.u32 %v1262, 16
        %v1624 = vrot.slane %v1622, 5
        %v1625 = vsel %vm221, %v1620, %v1624
        %v1627 = vshrl.u32 %v1263, 16
        %v1629 = vrot.slane %v1627, 4
        %v1630 = vshll.u32 %v1263, 16
        %v1632 = vrot.slane %v1630, 5
        %v1633 = vor.u32 %v1629, %v1632
        %v1634 = vrot.slane %v1633, 4
        %v1636 = vshll.u32 %v1264, 16
        %v1638 = vrot.slane %v1636, 5
        %v1639 = vsel %vm221, %v1634, %v1638
        %v1640 = vshrl.u32 %v1264, 16
        %v1642 = vrot.slane %v1640, 4
        %v1643 = vor.u32 %v1642, %v1638
        %v1644 = vrot.slane %v1643, 4
        %v1646 = vshll.u32 %v1265, 16
        %v1648 = vrot.slane %v1646, 5
        %v1649 = vsel %vm221, %v1644, %v1648
        %s1650 = scalar_lea.vmem %s1, 64
        %v1651 = vld [vmem:[%s1650] sm:$0xf]
        %v1652 = vld [vmem:[%s1650 + $0x4] sm:$0xf]
        %v1653 = vld [vmem:[%s1650 + $0x8] sm:$0xf]
        %v1654 = vld [vmem:[%s1650 + $0xc] sm:$0xf]
        %v1655 = vld [vmem:[%s1650 + $0x10] sm:$0xf]
        %v1656 = vld [vmem:[%s1650 + $0x14] sm:$0xf]
        %v1657 = vld [vmem:[%s1650 + $0x18] sm:$0xf]
        %v1658 = vld [vmem:[%s1650 + $0x1c] sm:$0xf]
        %v1659 = vunpack.c.l.b16 %v1279
        %v1660 = vunpack.c.l.b16 %v1289
        %v1661 = vunpack.c.l.b16 %v1303
        %v1662 = vunpack.c.l.b16 %v1313
        %v1663 = vunpack.c.l.b16 %v1327
        %v1664 = vunpack.c.l.b16 %v1337
        %v1665 = vunpack.c.l.b16 %v1351
        %v1666 = vunpack.c.l.b16 %v1361
        %v1667 = vunpack.c.l.b16 %v1375
        %v1668 = vunpack.c.l.b16 %v1385
        %v1669 = vunpack.c.l.b16 %v1399
        %v1670 = vunpack.c.l.b16 %v1409
        %v1671 = vunpack.c.l.b16 %v1423
        %v1672 = vunpack.c.l.b16 %v1433
        %v1673 = vunpack.c.l.b16 %v1447
        %v1674 = vunpack.c.l.b16 %v1457
        %v1675 = vunpack.c.l.b16 %v1471
        %v1676 = vunpack.c.l.b16 %v1481
        %v1677 = vunpack.c.l.b16 %v1495
        %v1678 = vunpack.c.l.b16 %v1505
        %v1679 = vunpack.c.l.b16 %v1519
        %v1680 = vunpack.c.l.b16 %v1529
        %v1681 = vunpack.c.l.b16 %v1543
        %v1682 = vunpack.c.l.b16 %v1553
        %v1683 = vunpack.c.l.b16 %v1567
        %v1684 = vunpack.c.l.b16 %v1577
        %v1685 = vunpack.c.l.b16 %v1591
        %v1686 = vunpack.c.l.b16 %v1601
        %v1687 = vunpack.c.l.b16 %v1615
        %v1688 = vunpack.c.l.b16 %v1625
        %v1689 = vunpack.c.l.b16 %v1639
        %v1690 = vunpack.c.l.b16 %v1649
        %v1691 = vpack.c.b16 %v1660, %v1659
        %v1692 = vpack.c.b16 %v1662, %v1661
        %v1693 = vpack.c.b16 %v1664, %v1663
        %v1694 = vpack.c.b16 %v1666, %v1665
        %v1695 = vpack.c.b16 %v1668, %v1667
        %v1696 = vpack.c.b16 %v1670, %v1669
        %v1697 = vpack.c.b16 %v1672, %v1671
        %v1698 = vpack.c.b16 %v1674, %v1673
        %v1699 = vpack.c.b16 %v1676, %v1675
        %v1700 = vpack.c.b16 %v1678, %v1677
        %v1701 = vpack.c.b16 %v1680, %v1679
        %v1702 = vpack.c.b16 %v1682, %v1681
        %v1703 = vpack.c.b16 %v1684, %v1683
        %v1704 = vpack.c.b16 %v1686, %v1685
        %v1705 = vpack.c.b16 %v1688, %v1687
        %v1706 = vpack.c.b16 %v1690, %v1689
        %v1715 = vunpack.c.l.b16 %v1651
        %v1716 = vunpack.c.l.b16 %v1652
        %v1717 = vunpack.c.l.b16 %v1653
        %v1718 = vunpack.c.l.b16 %v1654
        %v1719 = vunpack.c.l.b16 %v1655
        %v1720 = vunpack.c.l.b16 %v1656
        %v1721 = vunpack.c.l.b16 %v1657
        %v1722 = vunpack.c.l.b16 %v1658
        %v1723 = vpack.c.b16 %v1716, %v1715
        %v1724 = vpack.c.b16 %v1718, %v1717
        %v1725 = vpack.c.b16 %v1720, %v1719
        %v1726 = vpack.c.b16 %v1722, %v1721
        %v1732 = vsel %vm727, %v1691, 0
        %v1735 = vsel %vm727, %v1692, 0
        %v1738 = vsel %vm727, %v1693, 0
        %v1741 = vsel %vm727, %v1694, 0
        %v1744 = vsel %vm727, %v1695, 0
        %v1747 = vsel %vm727, %v1696, 0
        %v1750 = vsel %vm727, %v1697, 0
        %v1753 = vsel %vm727, %v1698, 0
        %v1756 = vsel %vm727, %v1699, 0
        %v1759 = vsel %vm727, %v1700, 0
        %v1762 = vsel %vm727, %v1701, 0
        %v1765 = vsel %vm727, %v1702, 0
        %v1768 = vsel %vm727, %v1703, 0
        %v1771 = vsel %vm727, %v1704, 0
        %v1774 = vsel %vm727, %v1705, 0
        %v1777 = vsel %vm727, %v1706, 0
        %1779 = vmatprep.subr.bf16.mxu0 0
        %1780 = vmatpush1.bf16.msra.mxu0 0
        %1781 = vmatprep.subr.bf16.mxu0 0
        %1782 = vmatpush1.bf16.msra.mxu0 0
        %1783 = vmatprep.subr.bf16.mxu0 0
        %1784 = vmatpush1.bf16.msra.mxu0 0
        %1785 = vmatprep.subr.bf16.mxu0 0
        %1786 = vmatpush1.bf16.msra.mxu0 0
        %1787 = vmatprep.subr.bf16.mxu0 0
        %1788 = vmatpush1.bf16.msra.mxu0 %v1726
        %1789 = vmatprep.subr.bf16.mxu0 0
        %1790 = vmatpush1.bf16.msra.mxu0 %v1725
        %1791 = vmatprep.subr.bf16.mxu0 0
        %1792 = vmatpush1.bf16.msra.mxu0 %v1724
        %1793 = vmatprep.subr.bf16.mxu0 0
        %1794 = vmatpush1.bf16.msra.mxu0 %v1723
        %1795 = vmatprep.subr.bf16.mxu0 0
        %1796 = vmatpush2.bf16.msra.mxu0 0
        %1797 = vmatprep.subr.bf16.mxu0 0
        %1798 = vmatpush2.bf16.msra.mxu0 0
        %1799 = vmatprep.subr.bf16.mxu0 0
        %1800 = vmatpush2.bf16.msra.mxu0 0
        %1801 = vmatprep.subr.bf16.mxu0 0
        %1802 = vmatpush2.bf16.msra.mxu0 0
        %1803 = vmatprep.subr.bf16.mxu0 0
        %1804 = vmatpush2.bf16.msra.mxu0 0
        %1805 = vmatprep.subr.bf16.mxu0 0
        %1806 = vmatpush2.bf16.msra.mxu0 0
        %1807 = vmatprep.subr.bf16.mxu0 0
        %1808 = vmatpush2.bf16.msra.mxu0 0
        %1809 = vmatprep.subr.bf16.mxu0 0
        %1810 = vmatpush2.bf16.msra.mxu0 0
        %1811 = vmatprep.mubr.bf16.mxu0 0
        %1812 = vmatmul.mubr.bf16.gmra.mxu0 %v1732
        %v1813 = vpop.f32.mrf.mxu0
        %v1814 = vadd.f32 0.0, %v1813
        %v1815 = vpop.f32.mrf.mxu0
        %v1816 = vpop.f32.mrf.mxu0
        %v1817 = vadd.f32 0.0, %v1816
        %v1818 = vpop.f32.mrf.mxu0
        %1819 = vmatprep.mubr.bf16.mxu0 0
        %1820 = vmatmul.mubr.bf16.gmra.mxu0 %v1735
        %v1821 = vpop.f32.mrf.mxu0
        %v1822 = vadd.f32 0.0, %v1821
        %v1823 = vpop.f32.mrf.mxu0
        %v1824 = vpop.f32.mrf.mxu0
        %v1825 = vadd.f32 0.0, %v1824
        %v1826 = vpop.f32.mrf.mxu0
        %1827 = vmatprep.mubr.bf16.mxu0 0
        %1828 = vmatmul.mubr.bf16.gmra.mxu0 %v1738
        %v1829 = vpop.f32.mrf.mxu0
        %v1830 = vadd.f32 0.0, %v1829
        %v1831 = vpop.f32.mrf.mxu0
        %v1832 = vpop.f32.mrf.mxu0
        %v1833 = vadd.f32 0.0, %v1832
        %v1834 = vpop.f32.mrf.mxu0
        %1835 = vmatprep.mubr.bf16.mxu0 0
        %1836 = vmatmul.mubr.bf16.gmra.mxu0 %v1741
        %v1837 = vpop.f32.mrf.mxu0
        %v1838 = vadd.f32 0.0, %v1837
        %v1839 = vpop.f32.mrf.mxu0
        %v1840 = vpop.f32.mrf.mxu0
        %v1841 = vadd.f32 0.0, %v1840
        %v1842 = vpop.f32.mrf.mxu0
        %1843 = vmatprep.mubr.bf16.mxu0 0
        %1844 = vmatmul.mubr.bf16.gmra.mxu0 %v1744
        %v1845 = vpop.f32.mrf.mxu0
        %v1846 = vadd.f32 0.0, %v1845
        %v1847 = vpop.f32.mrf.mxu0
        %v1848 = vpop.f32.mrf.mxu0
        %v1849 = vadd.f32 0.0, %v1848
        %v1850 = vpop.f32.mrf.mxu0
        %1851 = vmatprep.mubr.bf16.mxu0 0
        %1852 = vmatmul.mubr.bf16.gmra.mxu0 %v1747
        %v1853 = vpop.f32.mrf.mxu0
        %v1854 = vadd.f32 0.0, %v1853
        %v1855 = vpop.f32.mrf.mxu0
        %v1856 = vpop.f32.mrf.mxu0
        %v1857 = vadd.f32 0.0, %v1856
        %v1858 = vpop.f32.mrf.mxu0
        %1859 = vmatprep.mubr.bf16.mxu0 0
        %1860 = vmatmul.mubr.bf16.gmra.mxu0 %v1750
        %v1861 = vpop.f32.mrf.mxu0
        %v1862 = vadd.f32 0.0, %v1861
        %v1863 = vpop.f32.mrf.mxu0
        %v1864 = vpop.f32.mrf.mxu0
        %v1865 = vadd.f32 0.0, %v1864
        %v1866 = vpop.f32.mrf.mxu0
        %1867 = vmatprep.mubr.bf16.mxu0 0
        %1868 = vmatmul.mubr.bf16.gmra.mxu0 %v1753
        %v1869 = vpop.f32.mrf.mxu0
        %v1870 = vadd.f32 0.0, %v1869
        %v1871 = vpop.f32.mrf.mxu0
        %v1872 = vpop.f32.mrf.mxu0
        %v1873 = vadd.f32 0.0, %v1872
        %v1874 = vpop.f32.mrf.mxu0
        %1875 = vmatprep.mubr.bf16.mxu0 0
        %1876 = vmatmul.mubr.bf16.gmra.mxu0 %v1756
        %v1877 = vpop.f32.mrf.mxu0
        %v1878 = vadd.f32 0.0, %v1877
        %v1879 = vpop.f32.mrf.mxu0
        %v1880 = vpop.f32.mrf.mxu0
        %v1881 = vadd.f32 0.0, %v1880
        %v1882 = vpop.f32.mrf.mxu0
        %1883 = vmatprep.mubr.bf16.mxu0 0
        %1884 = vmatmul.mubr.bf16.gmra.mxu0 %v1759
        %v1885 = vpop.f32.mrf.mxu0
        %v1886 = vadd.f32 0.0, %v1885
        %v1887 = vpop.f32.mrf.mxu0
        %v1888 = vpop.f32.mrf.mxu0
        %v1889 = vadd.f32 0.0, %v1888
        %v1890 = vpop.f32.mrf.mxu0
        %1891 = vmatprep.mubr.bf16.mxu0 0
        %1892 = vmatmul.mubr.bf16.gmra.mxu0 %v1762
        %v1893 = vpop.f32.mrf.mxu0
        %v1894 = vadd.f32 0.0, %v1893
        %v1895 = vpop.f32.mrf.mxu0
        %v1896 = vpop.f32.mrf.mxu0
        %v1897 = vadd.f32 0.0, %v1896
        %v1898 = vpop.f32.mrf.mxu0
        %1899 = vmatprep.mubr.bf16.mxu0 0
        %1900 = vmatmul.mubr.bf16.gmra.mxu0 %v1765
        %v1901 = vpop.f32.mrf.mxu0
        %v1902 = vadd.f32 0.0, %v1901
        %v1903 = vpop.f32.mrf.mxu0
        %v1904 = vpop.f32.mrf.mxu0
        %v1905 = vadd.f32 0.0, %v1904
        %v1906 = vpop.f32.mrf.mxu0
        %1907 = vmatprep.mubr.bf16.mxu0 0
        %1908 = vmatmul.mubr.bf16.gmra.mxu0 %v1768
        %v1909 = vpop.f32.mrf.mxu0
        %v1910 = vadd.f32 0.0, %v1909
        %v1911 = vpop.f32.mrf.mxu0
        %v1912 = vpop.f32.mrf.mxu0
        %v1913 = vadd.f32 0.0, %v1912
        %v1914 = vpop.f32.mrf.mxu0
        %1915 = vmatprep.mubr.bf16.mxu0 0
        %1916 = vmatmul.mubr.bf16.gmra.mxu0 %v1771
        %v1917 = vpop.f32.mrf.mxu0
        %v1918 = vadd.f32 0.0, %v1917
        %v1919 = vpop.f32.mrf.mxu0
        %v1920 = vpop.f32.mrf.mxu0
        %v1921 = vadd.f32 0.0, %v1920
        %v1922 = vpop.f32.mrf.mxu0
        %1923 = vmatprep.mubr.bf16.mxu0 0
        %1924 = vmatmul.mubr.bf16.gmra.mxu0 %v1774
        %v1925 = vpop.f32.mrf.mxu0
        %v1926 = vadd.f32 0.0, %v1925
        %v1927 = vpop.f32.mrf.mxu0
        %v1928 = vpop.f32.mrf.mxu0
        %v1929 = vadd.f32 0.0, %v1928
        %v1930 = vpop.f32.mrf.mxu0
        %1931 = vmatprep.mubr.bf16.mxu0 0
        %1932 = vmatmul.mubr.bf16.gmra.mxu0 %v1777
        %v1933 = vpop.f32.mrf.mxu0
        %v1934 = vadd.f32 0.0, %v1933
        %v1935 = vpop.f32.mrf.mxu0
        %v1936 = vpop.f32.mrf.mxu0
        %v1937 = vadd.f32 0.0, %v1936
        %v1938 = vpop.f32.mrf.mxu0
        %1939 = vdwg.mxu0
        %v1940 = vadd.f32 %v1092, %v1814
        %v1941 = vadd.f32 %v1095, %v1817
        %v1942 = vadd.f32 %v1100, %v1822
        %v1943 = vadd.f32 %v1103, %v1825
        %v1944 = vadd.f32 %v1108, %v1830
        %v1945 = vadd.f32 %v1111, %v1833
        %v1946 = vadd.f32 %v1116, %v1838
        %v1947 = vadd.f32 %v1119, %v1841
        %v1948 = vadd.f32 %v1124, %v1846
        %v1949 = vadd.f32 %v1127, %v1849
        %v1950 = vadd.f32 %v1132, %v1854
        %v1951 = vadd.f32 %v1135, %v1857
        %v1952 = vadd.f32 %v1140, %v1862
        %v1953 = vadd.f32 %v1143, %v1865
        %v1954 = vadd.f32 %v1148, %v1870
        %v1955 = vadd.f32 %v1151, %v1873
        %v1956 = vadd.f32 %v1156, %v1878
        %v1957 = vadd.f32 %v1159, %v1881
        %v1958 = vadd.f32 %v1164, %v1886
        %v1959 = vadd.f32 %v1167, %v1889
        %v1960 = vadd.f32 %v1172, %v1894
        %v1961 = vadd.f32 %v1175, %v1897
        %v1962 = vadd.f32 %v1180, %v1902
        %v1963 = vadd.f32 %v1183, %v1905
        %v1964 = vadd.f32 %v1188, %v1910
        %v1965 = vadd.f32 %v1191, %v1913
        %v1966 = vadd.f32 %v1196, %v1918
        %v1967 = vadd.f32 %v1199, %v1921
        %v1968 = vadd.f32 %v1204, %v1926
        %v1969 = vadd.f32 %v1207, %v1929
        %v1970 = vadd.f32 %v1212, %v1934
        %v1971 = vadd.f32 %v1215, %v1937
        %v1972 = vld [vmem:[%s168] sm:$0xf]
        %v1973 = vld [vmem:[%s168 + $0x4] sm:$0xf]
        %v1974 = vld [vmem:[%s168 + $0xc] sm:$0xf]
        %v1975 = vld [vmem:[%s168 + $0x10] sm:$0xf]
        %v1976 = vld [vmem:[%s168 + $0x18] sm:$0xf]
        %v1977 = vld [vmem:[%s168 + $0x1c] sm:$0xf]
        %v1978 = vld [vmem:[%s168 + $0x24] sm:$0xf]
        %v1979 = vld [vmem:[%s168 + $0x28] sm:$0xf]
        %v1980 = vld [vmem:[%s168 + $0x30] sm:$0xf]
        %v1981 = vld [vmem:[%s168 + $0x34] sm:$0xf]
        %v1982 = vld [vmem:[%s168 + $0x3c] sm:$0xf]
        %v1983 = vld [vmem:[%s168 + $0x40] sm:$0xf]
        %v1984 = vld [vmem:[%s168 + $0x48] sm:$0xf]
        %v1985 = vld [vmem:[%s168 + $0x4c] sm:$0xf]
        %v1986 = vld [vmem:[%s168 + $0x54] sm:$0xf]
        %v1987 = vld [vmem:[%s168 + $0x58] sm:$0xf]
        %v1988 = vld [vmem:[%s168 + $0x60] sm:$0xf]
        %v1989 = vld [vmem:[%s168 + $0x64] sm:$0xf]
        %v1990 = vld [vmem:[%s168 + $0x6c] sm:$0xf]
        %v1991 = vld [vmem:[%s168 + $0x70] sm:$0xf]
        %v1992 = vld [vmem:[%s168 + $0x78] sm:$0xf]
        %v1993 = vld [vmem:[%s168 + $0x7c] sm:$0xf]
        %v1994 = vld [vmem:[%s168 + $0x84] sm:$0xf]
        %v1995 = vld [vmem:[%s168 + $0x88] sm:$0xf]
        %v1996 = vld [vmem:[%s168 + $0x90] sm:$0xf]
        %v1997 = vld [vmem:[%s168 + $0x94] sm:$0xf]
        %v1998 = vld [vmem:[%s168 + $0x9c] sm:$0xf]
        %v1999 = vld [vmem:[%s168 + $0xa0] sm:$0xf]
        %v2000 = vld [vmem:[%s168 + $0xa8] sm:$0xf]
        %v2001 = vld [vmem:[%s168 + $0xac] sm:$0xf]
        %v2002 = vld [vmem:[%s168 + $0xb4] sm:$0xf]
        %v2003 = vld [vmem:[%s168 + $0xb8] sm:$0xf]
        %s2004 = scalar_lea.vmem %s1, 96
        %v2005 = vld [vmem:[%s2004] sm:$0xf]
        %v2006 = vld [vmem:[%s2004 + $0x4] sm:$0xf]
        %v2007 = vld [vmem:[%s2004 + $0x8] sm:$0xf]
        %v2008 = vld [vmem:[%s2004 + $0xc] sm:$0xf]
        %v2009 = vld [vmem:[%s2004 + $0x10] sm:$0xf]
        %v2010 = vld [vmem:[%s2004 + $0x14] sm:$0xf]
        %v2011 = vld [vmem:[%s2004 + $0x18] sm:$0xf]
        %v2012 = vld [vmem:[%s2004 + $0x1c] sm:$0xf]
        %v2045 = vunpack.c.l.b16 %v1972
        %v2046 = vunpack.c.l.b16 %v1973
        %v2047 = vunpack.c.l.b16 %v1974
        %v2048 = vunpack.c.l.b16 %v1975
        %v2049 = vunpack.c.l.b16 %v1976
        %v2050 = vunpack.c.l.b16 %v1977
        %v2051 = vunpack.c.l.b16 %v1978
        %v2052 = vunpack.c.l.b16 %v1979
        %v2053 = vunpack.c.l.b16 %v1980
        %v2054 = vunpack.c.l.b16 %v1981
        %v2055 = vunpack.c.l.b16 %v1982
        %v2056 = vunpack.c.l.b16 %v1983
        %v2057 = vunpack.c.l.b16 %v1984
        %v2058 = vunpack.c.l.b16 %v1985
        %v2059 = vunpack.c.l.b16 %v1986
        %v2060 = vunpack.c.l.b16 %v1987
        %v2061 = vunpack.c.l.b16 %v1988
        %v2062 = vunpack.c.l.b16 %v1989
        %v2063 = vunpack.c.l.b16 %v1990
        %v2064 = vunpack.c.l.b16 %v1991
        %v2065 = vunpack.c.l.b16 %v1992
        %v2066 = vunpack.c.l.b16 %v1993
        %v2067 = vunpack.c.l.b16 %v1994
        %v2068 = vunpack.c.l.b16 %v1995
        %v2069 = vunpack.c.l.b16 %v1996
        %v2070 = vunpack.c.l.b16 %v1997
        %v2071 = vunpack.c.l.b16 %v1998
        %v2072 = vunpack.c.l.b16 %v1999
        %v2073 = vunpack.c.l.b16 %v2000
        %v2074 = vunpack.c.l.b16 %v2001
        %v2075 = vunpack.c.l.b16 %v2002
        %v2076 = vunpack.c.l.b16 %v2003
        %v2077 = vpack.c.b16 %v2046, %v2045
        %v2078 = vpack.c.b16 %v2048, %v2047
        %v2079 = vpack.c.b16 %v2050, %v2049
        %v2080 = vpack.c.b16 %v2052, %v2051
        %v2081 = vpack.c.b16 %v2054, %v2053
        %v2082 = vpack.c.b16 %v2056, %v2055
        %v2083 = vpack.c.b16 %v2058, %v2057
        %v2084 = vpack.c.b16 %v2060, %v2059
        %v2085 = vpack.c.b16 %v2062, %v2061
        %v2086 = vpack.c.b16 %v2064, %v2063
        %v2087 = vpack.c.b16 %v2066, %v2065
        %v2088 = vpack.c.b16 %v2068, %v2067
        %v2089 = vpack.c.b16 %v2070, %v2069
        %v2090 = vpack.c.b16 %v2072, %v2071
        %v2091 = vpack.c.b16 %v2074, %v2073
        %v2092 = vpack.c.b16 %v2076, %v2075
        %v2101 = vunpack.c.l.b16 %v2005
        %v2102 = vunpack.c.l.b16 %v2006
        %v2103 = vunpack.c.l.b16 %v2007
        %v2104 = vunpack.c.l.b16 %v2008
        %v2105 = vunpack.c.l.b16 %v2009
        %v2106 = vunpack.c.l.b16 %v2010
        %v2107 = vunpack.c.l.b16 %v2011
        %v2108 = vunpack.c.l.b16 %v2012
        %v2109 = vpack.c.b16 %v2102, %v2101
        %v2110 = vpack.c.b16 %v2104, %v2103
        %v2111 = vpack.c.b16 %v2106, %v2105
        %v2112 = vpack.c.b16 %v2108, %v2107
        %v2118 = vsel %vm727, %v2077, 0
        %v2121 = vsel %vm727, %v2078, 0
        %v2124 = vsel %vm727, %v2079, 0
        %v2127 = vsel %vm727, %v2080, 0
        %v2130 = vsel %vm727, %v2081, 0
        %v2133 = vsel %vm727, %v2082, 0
        %v2136 = vsel %vm727, %v2083, 0
        %v2139 = vsel %vm727, %v2084, 0
        %v2142 = vsel %vm727, %v2085, 0
        %v2145 = vsel %vm727, %v2086, 0
        %v2148 = vsel %vm727, %v2087, 0
        %v2151 = vsel %vm727, %v2088, 0
        %v2154 = vsel %vm727, %v2089, 0
        %v2157 = vsel %vm727, %v2090, 0
        %v2160 = vsel %vm727, %v2091, 0
        %v2163 = vsel %vm727, %v2092, 0
        %2165 = vmatprep.subr.bf16.mxu0 0
        %2166 = vmatpush1.bf16.msra.mxu0 0
        %2167 = vmatprep.subr.bf16.mxu0 0
        %2168 = vmatpush1.bf16.msra.mxu0 0
        %2169 = vmatprep.subr.bf16.mxu0 0
        %2170 = vmatpush1.bf16.msra.mxu0 0
        %2171 = vmatprep.subr.bf16.mxu0 0
        %2172 = vmatpush1.bf16.msra.mxu0 0
        %2173 = vmatprep.subr.bf16.mxu0 0
        %2174 = vmatpush1.bf16.msra.mxu0 %v2112
        %2175 = vmatprep.subr.bf16.mxu0 0
        %2176 = vmatpush1.bf16.msra.mxu0 %v2111
        %2177 = vmatprep.subr.bf16.mxu0 0
        %2178 = vmatpush1.bf16.msra.mxu0 %v2110
        %2179 = vmatprep.subr.bf16.mxu0 0
        %2180 = vmatpush1.bf16.msra.mxu0 %v2109
        %2181 = vmatprep.subr.bf16.mxu0 0
        %2182 = vmatpush2.bf16.msra.mxu0 0
        %2183 = vmatprep.subr.bf16.mxu0 0
        %2184 = vmatpush2.bf16.msra.mxu0 0
        %2185 = vmatprep.subr.bf16.mxu0 0
        %2186 = vmatpush2.bf16.msra.mxu0 0
        %2187 = vmatprep.subr.bf16.mxu0 0
        %2188 = vmatpush2.bf16.msra.mxu0 0
        %2189 = vmatprep.subr.bf16.mxu0 0
        %2190 = vmatpush2.bf16.msra.mxu0 0
        %2191 = vmatprep.subr.bf16.mxu0 0
        %2192 = vmatpush2.bf16.msra.mxu0 0
        %2193 = vmatprep.subr.bf16.mxu0 0
        %2194 = vmatpush2.bf16.msra.mxu0 0
        %2195 = vmatprep.subr.bf16.mxu0 0
        %2196 = vmatpush2.bf16.msra.mxu0 0
        %2197 = vmatprep.mubr.bf16.mxu0 0
        %2198 = vmatmul.mubr.bf16.gmra.mxu0 %v2118
        %v2199 = vpop.f32.mrf.mxu0
        %v2200 = vadd.f32 0.0, %v2199
        %v2201 = vpop.f32.mrf.mxu0
        %v2202 = vpop.f32.mrf.mxu0
        %v2203 = vadd.f32 0.0, %v2202
        %v2204 = vpop.f32.mrf.mxu0
        %2205 = vmatprep.mubr.bf16.mxu0 0
        %2206 = vmatmul.mubr.bf16.gmra.mxu0 %v2121
        %v2207 = vpop.f32.mrf.mxu0
        %v2208 = vadd.f32 0.0, %v2207
        %v2209 = vpop.f32.mrf.mxu0
        %v2210 = vpop.f32.mrf.mxu0
        %v2211 = vadd.f32 0.0, %v2210
        %v2212 = vpop.f32.mrf.mxu0
        %2213 = vmatprep.mubr.bf16.mxu0 0
        %2214 = vmatmul.mubr.bf16.gmra.mxu0 %v2124
        %v2215 = vpop.f32.mrf.mxu0
        %v2216 = vadd.f32 0.0, %v2215
        %v2217 = vpop.f32.mrf.mxu0
        %v2218 = vpop.f32.mrf.mxu0
        %v2219 = vadd.f32 0.0, %v2218
        %v2220 = vpop.f32.mrf.mxu0
        %2221 = vmatprep.mubr.bf16.mxu0 0
        %2222 = vmatmul.mubr.bf16.gmra.mxu0 %v2127
        %v2223 = vpop.f32.mrf.mxu0
        %v2224 = vadd.f32 0.0, %v2223
        %v2225 = vpop.f32.mrf.mxu0
        %v2226 = vpop.f32.mrf.mxu0
        %v2227 = vadd.f32 0.0, %v2226
        %v2228 = vpop.f32.mrf.mxu0
        %2229 = vmatprep.mubr.bf16.mxu0 0
        %2230 = vmatmul.mubr.bf16.gmra.mxu0 %v2130
        %v2231 = vpop.f32.mrf.mxu0
        %v2232 = vadd.f32 0.0, %v2231
        %v2233 = vpop.f32.mrf.mxu0
        %v2234 = vpop.f32.mrf.mxu0
        %v2235 = vadd.f32 0.0, %v2234
        %v2236 = vpop.f32.mrf.mxu0
        %2237 = vmatprep.mubr.bf16.mxu0 0
        %2238 = vmatmul.mubr.bf16.gmra.mxu0 %v2133
        %v2239 = vpop.f32.mrf.mxu0
        %v2240 = vadd.f32 0.0, %v2239
        %v2241 = vpop.f32.mrf.mxu0
        %v2242 = vpop.f32.mrf.mxu0
        %v2243 = vadd.f32 0.0, %v2242
        %v2244 = vpop.f32.mrf.mxu0
        %2245 = vmatprep.mubr.bf16.mxu0 0
        %2246 = vmatmul.mubr.bf16.gmra.mxu0 %v2136
        %v2247 = vpop.f32.mrf.mxu0
        %v2248 = vadd.f32 0.0, %v2247
        %v2249 = vpop.f32.mrf.mxu0
        %v2250 = vpop.f32.mrf.mxu0
        %v2251 = vadd.f32 0.0, %v2250
        %v2252 = vpop.f32.mrf.mxu0
        %2253 = vmatprep.mubr.bf16.mxu0 0
        %2254 = vmatmul.mubr.bf16.gmra.mxu0 %v2139
        %v2255 = vpop.f32.mrf.mxu0
        %v2256 = vadd.f32 0.0, %v2255
        %v2257 = vpop.f32.mrf.mxu0
        %v2258 = vpop.f32.mrf.mxu0
        %v2259 = vadd.f32 0.0, %v2258
        %v2260 = vpop.f32.mrf.mxu0
        %2261 = vmatprep.mubr.bf16.mxu0 0
        %2262 = vmatmul.mubr.bf16.gmra.mxu0 %v2142
        %v2263 = vpop.f32.mrf.mxu0
        %v2264 = vadd.f32 0.0, %v2263
        %v2265 = vpop.f32.mrf.mxu0
        %v2266 = vpop.f32.mrf.mxu0
        %v2267 = vadd.f32 0.0, %v2266
        %v2268 = vpop.f32.mrf.mxu0
        %2269 = vmatprep.mubr.bf16.mxu0 0
        %2270 = vmatmul.mubr.bf16.gmra.mxu0 %v2145
        %v2271 = vpop.f32.mrf.mxu0
        %v2272 = vadd.f32 0.0, %v2271
        %v2273 = vpop.f32.mrf.mxu0
        %v2274 = vpop.f32.mrf.mxu0
        %v2275 = vadd.f32 0.0, %v2274
        %v2276 = vpop.f32.mrf.mxu0
        %2277 = vmatprep.mubr.bf16.mxu0 0
        %2278 = vmatmul.mubr.bf16.gmra.mxu0 %v2148
        %v2279 = vpop.f32.mrf.mxu0
        %v2280 = vadd.f32 0.0, %v2279
        %v2281 = vpop.f32.mrf.mxu0
        %v2282 = vpop.f32.mrf.mxu0
        %v2283 = vadd.f32 0.0, %v2282
        %v2284 = vpop.f32.mrf.mxu0
        %2285 = vmatprep.mubr.bf16.mxu0 0
        %2286 = vmatmul.mubr.bf16.gmra.mxu0 %v2151
        %v2287 = vpop.f32.mrf.mxu0
        %v2288 = vadd.f32 0.0, %v2287
        %v2289 = vpop.f32.mrf.mxu0
        %v2290 = vpop.f32.mrf.mxu0
        %v2291 = vadd.f32 0.0, %v2290
        %v2292 = vpop.f32.mrf.mxu0
        %2293 = vmatprep.mubr.bf16.mxu0 0
        %2294 = vmatmul.mubr.bf16.gmra.mxu0 %v2154
        %v2295 = vpop.f32.mrf.mxu0
        %v2296 = vadd.f32 0.0, %v2295
        %v2297 = vpop.f32.mrf.mxu0
        %v2298 = vpop.f32.mrf.mxu0
        %v2299 = vadd.f32 0.0, %v2298
        %v2300 = vpop.f32.mrf.mxu0
        %2301 = vmatprep.mubr.bf16.mxu0 0
        %2302 = vmatmul.mubr.bf16.gmra.mxu0 %v2157
        %v2303 = vpop.f32.mrf.mxu0
        %v2304 = vadd.f32 0.0, %v2303
        %v2305 = vpop.f32.mrf.mxu0
        %v2306 = vpop.f32.mrf.mxu0
        %v2307 = vadd.f32 0.0, %v2306
        %v2308 = vpop.f32.mrf.mxu0
        %2309 = vmatprep.mubr.bf16.mxu0 0
        %2310 = vmatmul.mubr.bf16.gmra.mxu0 %v2160
        %v2311 = vpop.f32.mrf.mxu0
        %v2312 = vadd.f32 0.0, %v2311
        %v2313 = vpop.f32.mrf.mxu0
        %v2314 = vpop.f32.mrf.mxu0
        %v2315 = vadd.f32 0.0, %v2314
        %v2316 = vpop.f32.mrf.mxu0
        %2317 = vmatprep.mubr.bf16.mxu0 0
        %2318 = vmatmul.mubr.bf16.gmra.mxu0 %v2163
        %v2319 = vpop.f32.mrf.mxu0
        %v2320 = vadd.f32 0.0, %v2319
        %v2321 = vpop.f32.mrf.mxu0
        %v2322 = vpop.f32.mrf.mxu0
        %v2323 = vadd.f32 0.0, %v2322
        %v2324 = vpop.f32.mrf.mxu0
        %2325 = vdwg.mxu0
        %v2326 = vadd.f32 %v1940, %v2200
        %v2327 = vadd.f32 %v1941, %v2203
        %v2328 = vadd.f32 %v1942, %v2208
        %v2329 = vadd.f32 %v1943, %v2211
        %v2330 = vadd.f32 %v1944, %v2216
        %v2331 = vadd.f32 %v1945, %v2219
        %v2332 = vadd.f32 %v1946, %v2224
        %v2333 = vadd.f32 %v1947, %v2227
        %v2334 = vadd.f32 %v1948, %v2232
        %v2335 = vadd.f32 %v1949, %v2235
        %v2336 = vadd.f32 %v1950, %v2240
        %v2337 = vadd.f32 %v1951, %v2243
        %v2338 = vadd.f32 %v1952, %v2248
        %v2339 = vadd.f32 %v1953, %v2251
        %v2340 = vadd.f32 %v1954, %v2256
        %v2341 = vadd.f32 %v1955, %v2259
        %v2342 = vadd.f32 %v1956, %v2264
        %v2343 = vadd.f32 %v1957, %v2267
        %v2344 = vadd.f32 %v1958, %v2272
        %v2345 = vadd.f32 %v1959, %v2275
        %v2346 = vadd.f32 %v1960, %v2280
        %v2347 = vadd.f32 %v1961, %v2283
        %v2348 = vadd.f32 %v1962, %v2288
        %v2349 = vadd.f32 %v1963, %v2291
        %v2350 = vadd.f32 %v1964, %v2296
        %v2351 = vadd.f32 %v1965, %v2299
        %v2352 = vadd.f32 %v1966, %v2304
        %v2353 = vadd.f32 %v1967, %v2307
        %v2354 = vadd.f32 %v1968, %v2312
        %v2355 = vadd.f32 %v1969, %v2315
        %v2356 = vadd.f32 %v1970, %v2320
        %v2357 = vadd.f32 %v1971, %v2323
        %s2358 = scalar_lea.vmem %s1, 128
        %v2359 = vld [vmem:[%s2358] sm:$0xf]
        %v2360 = vld [vmem:[%s2358 + $0x4] sm:$0xf]
        %v2361 = vld [vmem:[%s2358 + $0x8] sm:$0xf]
        %v2362 = vld [vmem:[%s2358 + $0xc] sm:$0xf]
        %v2363 = vld [vmem:[%s2358 + $0x10] sm:$0xf]
        %v2364 = vld [vmem:[%s2358 + $0x14] sm:$0xf]
        %v2365 = vld [vmem:[%s2358 + $0x18] sm:$0xf]
        %v2366 = vld [vmem:[%s2358 + $0x1c] sm:$0xf]
        %v2367 = vld [vmem:[%s170] sm:$0xe]
        %v2368 = vld [vmem:[%s170 + $0xc] sm:$0xe]
        %v2369 = vld [vmem:[%s170 + $0x18] sm:$0xe]
        %v2370 = vld [vmem:[%s170 + $0x24] sm:$0xe]
        %v2371 = vld [vmem:[%s170 + $0x30] sm:$0xe]
        %v2372 = vld [vmem:[%s170 + $0x3c] sm:$0xe]
        %v2373 = vld [vmem:[%s170 + $0x48] sm:$0xe]
        %v2374 = vld [vmem:[%s170 + $0x54] sm:$0xe]
        %v2375 = vld [vmem:[%s170 + $0x60] sm:$0xe]
        %v2376 = vld [vmem:[%s170 + $0x6c] sm:$0xe]
        %v2377 = vld [vmem:[%s170 + $0x78] sm:$0xe]
        %v2378 = vld [vmem:[%s170 + $0x84] sm:$0xe]
        %v2379 = vld [vmem:[%s170 + $0x90] sm:$0xe]
        %v2380 = vld [vmem:[%s170 + $0x9c] sm:$0xe]
        %v2381 = vld [vmem:[%s170 + $0xa8] sm:$0xe]
        %v2382 = vld [vmem:[%s170 + $0xb4] sm:$0xe]
        %vm2415 = vcmask 1042432
        %vm2416 = vcmask 1046532
        %vm2417 = vmor %vm2415, %vm2416
        %v2418 = vrot.slane %v2367, 5
        %v2419 = vrot.slane %v2418, 4
        %v2420 = vrot.slane %v172, 5
        %v2421 = vsel %vm2417, %v2419, %v2420
        %v2422 = vrot.slane %v2420, 4
        %v2423 = vrot.slane %v173, 5
        %v2424 = vsel %vm2417, %v2422, %v2423
        %v2425 = vrot.slane %v2368, 5
        %v2426 = vrot.slane %v2425, 4
        %v2427 = vrot.slane %v175, 5
        %v2428 = vsel %vm2417, %v2426, %v2427
        %v2429 = vrot.slane %v2427, 4
        %v2430 = vrot.slane %v176, 5
        %v2431 = vsel %vm2417, %v2429, %v2430
        %v2432 = vrot.slane %v2369, 5
        %v2433 = vrot.slane %v2432, 4
        %v2434 = vrot.slane %v178, 5
        %v2435 = vsel %vm2417, %v2433, %v2434
        %v2436 = vrot.slane %v2434, 4
        %v2437 = vrot.slane %v179, 5
        %v2438 = vsel %vm2417, %v2436, %v2437
        %v2439 = vrot.slane %v2370, 5
        %v2440 = vrot.slane %v2439, 4
        %v2441 = vrot.slane %v181, 5
        %v2442 = vsel %vm2417, %v2440, %v2441
        %v2443 = vrot.slane %v2441, 4
        %v2444 = vrot.slane %v182, 5
        %v2445 = vsel %vm2417, %v2443, %v2444
        %v2446 = vrot.slane %v2371, 5
        %v2447 = vrot.slane %v2446, 4
        %v2448 = vrot.slane %v184, 5
        %v2449 = vsel %vm2417, %v2447, %v2448
        %v2450 = vrot.slane %v2448, 4
        %v2451 = vrot.slane %v185, 5
        %v2452 = vsel %vm2417, %v2450, %v2451
        %v2453 = vrot.slane %v2372, 5
        %v2454 = vrot.slane %v2453, 4
        %v2455 = vrot.slane %v187, 5
        %v2456 = vsel %vm2417, %v2454, %v2455
        %v2457 = vrot.slane %v2455, 4
        %v2458 = vrot.slane %v188, 5
        %v2459 = vsel %vm2417, %v2457, %v2458
        %v2460 = vrot.slane %v2373, 5
        %v2461 = vrot.slane %v2460, 4
        %v2462 = vrot.slane %v190, 5
        %v2463 = vsel %vm2417, %v2461, %v2462
        %v2464 = vrot.slane %v2462, 4
        %v2465 = vrot.slane %v191, 5
        %v2466 = vsel %vm2417, %v2464, %v2465
        %v2467 = vrot.slane %v2374, 5
        %v2468 = vrot.slane %v2467, 4
        %v2469 = vrot.slane %v193, 5
        %v2470 = vsel %vm2417, %v2468, %v2469
        %v2471 = vrot.slane %v2469, 4
        %v2472 = vrot.slane %v194, 5
        %v2473 = vsel %vm2417, %v2471, %v2472
        %v2474 = vrot.slane %v2375, 5
        %v2475 = vrot.slane %v2474, 4
        %v2476 = vrot.slane %v196, 5
        %v2477 = vsel %vm2417, %v2475, %v2476
        %v2478 = vrot.slane %v2476, 4
        %v2479 = vrot.slane %v197, 5
        %v2480 = vsel %vm2417, %v2478, %v2479
        %v2481 = vrot.slane %v2376, 5
        %v2482 = vrot.slane %v2481, 4
        %v2483 = vrot.slane %v199, 5
        %v2484 = vsel %vm2417, %v2482, %v2483
        %v2485 = vrot.slane %v2483, 4
        %v2486 = vrot.slane %v200, 5
        %v2487 = vsel %vm2417, %v2485, %v2486
        %v2488 = vrot.slane %v2377, 5
        %v2489 = vrot.slane %v2488, 4
        %v2490 = vrot.slane %v202, 5
        %v2491 = vsel %vm2417, %v2489, %v2490
        %v2492 = vrot.slane %v2490, 4
        %v2493 = vrot.slane %v203, 5
        %v2494 = vsel %vm2417, %v2492, %v2493
        %v2495 = vrot.slane %v2378, 5
        %v2496 = vrot.slane %v2495, 4
        %v2497 = vrot.slane %v205, 5
        %v2498 = vsel %vm2417, %v2496, %v2497
        %v2499 = vrot.slane %v2497, 4
        %v2500 = vrot.slane %v206, 5
        %v2501 = vsel %vm2417, %v2499, %v2500
        %v2502 = vrot.slane %v2379, 5
        %v2503 = vrot.slane %v2502, 4
        %v2504 = vrot.slane %v208, 5
        %v2505 = vsel %vm2417, %v2503, %v2504
        %v2506 = vrot.slane %v2504, 4
        %v2507 = vrot.slane %v209, 5
        %v2508 = vsel %vm2417, %v2506, %v2507
        %v2509 = vrot.slane %v2380, 5
        %v2510 = vrot.slane %v2509, 4
        %v2511 = vrot.slane %v211, 5
        %v2512 = vsel %vm2417, %v2510, %v2511
        %v2513 = vrot.slane %v2511, 4
        %v2514 = vrot.slane %v212, 5
        %v2515 = vsel %vm2417, %v2513, %v2514
        %v2516 = vrot.slane %v2381, 5
        %v2517 = vrot.slane %v2516, 4
        %v2518 = vrot.slane %v214, 5
        %v2519 = vsel %vm2417, %v2517, %v2518
        %v2520 = vrot.slane %v2518, 4
        %v2521 = vrot.slane %v215, 5
        %v2522 = vsel %vm2417, %v2520, %v2521
        %v2523 = vrot.slane %v2382, 5
        %v2524 = vrot.slane %v2523, 4
        %v2525 = vrot.slane %v217, 5
        %v2526 = vsel %vm2417, %v2524, %v2525
        %v2527 = vrot.slane %v2525, 4
        %v2528 = vrot.slane %v218, 5
        %v2529 = vsel %vm2417, %v2527, %v2528
        %s2530 = scalar_lea.vmem %s1, 160
        %v2531 = vld [vmem:[%s2530] sm:$0xf]
        %v2532 = vld [vmem:[%s2530 + $0x4] sm:$0xf]
        %v2533 = vld [vmem:[%s2530 + $0x8] sm:$0xf]
        %v2534 = vld [vmem:[%s2530 + $0xc] sm:$0xf]
        %v2535 = vld [vmem:[%s2530 + $0x10] sm:$0xf]
        %v2536 = vld [vmem:[%s2530 + $0x14] sm:$0xf]
        %v2537 = vld [vmem:[%s2530 + $0x18] sm:$0xf]
        %v2538 = vld [vmem:[%s2530 + $0x1c] sm:$0xf]
        %v2539 = vunpack.c.l.b16 %v2421
        %v2540 = vunpack.c.l.b16 %v2424
        %v2541 = vunpack.c.l.b16 %v2428
        %v2542 = vunpack.c.l.b16 %v2431
        %v2543 = vunpack.c.l.b16 %v2435
        %v2544 = vunpack.c.l.b16 %v2438
        %v2545 = vunpack.c.l.b16 %v2442
        %v2546 = vunpack.c.l.b16 %v2445
        %v2547 = vunpack.c.l.b16 %v2449
        %v2548 = vunpack.c.l.b16 %v2452
        %v2549 = vunpack.c.l.b16 %v2456
        %v2550 = vunpack.c.l.b16 %v2459
        %v2551 = vunpack.c.l.b16 %v2463
        %v2552 = vunpack.c.l.b16 %v2466
        %v2553 = vunpack.c.l.b16 %v2470
        %v2554 = vunpack.c.l.b16 %v2473
        %v2555 = vunpack.c.l.b16 %v2477
        %v2556 = vunpack.c.l.b16 %v2480
        %v2557 = vunpack.c.l.b16 %v2484
        %v2558 = vunpack.c.l.b16 %v2487
        %v2559 = vunpack.c.l.b16 %v2491
        %v2560 = vunpack.c.l.b16 %v2494
        %v2561 = vunpack.c.l.b16 %v2498
        %v2562 = vunpack.c.l.b16 %v2501
        %v2563 = vunpack.c.l.b16 %v2505
        %v2564 = vunpack.c.l.b16 %v2508
        %v2565 = vunpack.c.l.b16 %v2512
        %v2566 = vunpack.c.l.b16 %v2515
        %v2567 = vunpack.c.l.b16 %v2519
        %v2568 = vunpack.c.l.b16 %v2522
        %v2569 = vunpack.c.l.b16 %v2526
        %v2570 = vunpack.c.l.b16 %v2529
        %v2571 = vpack.c.b16 %v2540, %v2539
        %v2572 = vpack.c.b16 %v2542, %v2541
        %v2573 = vpack.c.b16 %v2544, %v2543
        %v2574 = vpack.c.b16 %v2546, %v2545
        %v2575 = vpack.c.b16 %v2548, %v2547
        %v2576 = vpack.c.b16 %v2550, %v2549
        %v2577 = vpack.c.b16 %v2552, %v2551
        %v2578 = vpack.c.b16 %v2554, %v2553
        %v2579 = vpack.c.b16 %v2556, %v2555
        %v2580 = vpack.c.b16 %v2558, %v2557
        %v2581 = vpack.c.b16 %v2560, %v2559
        %v2582 = vpack.c.b16 %v2562, %v2561
        %v2583 = vpack.c.b16 %v2564, %v2563
        %v2584 = vpack.c.b16 %v2566, %v2565
        %v2585 = vpack.c.b16 %v2568, %v2567
        %v2586 = vpack.c.b16 %v2570, %v2569
        %v2595 = vunpack.c.l.b16 %v2531
        %v2596 = vunpack.c.l.b16 %v2532
        %v2597 = vunpack.c.l.b16 %v2533
        %v2598 = vunpack.c.l.b16 %v2534
        %v2599 = vunpack.c.l.b16 %v2535
        %v2600 = vunpack.c.l.b16 %v2536
        %v2601 = vunpack.c.l.b16 %v2537
        %v2602 = vunpack.c.l.b16 %v2538
        %v2603 = vpack.c.b16 %v2596, %v2595
        %v2604 = vpack.c.b16 %v2598, %v2597
        %v2605 = vpack.c.b16 %v2600, %v2599
        %v2606 = vpack.c.b16 %v2602, %v2601
        %v2612 = vsel %vm727, %v2571, 0
        %v2615 = vsel %vm727, %v2572, 0
        %v2618 = vsel %vm727, %v2573, 0
        %v2621 = vsel %vm727, %v2574, 0
        %v2624 = vsel %vm727, %v2575, 0
        %v2627 = vsel %vm727, %v2576, 0
        %v2630 = vsel %vm727, %v2577, 0
        %v2633 = vsel %vm727, %v2578, 0
        %v2636 = vsel %vm727, %v2579, 0
        %v2639 = vsel %vm727, %v2580, 0
        %v2642 = vsel %vm727, %v2581, 0
        %v2645 = vsel %vm727, %v2582, 0
        %v2648 = vsel %vm727, %v2583, 0
        %v2651 = vsel %vm727, %v2584, 0
        %v2654 = vsel %vm727, %v2585, 0
        %v2657 = vsel %vm727, %v2586, 0
        %2659 = vmatprep.subr.bf16.mxu0 0
        %2660 = vmatpush1.bf16.msra.mxu0 0
        %2661 = vmatprep.subr.bf16.mxu0 0
        %2662 = vmatpush1.bf16.msra.mxu0 0
        %2663 = vmatprep.subr.bf16.mxu0 0
        %2664 = vmatpush1.bf16.msra.mxu0 0
        %2665 = vmatprep.subr.bf16.mxu0 0
        %2666 = vmatpush1.bf16.msra.mxu0 0
        %2667 = vmatprep.subr.bf16.mxu0 0
        %2668 = vmatpush1.bf16.msra.mxu0 %v2606
        %2669 = vmatprep.subr.bf16.mxu0 0
        %2670 = vmatpush1.bf16.msra.mxu0 %v2605
        %2671 = vmatprep.subr.bf16.mxu0 0
        %2672 = vmatpush1.bf16.msra.mxu0 %v2604
        %2673 = vmatprep.subr.bf16.mxu0 0
        %2674 = vmatpush1.bf16.msra.mxu0 %v2603
        %2675 = vmatprep.subr.bf16.mxu0 0
        %2676 = vmatpush2.bf16.msra.mxu0 0
        %2677 = vmatprep.subr.bf16.mxu0 0
        %2678 = vmatpush2.bf16.msra.mxu0 0
        %2679 = vmatprep.subr.bf16.mxu0 0
        %2680 = vmatpush2.bf16.msra.mxu0 0
        %2681 = vmatprep.subr.bf16.mxu0 0
        %2682 = vmatpush2.bf16.msra.mxu0 0
        %2683 = vmatprep.subr.bf16.mxu0 0
        %2684 = vmatpush2.bf16.msra.mxu0 0
        %2685 = vmatprep.subr.bf16.mxu0 0
        %2686 = vmatpush2.bf16.msra.mxu0 0
        %2687 = vmatprep.subr.bf16.mxu0 0
        %2688 = vmatpush2.bf16.msra.mxu0 0
        %2689 = vmatprep.subr.bf16.mxu0 0
        %2690 = vmatpush2.bf16.msra.mxu0 0
        %2691 = vmatprep.mubr.bf16.mxu0 0
        %2692 = vmatmul.mubr.bf16.gmra.mxu0 %v2612
        %v2693 = vpop.f32.mrf.mxu0
        %v2694 = vadd.f32 0.0, %v2693
        %v2695 = vpop.f32.mrf.mxu0
        %v2696 = vpop.f32.mrf.mxu0
        %v2697 = vadd.f32 0.0, %v2696
        %v2698 = vpop.f32.mrf.mxu0
        %2699 = vmatprep.mubr.bf16.mxu0 0
        %2700 = vmatmul.mubr.bf16.gmra.mxu0 %v2615
        %v2701 = vpop.f32.mrf.mxu0
        %v2702 = vadd.f32 0.0, %v2701
        %v2703 = vpop.f32.mrf.mxu0
        %v2704 = vpop.f32.mrf.mxu0
        %v2705 = vadd.f32 0.0, %v2704
        %v2706 = vpop.f32.mrf.mxu0
        %2707 = vmatprep.mubr.bf16.mxu0 0
        %2708 = vmatmul.mubr.bf16.gmra.mxu0 %v2618
        %v2709 = vpop.f32.mrf.mxu0
        %v2710 = vadd.f32 0.0, %v2709
        %v2711 = vpop.f32.mrf.mxu0
        %v2712 = vpop.f32.mrf.mxu0
        %v2713 = vadd.f32 0.0, %v2712
        %v2714 = vpop.f32.mrf.mxu0
        %2715 = vmatprep.mubr.bf16.mxu0 0
        %2716 = vmatmul.mubr.bf16.gmra.mxu0 %v2621
        %v2717 = vpop.f32.mrf.mxu0
        %v2718 = vadd.f32 0.0, %v2717
        %v2719 = vpop.f32.mrf.mxu0
        %v2720 = vpop.f32.mrf.mxu0
        %v2721 = vadd.f32 0.0, %v2720
        %v2722 = vpop.f32.mrf.mxu0
        %2723 = vmatprep.mubr.bf16.mxu0 0
        %2724 = vmatmul.mubr.bf16.gmra.mxu0 %v2624
        %v2725 = vpop.f32.mrf.mxu0
        %v2726 = vadd.f32 0.0, %v2725
        %v2727 = vpop.f32.mrf.mxu0
        %v2728 = vpop.f32.mrf.mxu0
        %v2729 = vadd.f32 0.0, %v2728
        %v2730 = vpop.f32.mrf.mxu0
        %2731 = vmatprep.mubr.bf16.mxu0 0
        %2732 = vmatmul.mubr.bf16.gmra.mxu0 %v2627
        %v2733 = vpop.f32.mrf.mxu0
        %v2734 = vadd.f32 0.0, %v2733
        %v2735 = vpop.f32.mrf.mxu0
        %v2736 = vpop.f32.mrf.mxu0
        %v2737 = vadd.f32 0.0, %v2736
        %v2738 = vpop.f32.mrf.mxu0
        %2739 = vmatprep.mubr.bf16.mxu0 0
        %2740 = vmatmul.mubr.bf16.gmra.mxu0 %v2630
        %v2741 = vpop.f32.mrf.mxu0
        %v2742 = vadd.f32 0.0, %v2741
        %v2743 = vpop.f32.mrf.mxu0
        %v2744 = vpop.f32.mrf.mxu0
        %v2745 = vadd.f32 0.0, %v2744
        %v2746 = vpop.f32.mrf.mxu0
        %2747 = vmatprep.mubr.bf16.mxu0 0
        %2748 = vmatmul.mubr.bf16.gmra.mxu0 %v2633
        %v2749 = vpop.f32.mrf.mxu0
        %v2750 = vadd.f32 0.0, %v2749
        %v2751 = vpop.f32.mrf.mxu0
        %v2752 = vpop.f32.mrf.mxu0
        %v2753 = vadd.f32 0.0, %v2752
        %v2754 = vpop.f32.mrf.mxu0
        %2755 = vmatprep.mubr.bf16.mxu0 0
        %2756 = vmatmul.mubr.bf16.gmra.mxu0 %v2636
        %v2757 = vpop.f32.mrf.mxu0
        %v2758 = vadd.f32 0.0, %v2757
        %v2759 = vpop.f32.mrf.mxu0
        %v2760 = vpop.f32.mrf.mxu0
        %v2761 = vadd.f32 0.0, %v2760
        %v2762 = vpop.f32.mrf.mxu0
        %2763 = vmatprep.mubr.bf16.mxu0 0
        %2764 = vmatmul.mubr.bf16.gmra.mxu0 %v2639
        %v2765 = vpop.f32.mrf.mxu0
        %v2766 = vadd.f32 0.0, %v2765
        %v2767 = vpop.f32.mrf.mxu0
        %v2768 = vpop.f32.mrf.mxu0
        %v2769 = vadd.f32 0.0, %v2768
        %v2770 = vpop.f32.mrf.mxu0
        %2771 = vmatprep.mubr.bf16.mxu0 0
        %2772 = vmatmul.mubr.bf16.gmra.mxu0 %v2642
        %v2773 = vpop.f32.mrf.mxu0
        %v2774 = vadd.f32 0.0, %v2773
        %v2775 = vpop.f32.mrf.mxu0
        %v2776 = vpop.f32.mrf.mxu0
        %v2777 = vadd.f32 0.0, %v2776
        %v2778 = vpop.f32.mrf.mxu0
        %2779 = vmatprep.mubr.bf16.mxu0 0
        %2780 = vmatmul.mubr.bf16.gmra.mxu0 %v2645
        %v2781 = vpop.f32.mrf.mxu0
        %v2782 = vadd.f32 0.0, %v2781
        %v2783 = vpop.f32.mrf.mxu0
        %v2784 = vpop.f32.mrf.mxu0
        %v2785 = vadd.f32 0.0, %v2784
        %v2786 = vpop.f32.mrf.mxu0
        %2787 = vmatprep.mubr.bf16.mxu0 0
        %2788 = vmatmul.mubr.bf16.gmra.mxu0 %v2648
        %v2789 = vpop.f32.mrf.mxu0
        %v2790 = vadd.f32 0.0, %v2789
        %v2791 = vpop.f32.mrf.mxu0
        %v2792 = vpop.f32.mrf.mxu0
        %v2793 = vadd.f32 0.0, %v2792
        %v2794 = vpop.f32.mrf.mxu0
        %2795 = vmatprep.mubr.bf16.mxu0 0
        %2796 = vmatmul.mubr.bf16.gmra.mxu0 %v2651
        %v2797 = vpop.f32.mrf.mxu0
        %v2798 = vadd.f32 0.0, %v2797
        %v2799 = vpop.f32.mrf.mxu0
        %v2800 = vpop.f32.mrf.mxu0
        %v2801 = vadd.f32 0.0, %v2800
        %v2802 = vpop.f32.mrf.mxu0
        %2803 = vmatprep.mubr.bf16.mxu0 0
        %2804 = vmatmul.mubr.bf16.gmra.mxu0 %v2654
        %v2805 = vpop.f32.mrf.mxu0
        %v2806 = vadd.f32 0.0, %v2805
        %v2807 = vpop.f32.mrf.mxu0
        %v2808 = vpop.f32.mrf.mxu0
        %v2809 = vadd.f32 0.0, %v2808
        %v2810 = vpop.f32.mrf.mxu0
        %2811 = vmatprep.mubr.bf16.mxu0 0
        %2812 = vmatmul.mubr.bf16.gmra.mxu0 %v2657
        %v2813 = vpop.f32.mrf.mxu0
        %v2814 = vadd.f32 0.0, %v2813
        %v2815 = vpop.f32.mrf.mxu0
        %v2816 = vpop.f32.mrf.mxu0
        %v2817 = vadd.f32 0.0, %v2816
        %v2818 = vpop.f32.mrf.mxu0
        %2819 = vdwg.mxu0
        %v2828 = vunpack.c.l.b16 %v2359
        %v2829 = vunpack.c.l.b16 %v2360
        %v2830 = vunpack.c.l.b16 %v2361
        %v2831 = vunpack.c.l.b16 %v2362
        %v2832 = vunpack.c.l.b16 %v2363
        %v2833 = vunpack.c.l.b16 %v2364
        %v2834 = vunpack.c.l.b16 %v2365
        %v2835 = vunpack.c.l.b16 %v2366
        %v2836 = vpack.c.b16 %v2829, %v2828
        %v2837 = vpack.c.b16 %v2831, %v2830
        %v2838 = vpack.c.b16 %v2833, %v2832
        %v2839 = vpack.c.b16 %v2835, %v2834
        %2844 = vmatprep.subr.bf16.mxu0 0
        %2845 = vmatpush1.bf16.msra.mxu0 0
        %2846 = vmatprep.subr.bf16.mxu0 0
        %2847 = vmatpush1.bf16.msra.mxu0 0
        %2848 = vmatprep.subr.bf16.mxu0 0
        %2849 = vmatpush1.bf16.msra.mxu0 0
        %2850 = vmatprep.subr.bf16.mxu0 0
        %2851 = vmatpush1.bf16.msra.mxu0 0
        %2852 = vmatprep.subr.bf16.mxu0 0
        %2853 = vmatpush1.bf16.msra.mxu0 %v2839
        %2854 = vmatprep.subr.bf16.mxu0 0
        %2855 = vmatpush1.bf16.msra.mxu0 %v2838
        %2856 = vmatprep.subr.bf16.mxu0 0
        %2857 = vmatpush1.bf16.msra.mxu0 %v2837
        %2858 = vmatprep.subr.bf16.mxu0 0
        %2859 = vmatpush1.bf16.msra.mxu0 %v2836
        %2860 = vmatprep.subr.bf16.mxu0 0
        %2861 = vmatpush2.bf16.msra.mxu0 0
        %2862 = vmatprep.subr.bf16.mxu0 0
        %2863 = vmatpush2.bf16.msra.mxu0 0
        %2864 = vmatprep.subr.bf16.mxu0 0
        %2865 = vmatpush2.bf16.msra.mxu0 0
        %2866 = vmatprep.subr.bf16.mxu0 0
        %2867 = vmatpush2.bf16.msra.mxu0 0
        %2868 = vmatprep.subr.bf16.mxu0 0
        %2869 = vmatpush2.bf16.msra.mxu0 0
        %2870 = vmatprep.subr.bf16.mxu0 0
        %2871 = vmatpush2.bf16.msra.mxu0 0
        %2872 = vmatprep.subr.bf16.mxu0 0
        %2873 = vmatpush2.bf16.msra.mxu0 0
        %2874 = vmatprep.subr.bf16.mxu0 0
        %2875 = vmatpush2.bf16.msra.mxu0 0
        %2876 = vmatprep.mubr.bf16.mxu0 0
        %2877 = vmatmul.mubr.bf16.gmra.mxu0 %v1010
        %v2878 = vpop.f32.mrf.mxu0
        %v2879 = vadd.f32 %v2694, %v2878
        %v2880 = vpop.f32.mrf.mxu0
        %v2881 = vpop.f32.mrf.mxu0
        %v2882 = vadd.f32 %v2697, %v2881
        %v2883 = vpop.f32.mrf.mxu0
        %2884 = vmatprep.mubr.bf16.mxu0 0
        %2885 = vmatmul.mubr.bf16.gmra.mxu0 %v1013
        %v2886 = vpop.f32.mrf.mxu0
        %v2887 = vadd.f32 %v2702, %v2886
        %v2888 = vpop.f32.mrf.mxu0
        %v2889 = vpop.f32.mrf.mxu0
        %v2890 = vadd.f32 %v2705, %v2889
        %v2891 = vpop.f32.mrf.mxu0
        %2892 = vmatprep.mubr.bf16.mxu0 0
        %2893 = vmatmul.mubr.bf16.gmra.mxu0 %v1016
        %v2894 = vpop.f32.mrf.mxu0
        %v2895 = vadd.f32 %v2710, %v2894
        %v2896 = vpop.f32.mrf.mxu0
        %v2897 = vpop.f32.mrf.mxu0
        %v2898 = vadd.f32 %v2713, %v2897
        %v2899 = vpop.f32.mrf.mxu0
        %2900 = vmatprep.mubr.bf16.mxu0 0
        %2901 = vmatmul.mubr.bf16.gmra.mxu0 %v1019
        %v2902 = vpop.f32.mrf.mxu0
        %v2903 = vadd.f32 %v2718, %v2902
        %v2904 = vpop.f32.mrf.mxu0
        %v2905 = vpop.f32.mrf.mxu0
        %v2906 = vadd.f32 %v2721, %v2905
        %v2907 = vpop.f32.mrf.mxu0
        %2908 = vmatprep.mubr.bf16.mxu0 0
        %2909 = vmatmul.mubr.bf16.gmra.mxu0 %v1022
        %v2910 = vpop.f32.mrf.mxu0
        %v2911 = vadd.f32 %v2726, %v2910
        %v2912 = vpop.f32.mrf.mxu0
        %v2913 = vpop.f32.mrf.mxu0
        %v2914 = vadd.f32 %v2729, %v2913
        %v2915 = vpop.f32.mrf.mxu0
        %2916 = vmatprep.mubr.bf16.mxu0 0
        %2917 = vmatmul.mubr.bf16.gmra.mxu0 %v1025
        %v2918 = vpop.f32.mrf.mxu0
        %v2919 = vadd.f32 %v2734, %v2918
        %v2920 = vpop.f32.mrf.mxu0
        %v2921 = vpop.f32.mrf.mxu0
        %v2922 = vadd.f32 %v2737, %v2921
        %v2923 = vpop.f32.mrf.mxu0
        %2924 = vmatprep.mubr.bf16.mxu0 0
        %2925 = vmatmul.mubr.bf16.gmra.mxu0 %v1028
        %v2926 = vpop.f32.mrf.mxu0
        %v2927 = vadd.f32 %v2742, %v2926
        %v2928 = vpop.f32.mrf.mxu0
        %v2929 = vpop.f32.mrf.mxu0
        %v2930 = vadd.f32 %v2745, %v2929
        %v2931 = vpop.f32.mrf.mxu0
        %2932 = vmatprep.mubr.bf16.mxu0 0
        %2933 = vmatmul.mubr.bf16.gmra.mxu0 %v1031
        %v2934 = vpop.f32.mrf.mxu0
        %v2935 = vadd.f32 %v2750, %v2934
        %v2936 = vpop.f32.mrf.mxu0
        %v2937 = vpop.f32.mrf.mxu0
        %v2938 = vadd.f32 %v2753, %v2937
        %v2939 = vpop.f32.mrf.mxu0
        %2940 = vmatprep.mubr.bf16.mxu0 0
        %2941 = vmatmul.mubr.bf16.gmra.mxu0 %v1034
        %v2942 = vpop.f32.mrf.mxu0
        %v2943 = vadd.f32 %v2758, %v2942
        %v2944 = vpop.f32.mrf.mxu0
        %v2945 = vpop.f32.mrf.mxu0
        %v2946 = vadd.f32 %v2761, %v2945
        %v2947 = vpop.f32.mrf.mxu0
        %2948 = vmatprep.mubr.bf16.mxu0 0
        %2949 = vmatmul.mubr.bf16.gmra.mxu0 %v1037
        %v2950 = vpop.f32.mrf.mxu0
        %v2951 = vadd.f32 %v2766, %v2950
        %v2952 = vpop.f32.mrf.mxu0
        %v2953 = vpop.f32.mrf.mxu0
        %v2954 = vadd.f32 %v2769, %v2953
        %v2955 = vpop.f32.mrf.mxu0
        %2956 = vmatprep.mubr.bf16.mxu0 0
        %2957 = vmatmul.mubr.bf16.gmra.mxu0 %v1040
        %v2958 = vpop.f32.mrf.mxu0
        %v2959 = vadd.f32 %v2774, %v2958
        %v2960 = vpop.f32.mrf.mxu0
        %v2961 = vpop.f32.mrf.mxu0
        %v2962 = vadd.f32 %v2777, %v2961
        %v2963 = vpop.f32.mrf.mxu0
        %2964 = vmatprep.mubr.bf16.mxu0 0
        %2965 = vmatmul.mubr.bf16.gmra.mxu0 %v1043
        %v2966 = vpop.f32.mrf.mxu0
        %v2967 = vadd.f32 %v2782, %v2966
        %v2968 = vpop.f32.mrf.mxu0
        %v2969 = vpop.f32.mrf.mxu0
        %v2970 = vadd.f32 %v2785, %v2969
        %v2971 = vpop.f32.mrf.mxu0
        %2972 = vmatprep.mubr.bf16.mxu0 0
        %2973 = vmatmul.mubr.bf16.gmra.mxu0 %v1046
        %v2974 = vpop.f32.mrf.mxu0
        %v2975 = vadd.f32 %v2790, %v2974
        %v2976 = vpop.f32.mrf.mxu0
        %v2977 = vpop.f32.mrf.mxu0
        %v2978 = vadd.f32 %v2793, %v2977
        %v2979 = vpop.f32.mrf.mxu0
        %2980 = vmatprep.mubr.bf16.mxu0 0
        %2981 = vmatmul.mubr.bf16.gmra.mxu0 %v1049
        %v2982 = vpop.f32.mrf.mxu0
        %v2983 = vadd.f32 %v2798, %v2982
        %v2984 = vpop.f32.mrf.mxu0
        %v2985 = vpop.f32.mrf.mxu0
        %v2986 = vadd.f32 %v2801, %v2985
        %v2987 = vpop.f32.mrf.mxu0
        %2988 = vmatprep.mubr.bf16.mxu0 0
        %2989 = vmatmul.mubr.bf16.gmra.mxu0 %v1052
        %v2990 = vpop.f32.mrf.mxu0
        %v2991 = vadd.f32 %v2806, %v2990
        %v2992 = vpop.f32.mrf.mxu0
        %v2993 = vpop.f32.mrf.mxu0
        %v2994 = vadd.f32 %v2809, %v2993
        %v2995 = vpop.f32.mrf.mxu0
        %2996 = vmatprep.mubr.bf16.mxu0 0
        %2997 = vmatmul.mubr.bf16.gmra.mxu0 %v1055
        %v2998 = vpop.f32.mrf.mxu0
        %v2999 = vadd.f32 %v2814, %v2998
        %v3000 = vpop.f32.mrf.mxu0
        %v3001 = vpop.f32.mrf.mxu0
        %v3002 = vadd.f32 %v2817, %v3001
        %v3003 = vpop.f32.mrf.mxu0
        %3004 = vdwg.mxu0
        %s3005 = scalar_lea.vmem %s1, 192
        %v3006 = vld [vmem:[%s3005] sm:$0xf]
        %v3007 = vld [vmem:[%s3005 + $0x4] sm:$0xf]
        %v3008 = vld [vmem:[%s3005 + $0x8] sm:$0xf]
        %v3009 = vld [vmem:[%s3005 + $0xc] sm:$0xf]
        %v3010 = vld [vmem:[%s3005 + $0x10] sm:$0xf]
        %v3011 = vld [vmem:[%s3005 + $0x14] sm:$0xf]
        %v3012 = vld [vmem:[%s3005 + $0x18] sm:$0xf]
        %v3013 = vld [vmem:[%s3005 + $0x1c] sm:$0xf]
        %v3022 = vunpack.c.l.b16 %v3006
        %v3023 = vunpack.c.l.b16 %v3007
        %v3024 = vunpack.c.l.b16 %v3008
        %v3025 = vunpack.c.l.b16 %v3009
        %v3026 = vunpack.c.l.b16 %v3010
        %v3027 = vunpack.c.l.b16 %v3011
        %v3028 = vunpack.c.l.b16 %v3012
        %v3029 = vunpack.c.l.b16 %v3013
        %v3030 = vpack.c.b16 %v3023, %v3022
        %v3031 = vpack.c.b16 %v3025, %v3024
        %v3032 = vpack.c.b16 %v3027, %v3026
        %v3033 = vpack.c.b16 %v3029, %v3028
        %3038 = vmatprep.subr.bf16.mxu0 0
        %3039 = vmatpush1.bf16.msra.mxu0 0
        %3040 = vmatprep.subr.bf16.mxu0 0
        %3041 = vmatpush1.bf16.msra.mxu0 0
        %3042 = vmatprep.subr.bf16.mxu0 0
        %3043 = vmatpush1.bf16.msra.mxu0 0
        %3044 = vmatprep.subr.bf16.mxu0 0
        %3045 = vmatpush1.bf16.msra.mxu0 0
        %3046 = vmatprep.subr.bf16.mxu0 0
        %3047 = vmatpush1.bf16.msra.mxu0 %v3033
        %3048 = vmatprep.subr.bf16.mxu0 0
        %3049 = vmatpush1.bf16.msra.mxu0 %v3032
        %3050 = vmatprep.subr.bf16.mxu0 0
        %3051 = vmatpush1.bf16.msra.mxu0 %v3031
        %3052 = vmatprep.subr.bf16.mxu0 0
        %3053 = vmatpush1.bf16.msra.mxu0 %v3030
        %3054 = vmatprep.subr.bf16.mxu0 0
        %3055 = vmatpush2.bf16.msra.mxu0 0
        %3056 = vmatprep.subr.bf16.mxu0 0
        %3057 = vmatpush2.bf16.msra.mxu0 0
        %3058 = vmatprep.subr.bf16.mxu0 0
        %3059 = vmatpush2.bf16.msra.mxu0 0
        %3060 = vmatprep.subr.bf16.mxu0 0
        %3061 = vmatpush2.bf16.msra.mxu0 0
        %3062 = vmatprep.subr.bf16.mxu0 0
        %3063 = vmatpush2.bf16.msra.mxu0 0
        %3064 = vmatprep.subr.bf16.mxu0 0
        %3065 = vmatpush2.bf16.msra.mxu0 0
        %3066 = vmatprep.subr.bf16.mxu0 0
        %3067 = vmatpush2.bf16.msra.mxu0 0
        %3068 = vmatprep.subr.bf16.mxu0 0
        %3069 = vmatpush2.bf16.msra.mxu0 0
        %3070 = vmatprep.mubr.bf16.mxu0 0
        %3071 = vmatmul.mubr.bf16.gmra.mxu0 %v1732
        %v3072 = vpop.f32.mrf.mxu0
        %v3073 = vadd.f32 0.0, %v3072
        %v3074 = vpop.f32.mrf.mxu0
        %v3075 = vpop.f32.mrf.mxu0
        %v3076 = vadd.f32 0.0, %v3075
        %v3077 = vpop.f32.mrf.mxu0
        %3078 = vmatprep.mubr.bf16.mxu0 0
        %3079 = vmatmul.mubr.bf16.gmra.mxu0 %v1735
        %v3080 = vpop.f32.mrf.mxu0
        %v3081 = vadd.f32 0.0, %v3080
        %v3082 = vpop.f32.mrf.mxu0
        %v3083 = vpop.f32.mrf.mxu0
        %v3084 = vadd.f32 0.0, %v3083
        %v3085 = vpop.f32.mrf.mxu0
        %3086 = vmatprep.mubr.bf16.mxu0 0
        %3087 = vmatmul.mubr.bf16.gmra.mxu0 %v1738
        %v3088 = vpop.f32.mrf.mxu0
        %v3089 = vadd.f32 0.0, %v3088
        %v3090 = vpop.f32.mrf.mxu0
        %v3091 = vpop.f32.mrf.mxu0
        %v3092 = vadd.f32 0.0, %v3091
        %v3093 = vpop.f32.mrf.mxu0
        %3094 = vmatprep.mubr.bf16.mxu0 0
        %3095 = vmatmul.mubr.bf16.gmra.mxu0 %v1741
        %v3096 = vpop.f32.mrf.mxu0
        %v3097 = vadd.f32 0.0, %v3096
        %v3098 = vpop.f32.mrf.mxu0
        %v3099 = vpop.f32.mrf.mxu0
        %v3100 = vadd.f32 0.0, %v3099
        %v3101 = vpop.f32.mrf.mxu0
        %3102 = vmatprep.mubr.bf16.mxu0 0
        %3103 = vmatmul.mubr.bf16.gmra.mxu0 %v1744
        %v3104 = vpop.f32.mrf.mxu0
        %v3105 = vadd.f32 0.0, %v3104
        %v3106 = vpop.f32.mrf.mxu0
        %v3107 = vpop.f32.mrf.mxu0
        %v3108 = vadd.f32 0.0, %v3107
        %v3109 = vpop.f32.mrf.mxu0
        %3110 = vmatprep.mubr.bf16.mxu0 0
        %3111 = vmatmul.mubr.bf16.gmra.mxu0 %v1747
        %v3112 = vpop.f32.mrf.mxu0
        %v3113 = vadd.f32 0.0, %v3112
        %v3114 = vpop.f32.mrf.mxu0
        %v3115 = vpop.f32.mrf.mxu0
        %v3116 = vadd.f32 0.0, %v3115
        %v3117 = vpop.f32.mrf.mxu0
        %3118 = vmatprep.mubr.bf16.mxu0 0
        %3119 = vmatmul.mubr.bf16.gmra.mxu0 %v1750
        %v3120 = vpop.f32.mrf.mxu0
        %v3121 = vadd.f32 0.0, %v3120
        %v3122 = vpop.f32.mrf.mxu0
        %v3123 = vpop.f32.mrf.mxu0
        %v3124 = vadd.f32 0.0, %v3123
        %v3125 = vpop.f32.mrf.mxu0
        %3126 = vmatprep.mubr.bf16.mxu0 0
        %3127 = vmatmul.mubr.bf16.gmra.mxu0 %v1753
        %v3128 = vpop.f32.mrf.mxu0
        %v3129 = vadd.f32 0.0, %v3128
        %v3130 = vpop.f32.mrf.mxu0
        %v3131 = vpop.f32.mrf.mxu0
        %v3132 = vadd.f32 0.0, %v3131
        %v3133 = vpop.f32.mrf.mxu0
        %3134 = vmatprep.mubr.bf16.mxu0 0
        %3135 = vmatmul.mubr.bf16.gmra.mxu0 %v1756
        %v3136 = vpop.f32.mrf.mxu0
        %v3137 = vadd.f32 0.0, %v3136
        %v3138 = vpop.f32.mrf.mxu0
        %v3139 = vpop.f32.mrf.mxu0
        %v3140 = vadd.f32 0.0, %v3139
        %v3141 = vpop.f32.mrf.mxu0
        %3142 = vmatprep.mubr.bf16.mxu0 0
        %3143 = vmatmul.mubr.bf16.gmra.mxu0 %v1759
        %v3144 = vpop.f32.mrf.mxu0
        %v3145 = vadd.f32 0.0, %v3144
        %v3146 = vpop.f32.mrf.mxu0
        %v3147 = vpop.f32.mrf.mxu0
        %v3148 = vadd.f32 0.0, %v3147
        %v3149 = vpop.f32.mrf.mxu0
        %3150 = vmatprep.mubr.bf16.mxu0 0
        %3151 = vmatmul.mubr.bf16.gmra.mxu0 %v1762
        %v3152 = vpop.f32.mrf.mxu0
        %v3153 = vadd.f32 0.0, %v3152
        %v3154 = vpop.f32.mrf.mxu0
        %v3155 = vpop.f32.mrf.mxu0
        %v3156 = vadd.f32 0.0, %v3155
        %v3157 = vpop.f32.mrf.mxu0
        %3158 = vmatprep.mubr.bf16.mxu0 0
        %3159 = vmatmul.mubr.bf16.gmra.mxu0 %v1765
        %v3160 = vpop.f32.mrf.mxu0
        %v3161 = vadd.f32 0.0, %v3160
        %v3162 = vpop.f32.mrf.mxu0
        %v3163 = vpop.f32.mrf.mxu0
        %v3164 = vadd.f32 0.0, %v3163
        %v3165 = vpop.f32.mrf.mxu0
        %3166 = vmatprep.mubr.bf16.mxu0 0
        %3167 = vmatmul.mubr.bf16.gmra.mxu0 %v1768
        %v3168 = vpop.f32.mrf.mxu0
        %v3169 = vadd.f32 0.0, %v3168
        %v3170 = vpop.f32.mrf.mxu0
        %v3171 = vpop.f32.mrf.mxu0
        %v3172 = vadd.f32 0.0, %v3171
        %v3173 = vpop.f32.mrf.mxu0
        %3174 = vmatprep.mubr.bf16.mxu0 0
        %3175 = vmatmul.mubr.bf16.gmra.mxu0 %v1771
        %v3176 = vpop.f32.mrf.mxu0
        %v3177 = vadd.f32 0.0, %v3176
        %v3178 = vpop.f32.mrf.mxu0
        %v3179 = vpop.f32.mrf.mxu0
        %v3180 = vadd.f32 0.0, %v3179
        %v3181 = vpop.f32.mrf.mxu0
        %3182 = vmatprep.mubr.bf16.mxu0 0
        %3183 = vmatmul.mubr.bf16.gmra.mxu0 %v1774
        %v3184 = vpop.f32.mrf.mxu0
        %v3185 = vadd.f32 0.0, %v3184
        %v3186 = vpop.f32.mrf.mxu0
        %v3187 = vpop.f32.mrf.mxu0
        %v3188 = vadd.f32 0.0, %v3187
        %v3189 = vpop.f32.mrf.mxu0
        %3190 = vmatprep.mubr.bf16.mxu0 0
        %3191 = vmatmul.mubr.bf16.gmra.mxu0 %v1777
        %v3192 = vpop.f32.mrf.mxu0
        %v3193 = vadd.f32 0.0, %v3192
        %v3194 = vpop.f32.mrf.mxu0
        %v3195 = vpop.f32.mrf.mxu0
        %v3196 = vadd.f32 0.0, %v3195
        %v3197 = vpop.f32.mrf.mxu0
        %3198 = vdwg.mxu0
        %v3199 = vadd.f32 %v2879, %v3073
        %v3200 = vadd.f32 %v2882, %v3076
        %v3201 = vadd.f32 %v2887, %v3081
        %v3202 = vadd.f32 %v2890, %v3084
        %v3203 = vadd.f32 %v2895, %v3089
        %v3204 = vadd.f32 %v2898, %v3092
        %v3205 = vadd.f32 %v2903, %v3097
        %v3206 = vadd.f32 %v2906, %v3100
        %v3207 = vadd.f32 %v2911, %v3105
        %v3208 = vadd.f32 %v2914, %v3108
        %v3209 = vadd.f32 %v2919, %v3113
        %v3210 = vadd.f32 %v2922, %v3116
        %v3211 = vadd.f32 %v2927, %v3121
        %v3212 = vadd.f32 %v2930, %v3124
        %v3213 = vadd.f32 %v2935, %v3129
        %v3214 = vadd.f32 %v2938, %v3132
        %v3215 = vadd.f32 %v2943, %v3137
        %v3216 = vadd.f32 %v2946, %v3140
        %v3217 = vadd.f32 %v2951, %v3145
        %v3218 = vadd.f32 %v2954, %v3148
        %v3219 = vadd.f32 %v2959, %v3153
        %v3220 = vadd.f32 %v2962, %v3156
        %v3221 = vadd.f32 %v2967, %v3161
        %v3222 = vadd.f32 %v2970, %v3164
        %v3223 = vadd.f32 %v2975, %v3169
        %v3224 = vadd.f32 %v2978, %v3172
        %v3225 = vadd.f32 %v2983, %v3177
        %v3226 = vadd.f32 %v2986, %v3180
        %v3227 = vadd.f32 %v2991, %v3185
        %v3228 = vadd.f32 %v2994, %v3188
        %v3229 = vadd.f32 %v2999, %v3193
        %v3230 = vadd.f32 %v3002, %v3196
        %v3231 = vld [vmem:[%s168] sm:$0xe]
        %v3232 = vld [vmem:[%s168 + $0xc] sm:$0xe]
        %v3233 = vld [vmem:[%s168 + $0x18] sm:$0xe]
        %v3234 = vld [vmem:[%s168 + $0x24] sm:$0xe]
        %v3235 = vld [vmem:[%s168 + $0x30] sm:$0xe]
        %v3236 = vld [vmem:[%s168 + $0x3c] sm:$0xe]
        %v3237 = vld [vmem:[%s168 + $0x48] sm:$0xe]
        %v3238 = vld [vmem:[%s168 + $0x54] sm:$0xe]
        %v3239 = vld [vmem:[%s168 + $0x60] sm:$0xe]
        %v3240 = vld [vmem:[%s168 + $0x6c] sm:$0xe]
        %v3241 = vld [vmem:[%s168 + $0x78] sm:$0xe]
        %v3242 = vld [vmem:[%s168 + $0x84] sm:$0xe]
        %v3243 = vld [vmem:[%s168 + $0x90] sm:$0xe]
        %v3244 = vld [vmem:[%s168 + $0x9c] sm:$0xe]
        %v3245 = vld [vmem:[%s168 + $0xa8] sm:$0xe]
        %v3246 = vld [vmem:[%s168 + $0xb4] sm:$0xe]
        %v3295 = vrot.slane %v3231, 5
        %v3296 = vrot.slane %v3295, 4
        %v3297 = vrot.slane %v1219, 5
        %v3298 = vsel %vm2417, %v3296, %v3297
        %v3299 = vrot.slane %v3297, 4
        %v3300 = vrot.slane %v1220, 5
        %v3301 = vsel %vm2417, %v3299, %v3300
        %v3302 = vrot.slane %v3232, 5
        %v3303 = vrot.slane %v3302, 4
        %v3304 = vrot.slane %v1222, 5
        %v3305 = vsel %vm2417, %v3303, %v3304
        %v3306 = vrot.slane %v3304, 4
        %v3307 = vrot.slane %v1223, 5
        %v3308 = vsel %vm2417, %v3306, %v3307
        %v3309 = vrot.slane %v3233, 5
        %v3310 = vrot.slane %v3309, 4
        %v3311 = vrot.slane %v1225, 5
        %v3312 = vsel %vm2417, %v3310, %v3311
        %v3313 = vrot.slane %v3311, 4
        %v3314 = vrot.slane %v1226, 5
        %v3315 = vsel %vm2417, %v3313, %v3314
        %v3316 = vrot.slane %v3234, 5
        %v3317 = vrot.slane %v3316, 4
        %v3318 = vrot.slane %v1228, 5
        %v3319 = vsel %vm2417, %v3317, %v3318
        %v3320 = vrot.slane %v3318, 4
        %v3321 = vrot.slane %v1229, 5
        %v3322 = vsel %vm2417, %v3320, %v3321
        %v3323 = vrot.slane %v3235, 5
        %v3324 = vrot.slane %v3323, 4
        %v3325 = vrot.slane %v1231, 5
        %v3326 = vsel %vm2417, %v3324, %v3325
        %v3327 = vrot.slane %v3325, 4
        %v3328 = vrot.slane %v1232, 5
        %v3329 = vsel %vm2417, %v3327, %v3328
        %v3330 = vrot.slane %v3236, 5
        %v3331 = vrot.slane %v3330, 4
        %v3332 = vrot.slane %v1234, 5
        %v3333 = vsel %vm2417, %v3331, %v3332
        %v3334 = vrot.slane %v3332, 4
        %v3335 = vrot.slane %v1235, 5
        %v3336 = vsel %vm2417, %v3334, %v3335
        %v3337 = vrot.slane %v3237, 5
        %v3338 = vrot.slane %v3337, 4
        %v3339 = vrot.slane %v1237, 5
        %v3340 = vsel %vm2417, %v3338, %v3339
        %v3341 = vrot.slane %v3339, 4
        %v3342 = vrot.slane %v1238, 5
        %v3343 = vsel %vm2417, %v3341, %v3342
        %v3344 = vrot.slane %v3238, 5
        %v3345 = vrot.slane %v3344, 4
        %v3346 = vrot.slane %v1240, 5
        %v3347 = vsel %vm2417, %v3345, %v3346
        %v3348 = vrot.slane %v3346, 4
        %v3349 = vrot.slane %v1241, 5
        %v3350 = vsel %vm2417, %v3348, %v3349
        %v3351 = vrot.slane %v3239, 5
        %v3352 = vrot.slane %v3351, 4
        %v3353 = vrot.slane %v1243, 5
        %v3354 = vsel %vm2417, %v3352, %v3353
        %v3355 = vrot.slane %v3353, 4
        %v3356 = vrot.slane %v1244, 5
        %v3357 = vsel %vm2417, %v3355, %v3356
        %v3358 = vrot.slane %v3240, 5
        %v3359 = vrot.slane %v3358, 4
        %v3360 = vrot.slane %v1246, 5
        %v3361 = vsel %vm2417, %v3359, %v3360
        %v3362 = vrot.slane %v3360, 4
        %v3363 = vrot.slane %v1247, 5
        %v3364 = vsel %vm2417, %v3362, %v3363
        %v3365 = vrot.slane %v3241, 5
        %v3366 = vrot.slane %v3365, 4
        %v3367 = vrot.slane %v1249, 5
        %v3368 = vsel %vm2417, %v3366, %v3367
        %v3369 = vrot.slane %v3367, 4
        %v3370 = vrot.slane %v1250, 5
        %v3371 = vsel %vm2417, %v3369, %v3370
        %v3372 = vrot.slane %v3242, 5
        %v3373 = vrot.slane %v3372, 4
        %v3374 = vrot.slane %v1252, 5
        %v3375 = vsel %vm2417, %v3373, %v3374
        %v3376 = vrot.slane %v3374, 4
        %v3377 = vrot.slane %v1253, 5
        %v3378 = vsel %vm2417, %v3376, %v3377
        %v3379 = vrot.slane %v3243, 5
        %v3380 = vrot.slane %v3379, 4
        %v3381 = vrot.slane %v1255, 5
        %v3382 = vsel %vm2417, %v3380, %v3381
        %v3383 = vrot.slane %v3381, 4
        %v3384 = vrot.slane %v1256, 5
        %v3385 = vsel %vm2417, %v3383, %v3384
        %v3386 = vrot.slane %v3244, 5
        %v3387 = vrot.slane %v3386, 4
        %v3388 = vrot.slane %v1258, 5
        %v3389 = vsel %vm2417, %v3387, %v3388
        %v3390 = vrot.slane %v3388, 4
        %v3391 = vrot.slane %v1259, 5
        %v3392 = vsel %vm2417, %v3390, %v3391
        %v3393 = vrot.slane %v3245, 5
        %v3394 = vrot.slane %v3393, 4
        %v3395 = vrot.slane %v1261, 5
        %v3396 = vsel %vm2417, %v3394, %v3395
        %v3397 = vrot.slane %v3395, 4
        %v3398 = vrot.slane %v1262, 5
        %v3399 = vsel %vm2417, %v3397, %v3398
        %v3400 = vrot.slane %v3246, 5
        %v3401 = vrot.slane %v3400, 4
        %v3402 = vrot.slane %v1264, 5
        %v3403 = vsel %vm2417, %v3401, %v3402
        %v3404 = vrot.slane %v3402, 4
        %v3405 = vrot.slane %v1265, 5
        %v3406 = vsel %vm2417, %v3404, %v3405
        %s3407 = scalar_lea.vmem %s1, 224
        %v3408 = vld [vmem:[%s3407] sm:$0xf]
        %v3409 = vld [vmem:[%s3407 + $0x4] sm:$0xf]
        %v3410 = vld [vmem:[%s3407 + $0x8] sm:$0xf]
        %v3411 = vld [vmem:[%s3407 + $0xc] sm:$0xf]
        %v3412 = vld [vmem:[%s3407 + $0x10] sm:$0xf]
        %v3413 = vld [vmem:[%s3407 + $0x14] sm:$0xf]
        %v3414 = vld [vmem:[%s3407 + $0x18] sm:$0xf]
        %v3415 = vld [vmem:[%s3407 + $0x1c] sm:$0xf]
        %v3416 = vunpack.c.l.b16 %v3298
        %v3417 = vunpack.c.l.b16 %v3301
        %v3418 = vunpack.c.l.b16 %v3305
        %v3419 = vunpack.c.l.b16 %v3308
        %v3420 = vunpack.c.l.b16 %v3312
        %v3421 = vunpack.c.l.b16 %v3315
        %v3422 = vunpack.c.l.b16 %v3319
        %v3423 = vunpack.c.l.b16 %v3322
        %v3424 = vunpack.c.l.b16 %v3326
        %v3425 = vunpack.c.l.b16 %v3329
        %v3426 = vunpack.c.l.b16 %v3333
        %v3427 = vunpack.c.l.b16 %v3336
        %v3428 = vunpack.c.l.b16 %v3340
        %v3429 = vunpack.c.l.b16 %v3343
        %v3430 = vunpack.c.l.b16 %v3347
        %v3431 = vunpack.c.l.b16 %v3350
        %v3432 = vunpack.c.l.b16 %v3354
        %v3433 = vunpack.c.l.b16 %v3357
        %v3434 = vunpack.c.l.b16 %v3361
        %v3435 = vunpack.c.l.b16 %v3364
        %v3436 = vunpack.c.l.b16 %v3368
        %v3437 = vunpack.c.l.b16 %v3371
        %v3438 = vunpack.c.l.b16 %v3375
        %v3439 = vunpack.c.l.b16 %v3378
        %v3440 = vunpack.c.l.b16 %v3382
        %v3441 = vunpack.c.l.b16 %v3385
        %v3442 = vunpack.c.l.b16 %v3389
        %v3443 = vunpack.c.l.b16 %v3392
        %v3444 = vunpack.c.l.b16 %v3396
        %v3445 = vunpack.c.l.b16 %v3399
        %v3446 = vunpack.c.l.b16 %v3403
        %v3447 = vunpack.c.l.b16 %v3406
        %v3448 = vpack.c.b16 %v3417, %v3416
        %v3449 = vpack.c.b16 %v3419, %v3418
        %v3450 = vpack.c.b16 %v3421, %v3420
        %v3451 = vpack.c.b16 %v3423, %v3422
        %v3452 = vpack.c.b16 %v3425, %v3424
        %v3453 = vpack.c.b16 %v3427, %v3426
        %v3454 = vpack.c.b16 %v3429, %v3428
        %v3455 = vpack.c.b16 %v3431, %v3430
        %v3456 = vpack.c.b16 %v3433, %v3432
        %v3457 = vpack.c.b16 %v3435, %v3434
        %v3458 = vpack.c.b16 %v3437, %v3436
        %v3459 = vpack.c.b16 %v3439, %v3438
        %v3460 = vpack.c.b16 %v3441, %v3440
        %v3461 = vpack.c.b16 %v3443, %v3442
        %v3462 = vpack.c.b16 %v3445, %v3444
        %v3463 = vpack.c.b16 %v3447, %v3446
        %v3472 = vunpack.c.l.b16 %v3408
        %v3473 = vunpack.c.l.b16 %v3409
        %v3474 = vunpack.c.l.b16 %v3410
        %v3475 = vunpack.c.l.b16 %v3411
        %v3476 = vunpack.c.l.b16 %v3412
        %v3477 = vunpack.c.l.b16 %v3413
        %v3478 = vunpack.c.l.b16 %v3414
        %v3479 = vunpack.c.l.b16 %v3415
        %v3480 = vpack.c.b16 %v3473, %v3472
        %v3481 = vpack.c.b16 %v3475, %v3474
        %v3482 = vpack.c.b16 %v3477, %v3476
        %v3483 = vpack.c.b16 %v3479, %v3478
        %v3489 = vsel %vm727, %v3448, 0
        %v3492 = vsel %vm727, %v3449, 0
        %v3495 = vsel %vm727, %v3450, 0
        %v3498 = vsel %vm727, %v3451, 0
        %v3501 = vsel %vm727, %v3452, 0
        %v3504 = vsel %vm727, %v3453, 0
        %v3507 = vsel %vm727, %v3454, 0
        %v3510 = vsel %vm727, %v3455, 0
        %v3513 = vsel %vm727, %v3456, 0
        %v3516 = vsel %vm727, %v3457, 0
        %v3519 = vsel %vm727, %v3458, 0
        %v3522 = vsel %vm727, %v3459, 0
        %v3525 = vsel %vm727, %v3460, 0
        %v3528 = vsel %vm727, %v3461, 0
        %v3531 = vsel %vm727, %v3462, 0
        %v3534 = vsel %vm727, %v3463, 0
        %3536 = vmatprep.subr.bf16.mxu0 0
        %3537 = vmatpush1.bf16.msra.mxu0 0
        %3538 = vmatprep.subr.bf16.mxu0 0
        %3539 = vmatpush1.bf16.msra.mxu0 0
        %3540 = vmatprep.subr.bf16.mxu0 0
        %3541 = vmatpush1.bf16.msra.mxu0 0
        %3542 = vmatprep.subr.bf16.mxu0 0
        %3543 = vmatpush1.bf16.msra.mxu0 0
        %3544 = vmatprep.subr.bf16.mxu0 0
        %3545 = vmatpush1.bf16.msra.mxu0 %v3483
        %3546 = vmatprep.subr.bf16.mxu0 0
        %3547 = vmatpush1.bf16.msra.mxu0 %v3482
        %3548 = vmatprep.subr.bf16.mxu0 0
        %3549 = vmatpush1.bf16.msra.mxu0 %v3481
        %3550 = vmatprep.subr.bf16.mxu0 0
        %3551 = vmatpush1.bf16.msra.mxu0 %v3480
        %3552 = vmatprep.subr.bf16.mxu0 0
        %3553 = vmatpush2.bf16.msra.mxu0 0
        %3554 = vmatprep.subr.bf16.mxu0 0
        %3555 = vmatpush2.bf16.msra.mxu0 0
        %3556 = vmatprep.subr.bf16.mxu0 0
        %3557 = vmatpush2.bf16.msra.mxu0 0
        %3558 = vmatprep.subr.bf16.mxu0 0
        %3559 = vmatpush2.bf16.msra.mxu0 0
        %3560 = vmatprep.subr.bf16.mxu0 0
        %3561 = vmatpush2.bf16.msra.mxu0 0
        %3562 = vmatprep.subr.bf16.mxu0 0
        %3563 = vmatpush2.bf16.msra.mxu0 0
        %3564 = vmatprep.subr.bf16.mxu0 0
        %3565 = vmatpush2.bf16.msra.mxu0 0
        %3566 = vmatprep.subr.bf16.mxu0 0
        %3567 = vmatpush2.bf16.msra.mxu0 0
        %3568 = vmatprep.mubr.bf16.mxu0 0
        %3569 = vmatmul.mubr.bf16.gmra.mxu0 %v3489
        %v3570 = vpop.f32.mrf.mxu0
        %v3571 = vadd.f32 0.0, %v3570
        %v3572 = vpop.f32.mrf.mxu0
        %v3573 = vpop.f32.mrf.mxu0
        %v3574 = vadd.f32 0.0, %v3573
        %v3575 = vpop.f32.mrf.mxu0
        %3576 = vmatprep.mubr.bf16.mxu0 0
        %3577 = vmatmul.mubr.bf16.gmra.mxu0 %v3492
        %v3578 = vpop.f32.mrf.mxu0
        %v3579 = vadd.f32 0.0, %v3578
        %v3580 = vpop.f32.mrf.mxu0
        %v3581 = vpop.f32.mrf.mxu0
        %v3582 = vadd.f32 0.0, %v3581
        %v3583 = vpop.f32.mrf.mxu0
        %3584 = vmatprep.mubr.bf16.mxu0 0
        %3585 = vmatmul.mubr.bf16.gmra.mxu0 %v3495
        %v3586 = vpop.f32.mrf.mxu0
        %v3587 = vadd.f32 0.0, %v3586
        %v3588 = vpop.f32.mrf.mxu0
        %v3589 = vpop.f32.mrf.mxu0
        %v3590 = vadd.f32 0.0, %v3589
        %v3591 = vpop.f32.mrf.mxu0
        %3592 = vmatprep.mubr.bf16.mxu0 0
        %3593 = vmatmul.mubr.bf16.gmra.mxu0 %v3498
        %v3594 = vpop.f32.mrf.mxu0
        %v3595 = vadd.f32 0.0, %v3594
        %v3596 = vpop.f32.mrf.mxu0
        %v3597 = vpop.f32.mrf.mxu0
        %v3598 = vadd.f32 0.0, %v3597
        %v3599 = vpop.f32.mrf.mxu0
        %3600 = vmatprep.mubr.bf16.mxu0 0
        %3601 = vmatmul.mubr.bf16.gmra.mxu0 %v3501
        %v3602 = vpop.f32.mrf.mxu0
        %v3603 = vadd.f32 0.0, %v3602
        %v3604 = vpop.f32.mrf.mxu0
        %v3605 = vpop.f32.mrf.mxu0
        %v3606 = vadd.f32 0.0, %v3605
        %v3607 = vpop.f32.mrf.mxu0
        %3608 = vmatprep.mubr.bf16.mxu0 0
        %3609 = vmatmul.mubr.bf16.gmra.mxu0 %v3504
        %v3610 = vpop.f32.mrf.mxu0
        %v3611 = vadd.f32 0.0, %v3610
        %v3612 = vpop.f32.mrf.mxu0
        %v3613 = vpop.f32.mrf.mxu0
        %v3614 = vadd.f32 0.0, %v3613
        %v3615 = vpop.f32.mrf.mxu0
        %3616 = vmatprep.mubr.bf16.mxu0 0
        %3617 = vmatmul.mubr.bf16.gmra.mxu0 %v3507
        %v3618 = vpop.f32.mrf.mxu0
        %v3619 = vadd.f32 0.0, %v3618
        %v3620 = vpop.f32.mrf.mxu0
        %v3621 = vpop.f32.mrf.mxu0
        %v3622 = vadd.f32 0.0, %v3621
        %v3623 = vpop.f32.mrf.mxu0
        %3624 = vmatprep.mubr.bf16.mxu0 0
        %3625 = vmatmul.mubr.bf16.gmra.mxu0 %v3510
        %v3626 = vpop.f32.mrf.mxu0
        %v3627 = vadd.f32 0.0, %v3626
        %v3628 = vpop.f32.mrf.mxu0
        %v3629 = vpop.f32.mrf.mxu0
        %v3630 = vadd.f32 0.0, %v3629
        %v3631 = vpop.f32.mrf.mxu0
        %3632 = vmatprep.mubr.bf16.mxu0 0
        %3633 = vmatmul.mubr.bf16.gmra.mxu0 %v3513
        %v3634 = vpop.f32.mrf.mxu0
        %v3635 = vadd.f32 0.0, %v3634
        %v3636 = vpop.f32.mrf.mxu0
        %v3637 = vpop.f32.mrf.mxu0
        %v3638 = vadd.f32 0.0, %v3637
        %v3639 = vpop.f32.mrf.mxu0
        %3640 = vmatprep.mubr.bf16.mxu0 0
        %3641 = vmatmul.mubr.bf16.gmra.mxu0 %v3516
        %v3642 = vpop.f32.mrf.mxu0
        %v3643 = vadd.f32 0.0, %v3642
        %v3644 = vpop.f32.mrf.mxu0
        %v3645 = vpop.f32.mrf.mxu0
        %v3646 = vadd.f32 0.0, %v3645
        %v3647 = vpop.f32.mrf.mxu0
        %3648 = vmatprep.mubr.bf16.mxu0 0
        %3649 = vmatmul.mubr.bf16.gmra.mxu0 %v3519
        %v3650 = vpop.f32.mrf.mxu0
        %v3651 = vadd.f32 0.0, %v3650
        %v3652 = vpop.f32.mrf.mxu0
        %v3653 = vpop.f32.mrf.mxu0
        %v3654 = vadd.f32 0.0, %v3653
        %v3655 = vpop.f32.mrf.mxu0
        %3656 = vmatprep.mubr.bf16.mxu0 0
        %3657 = vmatmul.mubr.bf16.gmra.mxu0 %v3522
        %v3658 = vpop.f32.mrf.mxu0
        %v3659 = vadd.f32 0.0, %v3658
        %v3660 = vpop.f32.mrf.mxu0
        %v3661 = vpop.f32.mrf.mxu0
        %v3662 = vadd.f32 0.0, %v3661
        %v3663 = vpop.f32.mrf.mxu0
        %3664 = vmatprep.mubr.bf16.mxu0 0
        %3665 = vmatmul.mubr.bf16.gmra.mxu0 %v3525
        %v3666 = vpop.f32.mrf.mxu0
        %v3667 = vadd.f32 0.0, %v3666
        %v3668 = vpop.f32.mrf.mxu0
        %v3669 = vpop.f32.mrf.mxu0
        %v3670 = vadd.f32 0.0, %v3669
        %v3671 = vpop.f32.mrf.mxu0
        %3672 = vmatprep.mubr.bf16.mxu0 0
        %3673 = vmatmul.mubr.bf16.gmra.mxu0 %v3528
        %v3674 = vpop.f32.mrf.mxu0
        %v3675 = vadd.f32 0.0, %v3674
        %v3676 = vpop.f32.mrf.mxu0
        %v3677 = vpop.f32.mrf.mxu0
        %v3678 = vadd.f32 0.0, %v3677
        %v3679 = vpop.f32.mrf.mxu0
        %3680 = vmatprep.mubr.bf16.mxu0 0
        %3681 = vmatmul.mubr.bf16.gmra.mxu0 %v3531
        %v3682 = vpop.f32.mrf.mxu0
        %v3683 = vadd.f32 0.0, %v3682
        %v3684 = vpop.f32.mrf.mxu0
        %v3685 = vpop.f32.mrf.mxu0
        %v3686 = vadd.f32 0.0, %v3685
        %v3687 = vpop.f32.mrf.mxu0
        %3688 = vmatprep.mubr.bf16.mxu0 0
        %3689 = vmatmul.mubr.bf16.gmra.mxu0 %v3534
        %v3690 = vpop.f32.mrf.mxu0
        %v3691 = vadd.f32 0.0, %v3690
        %v3692 = vpop.f32.mrf.mxu0
        %v3693 = vpop.f32.mrf.mxu0
        %v3694 = vadd.f32 0.0, %v3693
        %v3695 = vpop.f32.mrf.mxu0
        %3696 = vdwg.mxu0
        %v3697 = vadd.f32 %v3199, %v3571
        %v3698 = vadd.f32 %v3200, %v3574
        %v3699 = vadd.f32 %v3201, %v3579
        %v3700 = vadd.f32 %v3202, %v3582
        %v3701 = vadd.f32 %v3203, %v3587
        %v3702 = vadd.f32 %v3204, %v3590
        %v3703 = vadd.f32 %v3205, %v3595
        %v3704 = vadd.f32 %v3206, %v3598
        %v3705 = vadd.f32 %v3207, %v3603
        %v3706 = vadd.f32 %v3208, %v3606
        %v3707 = vadd.f32 %v3209, %v3611
        %v3708 = vadd.f32 %v3210, %v3614
        %v3709 = vadd.f32 %v3211, %v3619
        %v3710 = vadd.f32 %v3212, %v3622
        %v3711 = vadd.f32 %v3213, %v3627
        %v3712 = vadd.f32 %v3214, %v3630
        %v3713 = vadd.f32 %v3215, %v3635
        %v3714 = vadd.f32 %v3216, %v3638
        %v3715 = vadd.f32 %v3217, %v3643
        %v3716 = vadd.f32 %v3218, %v3646
        %v3717 = vadd.f32 %v3219, %v3651
        %v3718 = vadd.f32 %v3220, %v3654
        %v3719 = vadd.f32 %v3221, %v3659
        %v3720 = vadd.f32 %v3222, %v3662
        %v3721 = vadd.f32 %v3223, %v3667
        %v3722 = vadd.f32 %v3224, %v3670
        %v3723 = vadd.f32 %v3225, %v3675
        %v3724 = vadd.f32 %v3226, %v3678
        %v3725 = vadd.f32 %v3227, %v3683
        %v3726 = vadd.f32 %v3228, %v3686
        %v3727 = vadd.f32 %v3229, %v3691
        %v3728 = vadd.f32 %v3230, %v3694
        %s3729 = scalar_lea.vmem %s1, 256
        %v3730 = vld [vmem:[%s3729] sm:$0xf]
        %v3731 = vld [vmem:[%s3729 + $0x4] sm:$0xf]
        %v3732 = vld [vmem:[%s3729 + $0x8] sm:$0xf]
        %v3733 = vld [vmem:[%s3729 + $0xc] sm:$0xf]
        %v3734 = vld [vmem:[%s3729 + $0x10] sm:$0xf]
        %v3735 = vld [vmem:[%s3729 + $0x14] sm:$0xf]
        %v3736 = vld [vmem:[%s3729 + $0x18] sm:$0xf]
        %v3737 = vld [vmem:[%s3729 + $0x1c] sm:$0xf]
        %s3738 = scalar_lea.vmem %s1, 288
        %v3739 = vld [vmem:[%s3738] sm:$0xf]
        %v3740 = vld [vmem:[%s3738 + $0x4] sm:$0xf]
        %v3741 = vld [vmem:[%s3738 + $0x8] sm:$0xf]
        %v3742 = vld [vmem:[%s3738 + $0xc] sm:$0xf]
        %v3743 = vld [vmem:[%s3738 + $0x10] sm:$0xf]
        %v3744 = vld [vmem:[%s3738 + $0x14] sm:$0xf]
        %v3745 = vld [vmem:[%s3738 + $0x18] sm:$0xf]
        %v3746 = vld [vmem:[%s3738 + $0x1c] sm:$0xf]
        %v3755 = vunpack.c.l.b16 %v3739
        %v3756 = vunpack.c.l.b16 %v3740
        %v3757 = vunpack.c.l.b16 %v3741
        %v3758 = vunpack.c.l.b16 %v3742
        %v3759 = vunpack.c.l.b16 %v3743
        %v3760 = vunpack.c.l.b16 %v3744
        %v3761 = vunpack.c.l.b16 %v3745
        %v3762 = vunpack.c.l.b16 %v3746
        %v3763 = vpack.c.b16 %v3756, %v3755
        %v3764 = vpack.c.b16 %v3758, %v3757
        %v3765 = vpack.c.b16 %v3760, %v3759
        %v3766 = vpack.c.b16 %v3762, %v3761
        %3771 = vmatprep.subr.bf16.mxu0 0
        %3772 = vmatpush1.bf16.msra.mxu0 0
        %3773 = vmatprep.subr.bf16.mxu0 0
        %3774 = vmatpush1.bf16.msra.mxu0 0
        %3775 = vmatprep.subr.bf16.mxu0 0
        %3776 = vmatpush1.bf16.msra.mxu0 0
        %3777 = vmatprep.subr.bf16.mxu0 0
        %3778 = vmatpush1.bf16.msra.mxu0 0
        %3779 = vmatprep.subr.bf16.mxu0 0
        %3780 = vmatpush1.bf16.msra.mxu0 %v3766
        %3781 = vmatprep.subr.bf16.mxu0 0
        %3782 = vmatpush1.bf16.msra.mxu0 %v3765
        %3783 = vmatprep.subr.bf16.mxu0 0
        %3784 = vmatpush1.bf16.msra.mxu0 %v3764
        %3785 = vmatprep.subr.bf16.mxu0 0
        %3786 = vmatpush1.bf16.msra.mxu0 %v3763
        %3787 = vmatprep.subr.bf16.mxu0 0
        %3788 = vmatpush2.bf16.msra.mxu0 0
        %3789 = vmatprep.subr.bf16.mxu0 0
        %3790 = vmatpush2.bf16.msra.mxu0 0
        %3791 = vmatprep.subr.bf16.mxu0 0
        %3792 = vmatpush2.bf16.msra.mxu0 0
        %3793 = vmatprep.subr.bf16.mxu0 0
        %3794 = vmatpush2.bf16.msra.mxu0 0
        %3795 = vmatprep.subr.bf16.mxu0 0
        %3796 = vmatpush2.bf16.msra.mxu0 0
        %3797 = vmatprep.subr.bf16.mxu0 0
        %3798 = vmatpush2.bf16.msra.mxu0 0
        %3799 = vmatprep.subr.bf16.mxu0 0
        %3800 = vmatpush2.bf16.msra.mxu0 0
        %3801 = vmatprep.subr.bf16.mxu0 0
        %3802 = vmatpush2.bf16.msra.mxu0 0
        %3803 = vmatprep.mubr.bf16.mxu0 0
        %3804 = vmatmul.mubr.bf16.gmra.mxu0 %v729
        %v3805 = vpop.f32.mrf.mxu0
        %v3806 = vadd.f32 0.0, %v3805
        %v3807 = vpop.f32.mrf.mxu0
        %v3808 = vpop.f32.mrf.mxu0
        %v3809 = vadd.f32 0.0, %v3808
        %v3810 = vpop.f32.mrf.mxu0
        %3811 = vmatprep.mubr.bf16.mxu0 0
        %3812 = vmatmul.mubr.bf16.gmra.mxu0 %v732
        %v3813 = vpop.f32.mrf.mxu0
        %v3814 = vadd.f32 0.0, %v3813
        %v3815 = vpop.f32.mrf.mxu0
        %v3816 = vpop.f32.mrf.mxu0
        %v3817 = vadd.f32 0.0, %v3816
        %v3818 = vpop.f32.mrf.mxu0
        %3819 = vmatprep.mubr.bf16.mxu0 0
        %3820 = vmatmul.mubr.bf16.gmra.mxu0 %v735
        %v3821 = vpop.f32.mrf.mxu0
        %v3822 = vadd.f32 0.0, %v3821
        %v3823 = vpop.f32.mrf.mxu0
        %v3824 = vpop.f32.mrf.mxu0
        %v3825 = vadd.f32 0.0, %v3824
        %v3826 = vpop.f32.mrf.mxu0
        %3827 = vmatprep.mubr.bf16.mxu0 0
        %3828 = vmatmul.mubr.bf16.gmra.mxu0 %v738
        %v3829 = vpop.f32.mrf.mxu0
        %v3830 = vadd.f32 0.0, %v3829
        %v3831 = vpop.f32.mrf.mxu0
        %v3832 = vpop.f32.mrf.mxu0
        %v3833 = vadd.f32 0.0, %v3832
        %v3834 = vpop.f32.mrf.mxu0
        %3835 = vmatprep.mubr.bf16.mxu0 0
        %3836 = vmatmul.mubr.bf16.gmra.mxu0 %v741
        %v3837 = vpop.f32.mrf.mxu0
        %v3838 = vadd.f32 0.0, %v3837
        %v3839 = vpop.f32.mrf.mxu0
        %v3840 = vpop.f32.mrf.mxu0
        %v3841 = vadd.f32 0.0, %v3840
        %v3842 = vpop.f32.mrf.mxu0
        %3843 = vmatprep.mubr.bf16.mxu0 0
        %3844 = vmatmul.mubr.bf16.gmra.mxu0 %v744
        %v3845 = vpop.f32.mrf.mxu0
        %v3846 = vadd.f32 0.0, %v3845
        %v3847 = vpop.f32.mrf.mxu0
        %v3848 = vpop.f32.mrf.mxu0
        %v3849 = vadd.f32 0.0, %v3848
        %v3850 = vpop.f32.mrf.mxu0
        %3851 = vmatprep.mubr.bf16.mxu0 0
        %3852 = vmatmul.mubr.bf16.gmra.mxu0 %v747
        %v3853 = vpop.f32.mrf.mxu0
        %v3854 = vadd.f32 0.0, %v3853
        %v3855 = vpop.f32.mrf.mxu0
        %v3856 = vpop.f32.mrf.mxu0
        %v3857 = vadd.f32 0.0, %v3856
        %v3858 = vpop.f32.mrf.mxu0
        %3859 = vmatprep.mubr.bf16.mxu0 0
        %3860 = vmatmul.mubr.bf16.gmra.mxu0 %v750
        %v3861 = vpop.f32.mrf.mxu0
        %v3862 = vadd.f32 0.0, %v3861
        %v3863 = vpop.f32.mrf.mxu0
        %v3864 = vpop.f32.mrf.mxu0
        %v3865 = vadd.f32 0.0, %v3864
        %v3866 = vpop.f32.mrf.mxu0
        %3867 = vmatprep.mubr.bf16.mxu0 0
        %3868 = vmatmul.mubr.bf16.gmra.mxu0 %v753
        %v3869 = vpop.f32.mrf.mxu0
        %v3870 = vadd.f32 0.0, %v3869
        %v3871 = vpop.f32.mrf.mxu0
        %v3872 = vpop.f32.mrf.mxu0
        %v3873 = vadd.f32 0.0, %v3872
        %v3874 = vpop.f32.mrf.mxu0
        %3875 = vmatprep.mubr.bf16.mxu0 0
        %3876 = vmatmul.mubr.bf16.gmra.mxu0 %v756
        %v3877 = vpop.f32.mrf.mxu0
        %v3878 = vadd.f32 0.0, %v3877
        %v3879 = vpop.f32.mrf.mxu0
        %v3880 = vpop.f32.mrf.mxu0
        %v3881 = vadd.f32 0.0, %v3880
        %v3882 = vpop.f32.mrf.mxu0
        %3883 = vmatprep.mubr.bf16.mxu0 0
        %3884 = vmatmul.mubr.bf16.gmra.mxu0 %v759
        %v3885 = vpop.f32.mrf.mxu0
        %v3886 = vadd.f32 0.0, %v3885
        %v3887 = vpop.f32.mrf.mxu0
        %v3888 = vpop.f32.mrf.mxu0
        %v3889 = vadd.f32 0.0, %v3888
        %v3890 = vpop.f32.mrf.mxu0
        %3891 = vmatprep.mubr.bf16.mxu0 0
        %3892 = vmatmul.mubr.bf16.gmra.mxu0 %v762
        %v3893 = vpop.f32.mrf.mxu0
        %v3894 = vadd.f32 0.0, %v3893
        %v3895 = vpop.f32.mrf.mxu0
        %v3896 = vpop.f32.mrf.mxu0
        %v3897 = vadd.f32 0.0, %v3896
        %v3898 = vpop.f32.mrf.mxu0
        %3899 = vmatprep.mubr.bf16.mxu0 0
        %3900 = vmatmul.mubr.bf16.gmra.mxu0 %v765
        %v3901 = vpop.f32.mrf.mxu0
        %v3902 = vadd.f32 0.0, %v3901
        %v3903 = vpop.f32.mrf.mxu0
        %v3904 = vpop.f32.mrf.mxu0
        %v3905 = vadd.f32 0.0, %v3904
        %v3906 = vpop.f32.mrf.mxu0
        %3907 = vmatprep.mubr.bf16.mxu0 0
        %3908 = vmatmul.mubr.bf16.gmra.mxu0 %v768
        %v3909 = vpop.f32.mrf.mxu0
        %v3910 = vadd.f32 0.0, %v3909
        %v3911 = vpop.f32.mrf.mxu0
        %v3912 = vpop.f32.mrf.mxu0
        %v3913 = vadd.f32 0.0, %v3912
        %v3914 = vpop.f32.mrf.mxu0
        %3915 = vmatprep.mubr.bf16.mxu0 0
        %3916 = vmatmul.mubr.bf16.gmra.mxu0 %v771
        %v3917 = vpop.f32.mrf.mxu0
        %v3918 = vadd.f32 0.0, %v3917
        %v3919 = vpop.f32.mrf.mxu0
        %v3920 = vpop.f32.mrf.mxu0
        %v3921 = vadd.f32 0.0, %v3920
        %v3922 = vpop.f32.mrf.mxu0
        %3923 = vmatprep.mubr.bf16.mxu0 0
        %3924 = vmatmul.mubr.bf16.gmra.mxu0 %v774
        %v3925 = vpop.f32.mrf.mxu0
        %v3926 = vadd.f32 0.0, %v3925
        %v3927 = vpop.f32.mrf.mxu0
        %v3928 = vpop.f32.mrf.mxu0
        %v3929 = vadd.f32 0.0, %v3928
        %v3930 = vpop.f32.mrf.mxu0
        %3931 = vdwg.mxu0
        %v3940 = vunpack.c.l.b16 %v3730
        %v3941 = vunpack.c.l.b16 %v3731
        %v3942 = vunpack.c.l.b16 %v3732
        %v3943 = vunpack.c.l.b16 %v3733
        %v3944 = vunpack.c.l.b16 %v3734
        %v3945 = vunpack.c.l.b16 %v3735
        %v3946 = vunpack.c.l.b16 %v3736
        %v3947 = vunpack.c.l.b16 %v3737
        %v3948 = vpack.c.b16 %v3941, %v3940
        %v3949 = vpack.c.b16 %v3943, %v3942
        %v3950 = vpack.c.b16 %v3945, %v3944
        %v3951 = vpack.c.b16 %v3947, %v3946
        %3956 = vmatprep.subr.bf16.mxu0 0
        %3957 = vmatpush1.bf16.msra.mxu0 0
        %3958 = vmatprep.subr.bf16.mxu0 0
        %3959 = vmatpush1.bf16.msra.mxu0 0
        %3960 = vmatprep.subr.bf16.mxu0 0
        %3961 = vmatpush1.bf16.msra.mxu0 0
        %3962 = vmatprep.subr.bf16.mxu0 0
        %3963 = vmatpush1.bf16.msra.mxu0 0
        %3964 = vmatprep.subr.bf16.mxu0 0
        %3965 = vmatpush1.bf16.msra.mxu0 %v3951
        %3966 = vmatprep.subr.bf16.mxu0 0
        %3967 = vmatpush1.bf16.msra.mxu0 %v3950
        %3968 = vmatprep.subr.bf16.mxu0 0
        %3969 = vmatpush1.bf16.msra.mxu0 %v3949
        %3970 = vmatprep.subr.bf16.mxu0 0
        %3971 = vmatpush1.bf16.msra.mxu0 %v3948
        %3972 = vmatprep.subr.bf16.mxu0 0
        %3973 = vmatpush2.bf16.msra.mxu0 0
        %3974 = vmatprep.subr.bf16.mxu0 0
        %3975 = vmatpush2.bf16.msra.mxu0 0
        %3976 = vmatprep.subr.bf16.mxu0 0
        %3977 = vmatpush2.bf16.msra.mxu0 0
        %3978 = vmatprep.subr.bf16.mxu0 0
        %3979 = vmatpush2.bf16.msra.mxu0 0
        %3980 = vmatprep.subr.bf16.mxu0 0
        %3981 = vmatpush2.bf16.msra.mxu0 0
        %3982 = vmatprep.subr.bf16.mxu0 0
        %3983 = vmatpush2.bf16.msra.mxu0 0
        %3984 = vmatprep.subr.bf16.mxu0 0
        %3985 = vmatpush2.bf16.msra.mxu0 0
        %3986 = vmatprep.subr.bf16.mxu0 0
        %3987 = vmatpush2.bf16.msra.mxu0 0
        %3988 = vmatprep.mubr.bf16.mxu0 0
        %3989 = vmatmul.mubr.bf16.gmra.mxu0 %v1010
        %v3990 = vpop.f32.mrf.mxu0
        %v3991 = vadd.f32 %v3806, %v3990
        %v3992 = vpop.f32.mrf.mxu0
        %v3993 = vpop.f32.mrf.mxu0
        %v3994 = vadd.f32 %v3809, %v3993
        %v3995 = vpop.f32.mrf.mxu0
        %3996 = vmatprep.mubr.bf16.mxu0 0
        %3997 = vmatmul.mubr.bf16.gmra.mxu0 %v1013
        %v3998 = vpop.f32.mrf.mxu0
        %v3999 = vadd.f32 %v3814, %v3998
        %v4000 = vpop.f32.mrf.mxu0
        %v4001 = vpop.f32.mrf.mxu0
        %v4002 = vadd.f32 %v3817, %v4001
        %v4003 = vpop.f32.mrf.mxu0
        %4004 = vmatprep.mubr.bf16.mxu0 0
        %4005 = vmatmul.mubr.bf16.gmra.mxu0 %v1016
        %v4006 = vpop.f32.mrf.mxu0
        %v4007 = vadd.f32 %v3822, %v4006
        %v4008 = vpop.f32.mrf.mxu0
        %v4009 = vpop.f32.mrf.mxu0
        %v4010 = vadd.f32 %v3825, %v4009
        %v4011 = vpop.f32.mrf.mxu0
        %4012 = vmatprep.mubr.bf16.mxu0 0
        %4013 = vmatmul.mubr.bf16.gmra.mxu0 %v1019
        %v4014 = vpop.f32.mrf.mxu0
        %v4015 = vadd.f32 %v3830, %v4014
        %v4016 = vpop.f32.mrf.mxu0
        %v4017 = vpop.f32.mrf.mxu0
        %v4018 = vadd.f32 %v3833, %v4017
        %v4019 = vpop.f32.mrf.mxu0
        %4020 = vmatprep.mubr.bf16.mxu0 0
        %4021 = vmatmul.mubr.bf16.gmra.mxu0 %v1022
        %v4022 = vpop.f32.mrf.mxu0
        %v4023 = vadd.f32 %v3838, %v4022
        %v4024 = vpop.f32.mrf.mxu0
        %v4025 = vpop.f32.mrf.mxu0
        %v4026 = vadd.f32 %v3841, %v4025
        %v4027 = vpop.f32.mrf.mxu0
        %4028 = vmatprep.mubr.bf16.mxu0 0
        %4029 = vmatmul.mubr.bf16.gmra.mxu0 %v1025
        %v4030 = vpop.f32.mrf.mxu0
        %v4031 = vadd.f32 %v3846, %v4030
        %v4032 = vpop.f32.mrf.mxu0
        %v4033 = vpop.f32.mrf.mxu0
        %v4034 = vadd.f32 %v3849, %v4033
        %v4035 = vpop.f32.mrf.mxu0
        %4036 = vmatprep.mubr.bf16.mxu0 0
        %4037 = vmatmul.mubr.bf16.gmra.mxu0 %v1028
        %v4038 = vpop.f32.mrf.mxu0
        %v4039 = vadd.f32 %v3854, %v4038
        %v4040 = vpop.f32.mrf.mxu0
        %v4041 = vpop.f32.mrf.mxu0
        %v4042 = vadd.f32 %v3857, %v4041
        %v4043 = vpop.f32.mrf.mxu0
        %4044 = vmatprep.mubr.bf16.mxu0 0
        %4045 = vmatmul.mubr.bf16.gmra.mxu0 %v1031
        %v4046 = vpop.f32.mrf.mxu0
        %v4047 = vadd.f32 %v3862, %v4046
        %v4048 = vpop.f32.mrf.mxu0
        %v4049 = vpop.f32.mrf.mxu0
        %v4050 = vadd.f32 %v3865, %v4049
        %v4051 = vpop.f32.mrf.mxu0
        %4052 = vmatprep.mubr.bf16.mxu0 0
        %4053 = vmatmul.mubr.bf16.gmra.mxu0 %v1034
        %v4054 = vpop.f32.mrf.mxu0
        %v4055 = vadd.f32 %v3870, %v4054
        %v4056 = vpop.f32.mrf.mxu0
        %v4057 = vpop.f32.mrf.mxu0
        %v4058 = vadd.f32 %v3873, %v4057
        %v4059 = vpop.f32.mrf.mxu0
        %4060 = vmatprep.mubr.bf16.mxu0 0
        %4061 = vmatmul.mubr.bf16.gmra.mxu0 %v1037
        %v4062 = vpop.f32.mrf.mxu0
        %v4063 = vadd.f32 %v3878, %v4062
        %v4064 = vpop.f32.mrf.mxu0
        %v4065 = vpop.f32.mrf.mxu0
        %v4066 = vadd.f32 %v3881, %v4065
        %v4067 = vpop.f32.mrf.mxu0
        %4068 = vmatprep.mubr.bf16.mxu0 0
        %4069 = vmatmul.mubr.bf16.gmra.mxu0 %v1040
        %v4070 = vpop.f32.mrf.mxu0
        %v4071 = vadd.f32 %v3886, %v4070
        %v4072 = vpop.f32.mrf.mxu0
        %v4073 = vpop.f32.mrf.mxu0
        %v4074 = vadd.f32 %v3889, %v4073
        %v4075 = vpop.f32.mrf.mxu0
        %4076 = vmatprep.mubr.bf16.mxu0 0
        %4077 = vmatmul.mubr.bf16.gmra.mxu0 %v1043
        %v4078 = vpop.f32.mrf.mxu0
        %v4079 = vadd.f32 %v3894, %v4078
        %v4080 = vpop.f32.mrf.mxu0
        %v4081 = vpop.f32.mrf.mxu0
        %v4082 = vadd.f32 %v3897, %v4081
        %v4083 = vpop.f32.mrf.mxu0
        %4084 = vmatprep.mubr.bf16.mxu0 0
        %4085 = vmatmul.mubr.bf16.gmra.mxu0 %v1046
        %v4086 = vpop.f32.mrf.mxu0
        %v4087 = vadd.f32 %v3902, %v4086
        %v4088 = vpop.f32.mrf.mxu0
        %v4089 = vpop.f32.mrf.mxu0
        %v4090 = vadd.f32 %v3905, %v4089
        %v4091 = vpop.f32.mrf.mxu0
        %4092 = vmatprep.mubr.bf16.mxu0 0
        %4093 = vmatmul.mubr.bf16.gmra.mxu0 %v1049
        %v4094 = vpop.f32.mrf.mxu0
        %v4095 = vadd.f32 %v3910, %v4094
        %v4096 = vpop.f32.mrf.mxu0
        %v4097 = vpop.f32.mrf.mxu0
        %v4098 = vadd.f32 %v3913, %v4097
        %v4099 = vpop.f32.mrf.mxu0
        %4100 = vmatprep.mubr.bf16.mxu0 0
        %4101 = vmatmul.mubr.bf16.gmra.mxu0 %v1052
        %v4102 = vpop.f32.mrf.mxu0
        %v4103 = vadd.f32 %v3918, %v4102
        %v4104 = vpop.f32.mrf.mxu0
        %v4105 = vpop.f32.mrf.mxu0
        %v4106 = vadd.f32 %v3921, %v4105
        %v4107 = vpop.f32.mrf.mxu0
        %4108 = vmatprep.mubr.bf16.mxu0 0
        %4109 = vmatmul.mubr.bf16.gmra.mxu0 %v1055
        %v4110 = vpop.f32.mrf.mxu0
        %v4111 = vadd.f32 %v3926, %v4110
        %v4112 = vpop.f32.mrf.mxu0
        %v4113 = vpop.f32.mrf.mxu0
        %v4114 = vadd.f32 %v3929, %v4113
        %v4115 = vpop.f32.mrf.mxu0
        %4116 = vdwg.mxu0
        %s4117 = scalar_lea.vmem %s168, 24
        %v4118 = vld [vmem:[%s4117] sm:$0xf]
        %v4119 = vld [vmem:[%s4117 + $0x4] sm:$0xf]
        %v4120 = vld [vmem:[%s4117 + $0x8] sm:$0x1]
        %v4121 = vld [vmem:[%s4117 + $0xc] sm:$0xf]
        %v4122 = vld [vmem:[%s4117 + $0x10] sm:$0xf]
        %v4123 = vld [vmem:[%s4117 + $0x14] sm:$0x1]
        %v4124 = vld [vmem:[%s4117 + $0x18] sm:$0xf]
        %v4125 = vld [vmem:[%s4117 + $0x1c] sm:$0xf]
        %v4126 = vld [vmem:[%s4117 + $0x20] sm:$0x1]
        %v4127 = vld [vmem:[%s4117 + $0x24] sm:$0xf]
        %v4128 = vld [vmem:[%s4117 + $0x28] sm:$0xf]
        %v4129 = vld [vmem:[%s4117 + $0x2c] sm:$0x1]
        %v4130 = vld [vmem:[%s4117 + $0x30] sm:$0xf]
        %v4131 = vld [vmem:[%s4117 + $0x34] sm:$0xf]
        %v4132 = vld [vmem:[%s4117 + $0x38] sm:$0x1]
        %v4133 = vld [vmem:[%s4117 + $0x3c] sm:$0xf]
        %v4134 = vld [vmem:[%s4117 + $0x40] sm:$0xf]
        %v4135 = vld [vmem:[%s4117 + $0x44] sm:$0x1]
        %v4136 = vld [vmem:[%s4117 + $0x48] sm:$0xf]
        %v4137 = vld [vmem:[%s4117 + $0x4c] sm:$0xf]
        %v4138 = vld [vmem:[%s4117 + $0x50] sm:$0x1]
        %v4139 = vld [vmem:[%s4117 + $0x54] sm:$0xf]
        %v4140 = vld [vmem:[%s4117 + $0x58] sm:$0xf]
        %v4141 = vld [vmem:[%s4117 + $0x5c] sm:$0x1]
        %v4142 = vld [vmem:[%s4117 + $0x60] sm:$0xf]
        %v4143 = vld [vmem:[%s4117 + $0x64] sm:$0xf]
        %v4144 = vld [vmem:[%s4117 + $0x68] sm:$0x1]
        %v4145 = vld [vmem:[%s4117 + $0x6c] sm:$0xf]
        %v4146 = vld [vmem:[%s4117 + $0x70] sm:$0xf]
        %v4147 = vld [vmem:[%s4117 + $0x74] sm:$0x1]
        %v4148 = vld [vmem:[%s4117 + $0x78] sm:$0xf]
        %v4149 = vld [vmem:[%s4117 + $0x7c] sm:$0xf]
        %v4150 = vld [vmem:[%s4117 + $0x80] sm:$0x1]
        %v4151 = vld [vmem:[%s4117 + $0x84] sm:$0xf]
        %v4152 = vld [vmem:[%s4117 + $0x88] sm:$0xf]
        %v4153 = vld [vmem:[%s4117 + $0x8c] sm:$0x1]
        %v4154 = vld [vmem:[%s4117 + $0x90] sm:$0xf]
        %v4155 = vld [vmem:[%s4117 + $0x94] sm:$0xf]
        %v4156 = vld [vmem:[%s4117 + $0x98] sm:$0x1]
        %v4157 = vld [vmem:[%s4117 + $0x9c] sm:$0xf]
        %v4158 = vld [vmem:[%s4117 + $0xa0] sm:$0xf]
        %v4159 = vld [vmem:[%s4117 + $0xa4] sm:$0x1]
        %v4160 = vld [vmem:[%s4117 + $0xa8] sm:$0xf]
        %v4161 = vld [vmem:[%s4117 + $0xac] sm:$0xf]
        %v4162 = vld [vmem:[%s4117 + $0xb0] sm:$0x1]
        %v4163 = vld [vmem:[%s4117 + $0xb4] sm:$0xf]
        %v4164 = vld [vmem:[%s4117 + $0xb8] sm:$0xf]
        %v4165 = vld [vmem:[%s4117 + $0xbc] sm:$0x1]
        %v4167 = vshrl.u32 %v4118, 16
        %v4169 = vrot.slane %v4167, 4
        %v4170 = vshll.u32 %v4118, 16
        %v4172 = vrot.slane %v4170, 5
        %v4173 = vor.u32 %v4169, %v4172
        %v4174 = vrot.slane %v4173, 4
        %v4176 = vshll.u32 %v4119, 16
        %v4178 = vrot.slane %v4176, 5
        %v4179 = vsel %vm221, %v4174, %v4178
        %v4180 = vshrl.u32 %v4119, 16
        %v4182 = vrot.slane %v4180, 4
        %v4183 = vor.u32 %v4182, %v4178
        %v4184 = vrot.slane %v4183, 4
        %v4186 = vshll.u32 %v4120, 16
        %v4188 = vrot.slane %v4186, 5
        %v4189 = vsel %vm221, %v4184, %v4188
        %v4191 = vshrl.u32 %v4121, 16
        %v4193 = vrot.slane %v4191, 4
        %v4194 = vshll.u32 %v4121, 16
        %v4196 = vrot.slane %v4194, 5
        %v4197 = vor.u32 %v4193, %v4196
        %v4198 = vrot.slane %v4197, 4
        %v4200 = vshll.u32 %v4122, 16
        %v4202 = vrot.slane %v4200, 5
        %v4203 = vsel %vm221, %v4198, %v4202
        %v4204 = vshrl.u32 %v4122, 16
        %v4206 = vrot.slane %v4204, 4
        %v4207 = vor.u32 %v4206, %v4202
        %v4208 = vrot.slane %v4207, 4
        %v4210 = vshll.u32 %v4123, 16
        %v4212 = vrot.slane %v4210, 5
        %v4213 = vsel %vm221, %v4208, %v4212
        %v4215 = vshrl.u32 %v4124, 16
        %v4217 = vrot.slane %v4215, 4
        %v4218 = vshll.u32 %v4124, 16
        %v4220 = vrot.slane %v4218, 5
        %v4221 = vor.u32 %v4217, %v4220
        %v4222 = vrot.slane %v4221, 4
        %v4224 = vshll.u32 %v4125, 16
        %v4226 = vrot.slane %v4224, 5
        %v4227 = vsel %vm221, %v4222, %v4226
        %v4228 = vshrl.u32 %v4125, 16
        %v4230 = vrot.slane %v4228, 4
        %v4231 = vor.u32 %v4230, %v4226
        %v4232 = vrot.slane %v4231, 4
        %v4234 = vshll.u32 %v4126, 16
        %v4236 = vrot.slane %v4234, 5
        %v4237 = vsel %vm221, %v4232, %v4236
        %v4239 = vshrl.u32 %v4127, 16
        %v4241 = vrot.slane %v4239, 4
        %v4242 = vshll.u32 %v4127, 16
        %v4244 = vrot.slane %v4242, 5
        %v4245 = vor.u32 %v4241, %v4244
        %v4246 = vrot.slane %v4245, 4
        %v4248 = vshll.u32 %v4128, 16
        %v4250 = vrot.slane %v4248, 5
        %v4251 = vsel %vm221, %v4246, %v4250
        %v4252 = vshrl.u32 %v4128, 16
        %v4254 = vrot.slane %v4252, 4
        %v4255 = vor.u32 %v4254, %v4250
        %v4256 = vrot.slane %v4255, 4
        %v4258 = vshll.u32 %v4129, 16
        %v4260 = vrot.slane %v4258, 5
        %v4261 = vsel %vm221, %v4256, %v4260
        %v4263 = vshrl.u32 %v4130, 16
        %v4265 = vrot.slane %v4263, 4
        %v4266 = vshll.u32 %v4130, 16
        %v4268 = vrot.slane %v4266, 5
        %v4269 = vor.u32 %v4265, %v4268
        %v4270 = vrot.slane %v4269, 4
        %v4272 = vshll.u32 %v4131, 16
        %v4274 = vrot.slane %v4272, 5
        %v4275 = vsel %vm221, %v4270, %v4274
        %v4276 = vshrl.u32 %v4131, 16
        %v4278 = vrot.slane %v4276, 4
        %v4279 = vor.u32 %v4278, %v4274
        %v4280 = vrot.slane %v4279, 4
        %v4282 = vshll.u32 %v4132, 16
        %v4284 = vrot.slane %v4282, 5
        %v4285 = vsel %vm221, %v4280, %v4284
        %v4287 = vshrl.u32 %v4133, 16
        %v4289 = vrot.slane %v4287, 4
        %v4290 = vshll.u32 %v4133, 16
        %v4292 = vrot.slane %v4290, 5
        %v4293 = vor.u32 %v4289, %v4292
        %v4294 = vrot.slane %v4293, 4
        %v4296 = vshll.u32 %v4134, 16
        %v4298 = vrot.slane %v4296, 5
        %v4299 = vsel %vm221, %v4294, %v4298
        %v4300 = vshrl.u32 %v4134, 16
        %v4302 = vrot.slane %v4300, 4
        %v4303 = vor.u32 %v4302, %v4298
        %v4304 = vrot.slane %v4303, 4
        %v4306 = vshll.u32 %v4135, 16
        %v4308 = vrot.slane %v4306, 5
        %v4309 = vsel %vm221, %v4304, %v4308
        %v4311 = vshrl.u32 %v4136, 16
        %v4313 = vrot.slane %v4311, 4
        %v4314 = vshll.u32 %v4136, 16
        %v4316 = vrot.slane %v4314, 5
        %v4317 = vor.u32 %v4313, %v4316
        %v4318 = vrot.slane %v4317, 4
        %v4320 = vshll.u32 %v4137, 16
        %v4322 = vrot.slane %v4320, 5
        %v4323 = vsel %vm221, %v4318, %v4322
        %v4324 = vshrl.u32 %v4137, 16
        %v4326 = vrot.slane %v4324, 4
        %v4327 = vor.u32 %v4326, %v4322
        %v4328 = vrot.slane %v4327, 4
        %v4330 = vshll.u32 %v4138, 16
        %v4332 = vrot.slane %v4330, 5
        %v4333 = vsel %vm221, %v4328, %v4332
        %v4335 = vshrl.u32 %v4139, 16
        %v4337 = vrot.slane %v4335, 4
        %v4338 = vshll.u32 %v4139, 16
        %v4340 = vrot.slane %v4338, 5
        %v4341 = vor.u32 %v4337, %v4340
        %v4342 = vrot.slane %v4341, 4
        %v4344 = vshll.u32 %v4140, 16
        %v4346 = vrot.slane %v4344, 5
        %v4347 = vsel %vm221, %v4342, %v4346
        %v4348 = vshrl.u32 %v4140, 16
        %v4350 = vrot.slane %v4348, 4
        %v4351 = vor.u32 %v4350, %v4346
        %v4352 = vrot.slane %v4351, 4
        %v4354 = vshll.u32 %v4141, 16
        %v4356 = vrot.slane %v4354, 5
        %v4357 = vsel %vm221, %v4352, %v4356
        %v4359 = vshrl.u32 %v4142, 16
        %v4361 = vrot.slane %v4359, 4
        %v4362 = vshll.u32 %v4142, 16
        %v4364 = vrot.slane %v4362, 5
        %v4365 = vor.u32 %v4361, %v4364
        %v4366 = vrot.slane %v4365, 4
        %v4368 = vshll.u32 %v4143, 16
        %v4370 = vrot.slane %v4368, 5
        %v4371 = vsel %vm221, %v4366, %v4370
        %v4372 = vshrl.u32 %v4143, 16
        %v4374 = vrot.slane %v4372, 4
        %v4375 = vor.u32 %v4374, %v4370
        %v4376 = vrot.slane %v4375, 4
        %v4378 = vshll.u32 %v4144, 16
        %v4380 = vrot.slane %v4378, 5
        %v4381 = vsel %vm221, %v4376, %v4380
        %v4383 = vshrl.u32 %v4145, 16
        %v4385 = vrot.slane %v4383, 4
        %v4386 = vshll.u32 %v4145, 16
        %v4388 = vrot.slane %v4386, 5
        %v4389 = vor.u32 %v4385, %v4388
        %v4390 = vrot.slane %v4389, 4
        %v4392 = vshll.u32 %v4146, 16
        %v4394 = vrot.slane %v4392, 5
        %v4395 = vsel %vm221, %v4390, %v4394
        %v4396 = vshrl.u32 %v4146, 16
        %v4398 = vrot.slane %v4396, 4
        %v4399 = vor.u32 %v4398, %v4394
        %v4400 = vrot.slane %v4399, 4
        %v4402 = vshll.u32 %v4147, 16
        %v4404 = vrot.slane %v4402, 5
        %v4405 = vsel %vm221, %v4400, %v4404
        %v4407 = vshrl.u32 %v4148, 16
        %v4409 = vrot.slane %v4407, 4
        %v4410 = vshll.u32 %v4148, 16
        %v4412 = vrot.slane %v4410, 5
        %v4413 = vor.u32 %v4409, %v4412
        %v4414 = vrot.slane %v4413, 4
        %v4416 = vshll.u32 %v4149, 16
        %v4418 = vrot.slane %v4416, 5
        %v4419 = vsel %vm221, %v4414, %v4418
        %v4420 = vshrl.u32 %v4149, 16
        %v4422 = vrot.slane %v4420, 4
        %v4423 = vor.u32 %v4422, %v4418
        %v4424 = vrot.slane %v4423, 4
        %v4426 = vshll.u32 %v4150, 16
        %v4428 = vrot.slane %v4426, 5
        %v4429 = vsel %vm221, %v4424, %v4428
        %v4431 = vshrl.u32 %v4151, 16
        %v4433 = vrot.slane %v4431, 4
        %v4434 = vshll.u32 %v4151, 16
        %v4436 = vrot.slane %v4434, 5
        %v4437 = vor.u32 %v4433, %v4436
        %v4438 = vrot.slane %v4437, 4
        %v4440 = vshll.u32 %v4152, 16
        %v4442 = vrot.slane %v4440, 5
        %v4443 = vsel %vm221, %v4438, %v4442
        %v4444 = vshrl.u32 %v4152, 16
        %v4446 = vrot.slane %v4444, 4
        %v4447 = vor.u32 %v4446, %v4442
        %v4448 = vrot.slane %v4447, 4
        %v4450 = vshll.u32 %v4153, 16
        %v4452 = vrot.slane %v4450, 5
        %v4453 = vsel %vm221, %v4448, %v4452
        %v4455 = vshrl.u32 %v4154, 16
        %v4457 = vrot.slane %v4455, 4
        %v4458 = vshll.u32 %v4154, 16
        %v4460 = vrot.slane %v4458, 5
        %v4461 = vor.u32 %v4457, %v4460
        %v4462 = vrot.slane %v4461, 4
        %v4464 = vshll.u32 %v4155, 16
        %v4466 = vrot.slane %v4464, 5
        %v4467 = vsel %vm221, %v4462, %v4466
        %v4468 = vshrl.u32 %v4155, 16
        %v4470 = vrot.slane %v4468, 4
        %v4471 = vor.u32 %v4470, %v4466
        %v4472 = vrot.slane %v4471, 4
        %v4474 = vshll.u32 %v4156, 16
        %v4476 = vrot.slane %v4474, 5
        %v4477 = vsel %vm221, %v4472, %v4476
        %v4479 = vshrl.u32 %v4157, 16
        %v4481 = vrot.slane %v4479, 4
        %v4482 = vshll.u32 %v4157, 16
        %v4484 = vrot.slane %v4482, 5
        %v4485 = vor.u32 %v4481, %v4484
        %v4486 = vrot.slane %v4485, 4
        %v4488 = vshll.u32 %v4158, 16
        %v4490 = vrot.slane %v4488, 5
        %v4491 = vsel %vm221, %v4486, %v4490
        %v4492 = vshrl.u32 %v4158, 16
        %v4494 = vrot.slane %v4492, 4
        %v4495 = vor.u32 %v4494, %v4490
        %v4496 = vrot.slane %v4495, 4
        %v4498 = vshll.u32 %v4159, 16
        %v4500 = vrot.slane %v4498, 5
        %v4501 = vsel %vm221, %v4496, %v4500
        %v4503 = vshrl.u32 %v4160, 16
        %v4505 = vrot.slane %v4503, 4
        %v4506 = vshll.u32 %v4160, 16
        %v4508 = vrot.slane %v4506, 5
        %v4509 = vor.u32 %v4505, %v4508
        %v4510 = vrot.slane %v4509, 4
        %v4512 = vshll.u32 %v4161, 16
        %v4514 = vrot.slane %v4512, 5
        %v4515 = vsel %vm221, %v4510, %v4514
        %v4516 = vshrl.u32 %v4161, 16
        %v4518 = vrot.slane %v4516, 4
        %v4519 = vor.u32 %v4518, %v4514
        %v4520 = vrot.slane %v4519, 4
        %v4522 = vshll.u32 %v4162, 16
        %v4524 = vrot.slane %v4522, 5
        %v4525 = vsel %vm221, %v4520, %v4524
        %v4527 = vshrl.u32 %v4163, 16
        %v4529 = vrot.slane %v4527, 4
        %v4530 = vshll.u32 %v4163, 16
        %v4532 = vrot.slane %v4530, 5
        %v4533 = vor.u32 %v4529, %v4532
        %v4534 = vrot.slane %v4533, 4
        %v4536 = vshll.u32 %v4164, 16
        %v4538 = vrot.slane %v4536, 5
        %v4539 = vsel %vm221, %v4534, %v4538
        %v4540 = vshrl.u32 %v4164, 16
        %v4542 = vrot.slane %v4540, 4
        %v4543 = vor.u32 %v4542, %v4538
        %v4544 = vrot.slane %v4543, 4
        %v4546 = vshll.u32 %v4165, 16
        %v4548 = vrot.slane %v4546, 5
        %v4549 = vsel %vm221, %v4544, %v4548
        %s4550 = scalar_lea.vmem %s1, 320
        %v4551 = vld [vmem:[%s4550] sm:$0xf]
        %v4552 = vld [vmem:[%s4550 + $0x4] sm:$0xf]
        %v4553 = vld [vmem:[%s4550 + $0x8] sm:$0xf]
        %v4554 = vld [vmem:[%s4550 + $0xc] sm:$0xf]
        %v4555 = vld [vmem:[%s4550 + $0x10] sm:$0xf]
        %v4556 = vld [vmem:[%s4550 + $0x14] sm:$0xf]
        %v4557 = vld [vmem:[%s4550 + $0x18] sm:$0xf]
        %v4558 = vld [vmem:[%s4550 + $0x1c] sm:$0xf]
        %v4559 = vunpack.c.l.b16 %v4179
        %v4560 = vunpack.c.l.b16 %v4189
        %v4561 = vunpack.c.l.b16 %v4203
        %v4562 = vunpack.c.l.b16 %v4213
        %v4563 = vunpack.c.l.b16 %v4227
        %v4564 = vunpack.c.l.b16 %v4237
        %v4565 = vunpack.c.l.b16 %v4251
        %v4566 = vunpack.c.l.b16 %v4261
        %v4567 = vunpack.c.l.b16 %v4275
        %v4568 = vunpack.c.l.b16 %v4285
        %v4569 = vunpack.c.l.b16 %v4299
        %v4570 = vunpack.c.l.b16 %v4309
        %v4571 = vunpack.c.l.b16 %v4323
        %v4572 = vunpack.c.l.b16 %v4333
        %v4573 = vunpack.c.l.b16 %v4347
        %v4574 = vunpack.c.l.b16 %v4357
        %v4575 = vunpack.c.l.b16 %v4371
        %v4576 = vunpack.c.l.b16 %v4381
        %v4577 = vunpack.c.l.b16 %v4395
        %v4578 = vunpack.c.l.b16 %v4405
        %v4579 = vunpack.c.l.b16 %v4419
        %v4580 = vunpack.c.l.b16 %v4429
        %v4581 = vunpack.c.l.b16 %v4443
        %v4582 = vunpack.c.l.b16 %v4453
        %v4583 = vunpack.c.l.b16 %v4467
        %v4584 = vunpack.c.l.b16 %v4477
        %v4585 = vunpack.c.l.b16 %v4491
        %v4586 = vunpack.c.l.b16 %v4501
        %v4587 = vunpack.c.l.b16 %v4515
        %v4588 = vunpack.c.l.b16 %v4525
        %v4589 = vunpack.c.l.b16 %v4539
        %v4590 = vunpack.c.l.b16 %v4549
        %v4591 = vpack.c.b16 %v4560, %v4559
        %v4592 = vpack.c.b16 %v4562, %v4561
        %v4593 = vpack.c.b16 %v4564, %v4563
        %v4594 = vpack.c.b16 %v4566, %v4565
        %v4595 = vpack.c.b16 %v4568, %v4567
        %v4596 = vpack.c.b16 %v4570, %v4569
        %v4597 = vpack.c.b16 %v4572, %v4571
        %v4598 = vpack.c.b16 %v4574, %v4573
        %v4599 = vpack.c.b16 %v4576, %v4575
        %v4600 = vpack.c.b16 %v4578, %v4577
        %v4601 = vpack.c.b16 %v4580, %v4579
        %v4602 = vpack.c.b16 %v4582, %v4581
        %v4603 = vpack.c.b16 %v4584, %v4583
        %v4604 = vpack.c.b16 %v4586, %v4585
        %v4605 = vpack.c.b16 %v4588, %v4587
        %v4606 = vpack.c.b16 %v4590, %v4589
        %v4615 = vunpack.c.l.b16 %v4551
        %v4616 = vunpack.c.l.b16 %v4552
        %v4617 = vunpack.c.l.b16 %v4553
        %v4618 = vunpack.c.l.b16 %v4554
        %v4619 = vunpack.c.l.b16 %v4555
        %v4620 = vunpack.c.l.b16 %v4556
        %v4621 = vunpack.c.l.b16 %v4557
        %v4622 = vunpack.c.l.b16 %v4558
        %v4623 = vpack.c.b16 %v4616, %v4615
        %v4624 = vpack.c.b16 %v4618, %v4617
        %v4625 = vpack.c.b16 %v4620, %v4619
        %v4626 = vpack.c.b16 %v4622, %v4621
        %v4632 = vsel %vm727, %v4591, 0
        %v4635 = vsel %vm727, %v4592, 0
        %v4638 = vsel %vm727, %v4593, 0
        %v4641 = vsel %vm727, %v4594, 0
        %v4644 = vsel %vm727, %v4595, 0
        %v4647 = vsel %vm727, %v4596, 0
        %v4650 = vsel %vm727, %v4597, 0
        %v4653 = vsel %vm727, %v4598, 0
        %v4656 = vsel %vm727, %v4599, 0
        %v4659 = vsel %vm727, %v4600, 0
        %v4662 = vsel %vm727, %v4601, 0
        %v4665 = vsel %vm727, %v4602, 0
        %v4668 = vsel %vm727, %v4603, 0
        %v4671 = vsel %vm727, %v4604, 0
        %v4674 = vsel %vm727, %v4605, 0
        %v4677 = vsel %vm727, %v4606, 0
        %4679 = vmatprep.subr.bf16.mxu0 0
        %4680 = vmatpush1.bf16.msra.mxu0 0
        %4681 = vmatprep.subr.bf16.mxu0 0
        %4682 = vmatpush1.bf16.msra.mxu0 0
        %4683 = vmatprep.subr.bf16.mxu0 0
        %4684 = vmatpush1.bf16.msra.mxu0 0
        %4685 = vmatprep.subr.bf16.mxu0 0
        %4686 = vmatpush1.bf16.msra.mxu0 0
        %4687 = vmatprep.subr.bf16.mxu0 0
        %4688 = vmatpush1.bf16.msra.mxu0 %v4626
        %4689 = vmatprep.subr.bf16.mxu0 0
        %4690 = vmatpush1.bf16.msra.mxu0 %v4625
        %4691 = vmatprep.subr.bf16.mxu0 0
        %4692 = vmatpush1.bf16.msra.mxu0 %v4624
        %4693 = vmatprep.subr.bf16.mxu0 0
        %4694 = vmatpush1.bf16.msra.mxu0 %v4623
        %4695 = vmatprep.subr.bf16.mxu0 0
        %4696 = vmatpush2.bf16.msra.mxu0 0
        %4697 = vmatprep.subr.bf16.mxu0 0
        %4698 = vmatpush2.bf16.msra.mxu0 0
        %4699 = vmatprep.subr.bf16.mxu0 0
        %4700 = vmatpush2.bf16.msra.mxu0 0
        %4701 = vmatprep.subr.bf16.mxu0 0
        %4702 = vmatpush2.bf16.msra.mxu0 0
        %4703 = vmatprep.subr.bf16.mxu0 0
        %4704 = vmatpush2.bf16.msra.mxu0 0
        %4705 = vmatprep.subr.bf16.mxu0 0
        %4706 = vmatpush2.bf16.msra.mxu0 0
        %4707 = vmatprep.subr.bf16.mxu0 0
        %4708 = vmatpush2.bf16.msra.mxu0 0
        %4709 = vmatprep.subr.bf16.mxu0 0
        %4710 = vmatpush2.bf16.msra.mxu0 0
        %4711 = vmatprep.mubr.bf16.mxu0 0
        %4712 = vmatmul.mubr.bf16.gmra.mxu0 %v4632
        %v4713 = vpop.f32.mrf.mxu0
        %v4714 = vadd.f32 0.0, %v4713
        %v4715 = vpop.f32.mrf.mxu0
        %v4716 = vpop.f32.mrf.mxu0
        %v4717 = vadd.f32 0.0, %v4716
        %v4718 = vpop.f32.mrf.mxu0
        %4719 = vmatprep.mubr.bf16.mxu0 0
        %4720 = vmatmul.mubr.bf16.gmra.mxu0 %v4635
        %v4721 = vpop.f32.mrf.mxu0
        %v4722 = vadd.f32 0.0, %v4721
        %v4723 = vpop.f32.mrf.mxu0
        %v4724 = vpop.f32.mrf.mxu0
        %v4725 = vadd.f32 0.0, %v4724
        %v4726 = vpop.f32.mrf.mxu0
        %4727 = vmatprep.mubr.bf16.mxu0 0
        %4728 = vmatmul.mubr.bf16.gmra.mxu0 %v4638
        %v4729 = vpop.f32.mrf.mxu0
        %v4730 = vadd.f32 0.0, %v4729
        %v4731 = vpop.f32.mrf.mxu0
        %v4732 = vpop.f32.mrf.mxu0
        %v4733 = vadd.f32 0.0, %v4732
        %v4734 = vpop.f32.mrf.mxu0
        %4735 = vmatprep.mubr.bf16.mxu0 0
        %4736 = vmatmul.mubr.bf16.gmra.mxu0 %v4641
        %v4737 = vpop.f32.mrf.mxu0
        %v4738 = vadd.f32 0.0, %v4737
        %v4739 = vpop.f32.mrf.mxu0
        %v4740 = vpop.f32.mrf.mxu0
        %v4741 = vadd.f32 0.0, %v4740
        %v4742 = vpop.f32.mrf.mxu0
        %4743 = vmatprep.mubr.bf16.mxu0 0
        %4744 = vmatmul.mubr.bf16.gmra.mxu0 %v4644
        %v4745 = vpop.f32.mrf.mxu0
        %v4746 = vadd.f32 0.0, %v4745
        %v4747 = vpop.f32.mrf.mxu0
        %v4748 = vpop.f32.mrf.mxu0
        %v4749 = vadd.f32 0.0, %v4748
        %v4750 = vpop.f32.mrf.mxu0
        %4751 = vmatprep.mubr.bf16.mxu0 0
        %4752 = vmatmul.mubr.bf16.gmra.mxu0 %v4647
        %v4753 = vpop.f32.mrf.mxu0
        %v4754 = vadd.f32 0.0, %v4753
        %v4755 = vpop.f32.mrf.mxu0
        %v4756 = vpop.f32.mrf.mxu0
        %v4757 = vadd.f32 0.0, %v4756
        %v4758 = vpop.f32.mrf.mxu0
        %4759 = vmatprep.mubr.bf16.mxu0 0
        %4760 = vmatmul.mubr.bf16.gmra.mxu0 %v4650
        %v4761 = vpop.f32.mrf.mxu0
        %v4762 = vadd.f32 0.0, %v4761
        %v4763 = vpop.f32.mrf.mxu0
        %v4764 = vpop.f32.mrf.mxu0
        %v4765 = vadd.f32 0.0, %v4764
        %v4766 = vpop.f32.mrf.mxu0
        %4767 = vmatprep.mubr.bf16.mxu0 0
        %4768 = vmatmul.mubr.bf16.gmra.mxu0 %v4653
        %v4769 = vpop.f32.mrf.mxu0
        %v4770 = vadd.f32 0.0, %v4769
        %v4771 = vpop.f32.mrf.mxu0
        %v4772 = vpop.f32.mrf.mxu0
        %v4773 = vadd.f32 0.0, %v4772
        %v4774 = vpop.f32.mrf.mxu0
        %4775 = vmatprep.mubr.bf16.mxu0 0
        %4776 = vmatmul.mubr.bf16.gmra.mxu0 %v4656
        %v4777 = vpop.f32.mrf.mxu0
        %v4778 = vadd.f32 0.0, %v4777
        %v4779 = vpop.f32.mrf.mxu0
        %v4780 = vpop.f32.mrf.mxu0
        %v4781 = vadd.f32 0.0, %v4780
        %v4782 = vpop.f32.mrf.mxu0
        %4783 = vmatprep.mubr.bf16.mxu0 0
        %4784 = vmatmul.mubr.bf16.gmra.mxu0 %v4659
        %v4785 = vpop.f32.mrf.mxu0
        %v4786 = vadd.f32 0.0, %v4785
        %v4787 = vpop.f32.mrf.mxu0
        %v4788 = vpop.f32.mrf.mxu0
        %v4789 = vadd.f32 0.0, %v4788
        %v4790 = vpop.f32.mrf.mxu0
        %4791 = vmatprep.mubr.bf16.mxu0 0
        %4792 = vmatmul.mubr.bf16.gmra.mxu0 %v4662
        %v4793 = vpop.f32.mrf.mxu0
        %v4794 = vadd.f32 0.0, %v4793
        %v4795 = vpop.f32.mrf.mxu0
        %v4796 = vpop.f32.mrf.mxu0
        %v4797 = vadd.f32 0.0, %v4796
        %v4798 = vpop.f32.mrf.mxu0
        %4799 = vmatprep.mubr.bf16.mxu0 0
        %4800 = vmatmul.mubr.bf16.gmra.mxu0 %v4665
        %v4801 = vpop.f32.mrf.mxu0
        %v4802 = vadd.f32 0.0, %v4801
        %v4803 = vpop.f32.mrf.mxu0
        %v4804 = vpop.f32.mrf.mxu0
        %v4805 = vadd.f32 0.0, %v4804
        %v4806 = vpop.f32.mrf.mxu0
        %4807 = vmatprep.mubr.bf16.mxu0 0
        %4808 = vmatmul.mubr.bf16.gmra.mxu0 %v4668
        %v4809 = vpop.f32.mrf.mxu0
        %v4810 = vadd.f32 0.0, %v4809
        %v4811 = vpop.f32.mrf.mxu0
        %v4812 = vpop.f32.mrf.mxu0
        %v4813 = vadd.f32 0.0, %v4812
        %v4814 = vpop.f32.mrf.mxu0
        %4815 = vmatprep.mubr.bf16.mxu0 0
        %4816 = vmatmul.mubr.bf16.gmra.mxu0 %v4671
        %v4817 = vpop.f32.mrf.mxu0
        %v4818 = vadd.f32 0.0, %v4817
        %v4819 = vpop.f32.mrf.mxu0
        %v4820 = vpop.f32.mrf.mxu0
        %v4821 = vadd.f32 0.0, %v4820
        %v4822 = vpop.f32.mrf.mxu0
        %4823 = vmatprep.mubr.bf16.mxu0 0
        %4824 = vmatmul.mubr.bf16.gmra.mxu0 %v4674
        %v4825 = vpop.f32.mrf.mxu0
        %v4826 = vadd.f32 0.0, %v4825
        %v4827 = vpop.f32.mrf.mxu0
        %v4828 = vpop.f32.mrf.mxu0
        %v4829 = vadd.f32 0.0, %v4828
        %v4830 = vpop.f32.mrf.mxu0
        %4831 = vmatprep.mubr.bf16.mxu0 0
        %4832 = vmatmul.mubr.bf16.gmra.mxu0 %v4677
        %v4833 = vpop.f32.mrf.mxu0
        %v4834 = vadd.f32 0.0, %v4833
        %v4835 = vpop.f32.mrf.mxu0
        %v4836 = vpop.f32.mrf.mxu0
        %v4837 = vadd.f32 0.0, %v4836
        %v4838 = vpop.f32.mrf.mxu0
        %4839 = vdwg.mxu0
        %v4840 = vadd.f32 %v3991, %v4714
        %v4841 = vadd.f32 %v3994, %v4717
        %v4842 = vadd.f32 %v3999, %v4722
        %v4843 = vadd.f32 %v4002, %v4725
        %v4844 = vadd.f32 %v4007, %v4730
        %v4845 = vadd.f32 %v4010, %v4733
        %v4846 = vadd.f32 %v4015, %v4738
        %v4847 = vadd.f32 %v4018, %v4741
        %v4848 = vadd.f32 %v4023, %v4746
        %v4849 = vadd.f32 %v4026, %v4749
        %v4850 = vadd.f32 %v4031, %v4754
        %v4851 = vadd.f32 %v4034, %v4757
        %v4852 = vadd.f32 %v4039, %v4762
        %v4853 = vadd.f32 %v4042, %v4765
        %v4854 = vadd.f32 %v4047, %v4770
        %v4855 = vadd.f32 %v4050, %v4773
        %v4856 = vadd.f32 %v4055, %v4778
        %v4857 = vadd.f32 %v4058, %v4781
        %v4858 = vadd.f32 %v4063, %v4786
        %v4859 = vadd.f32 %v4066, %v4789
        %v4860 = vadd.f32 %v4071, %v4794
        %v4861 = vadd.f32 %v4074, %v4797
        %v4862 = vadd.f32 %v4079, %v4802
        %v4863 = vadd.f32 %v4082, %v4805
        %v4864 = vadd.f32 %v4087, %v4810
        %v4865 = vadd.f32 %v4090, %v4813
        %v4866 = vadd.f32 %v4095, %v4818
        %v4867 = vadd.f32 %v4098, %v4821
        %v4868 = vadd.f32 %v4103, %v4826
        %v4869 = vadd.f32 %v4106, %v4829
        %v4870 = vadd.f32 %v4111, %v4834
        %v4871 = vadd.f32 %v4114, %v4837
        %v4872 = vld [vmem:[%s4117] sm:$0xf]
        %v4873 = vld [vmem:[%s4117 + $0x4] sm:$0xf]
        %v4874 = vld [vmem:[%s4117 + $0xc] sm:$0xf]
        %v4875 = vld [vmem:[%s4117 + $0x10] sm:$0xf]
        %v4876 = vld [vmem:[%s4117 + $0x18] sm:$0xf]
        %v4877 = vld [vmem:[%s4117 + $0x1c] sm:$0xf]
        %v4878 = vld [vmem:[%s4117 + $0x24] sm:$0xf]
        %v4879 = vld [vmem:[%s4117 + $0x28] sm:$0xf]
        %v4880 = vld [vmem:[%s4117 + $0x30] sm:$0xf]
        %v4881 = vld [vmem:[%s4117 + $0x34] sm:$0xf]
        %v4882 = vld [vmem:[%s4117 + $0x3c] sm:$0xf]
        %v4883 = vld [vmem:[%s4117 + $0x40] sm:$0xf]
        %v4884 = vld [vmem:[%s4117 + $0x48] sm:$0xf]
        %v4885 = vld [vmem:[%s4117 + $0x4c] sm:$0xf]
        %v4886 = vld [vmem:[%s4117 + $0x54] sm:$0xf]
        %v4887 = vld [vmem:[%s4117 + $0x58] sm:$0xf]
        %v4888 = vld [vmem:[%s4117 + $0x60] sm:$0xf]
        %v4889 = vld [vmem:[%s4117 + $0x64] sm:$0xf]
        %v4890 = vld [vmem:[%s4117 + $0x6c] sm:$0xf]
        %v4891 = vld [vmem:[%s4117 + $0x70] sm:$0xf]
        %v4892 = vld [vmem:[%s4117 + $0x78] sm:$0xf]
        %v4893 = vld [vmem:[%s4117 + $0x7c] sm:$0xf]
        %v4894 = vld [vmem:[%s4117 + $0x84] sm:$0xf]
        %v4895 = vld [vmem:[%s4117 + $0x88] sm:$0xf]
        %v4896 = vld [vmem:[%s4117 + $0x90] sm:$0xf]
        %v4897 = vld [vmem:[%s4117 + $0x94] sm:$0xf]
        %v4898 = vld [vmem:[%s4117 + $0x9c] sm:$0xf]
        %v4899 = vld [vmem:[%s4117 + $0xa0] sm:$0xf]
        %v4900 = vld [vmem:[%s4117 + $0xa8] sm:$0xf]
        %v4901 = vld [vmem:[%s4117 + $0xac] sm:$0xf]
        %v4902 = vld [vmem:[%s4117 + $0xb4] sm:$0xf]
        %v4903 = vld [vmem:[%s4117 + $0xb8] sm:$0xf]
        %s4904 = scalar_lea.vmem %s1, 352
        %v4905 = vld [vmem:[%s4904] sm:$0xf]
        %v4906 = vld [vmem:[%s4904 + $0x4] sm:$0xf]
        %v4907 = vld [vmem:[%s4904 + $0x8] sm:$0xf]
        %v4908 = vld [vmem:[%s4904 + $0xc] sm:$0xf]
        %v4909 = vld [vmem:[%s4904 + $0x10] sm:$0xf]
        %v4910 = vld [vmem:[%s4904 + $0x14] sm:$0xf]
        %v4911 = vld [vmem:[%s4904 + $0x18] sm:$0xf]
        %v4912 = vld [vmem:[%s4904 + $0x1c] sm:$0xf]
        %v4945 = vunpack.c.l.b16 %v4872
        %v4946 = vunpack.c.l.b16 %v4873
        %v4947 = vunpack.c.l.b16 %v4874
        %v4948 = vunpack.c.l.b16 %v4875
        %v4949 = vunpack.c.l.b16 %v4876
        %v4950 = vunpack.c.l.b16 %v4877
        %v4951 = vunpack.c.l.b16 %v4878
        %v4952 = vunpack.c.l.b16 %v4879
        %v4953 = vunpack.c.l.b16 %v4880
        %v4954 = vunpack.c.l.b16 %v4881
        %v4955 = vunpack.c.l.b16 %v4882
        %v4956 = vunpack.c.l.b16 %v4883
        %v4957 = vunpack.c.l.b16 %v4884
        %v4958 = vunpack.c.l.b16 %v4885
        %v4959 = vunpack.c.l.b16 %v4886
        %v4960 = vunpack.c.l.b16 %v4887
        %v4961 = vunpack.c.l.b16 %v4888
        %v4962 = vunpack.c.l.b16 %v4889
        %v4963 = vunpack.c.l.b16 %v4890
        %v4964 = vunpack.c.l.b16 %v4891
        %v4965 = vunpack.c.l.b16 %v4892
        %v4966 = vunpack.c.l.b16 %v4893
        %v4967 = vunpack.c.l.b16 %v4894
        %v4968 = vunpack.c.l.b16 %v4895
        %v4969 = vunpack.c.l.b16 %v4896
        %v4970 = vunpack.c.l.b16 %v4897
        %v4971 = vunpack.c.l.b16 %v4898
        %v4972 = vunpack.c.l.b16 %v4899
        %v4973 = vunpack.c.l.b16 %v4900
        %v4974 = vunpack.c.l.b16 %v4901
        %v4975 = vunpack.c.l.b16 %v4902
        %v4976 = vunpack.c.l.b16 %v4903
        %v4977 = vpack.c.b16 %v4946, %v4945
        %v4978 = vpack.c.b16 %v4948, %v4947
        %v4979 = vpack.c.b16 %v4950, %v4949
        %v4980 = vpack.c.b16 %v4952, %v4951
        %v4981 = vpack.c.b16 %v4954, %v4953
        %v4982 = vpack.c.b16 %v4956, %v4955
        %v4983 = vpack.c.b16 %v4958, %v4957
        %v4984 = vpack.c.b16 %v4960, %v4959
        %v4985 = vpack.c.b16 %v4962, %v4961
        %v4986 = vpack.c.b16 %v4964, %v4963
        %v4987 = vpack.c.b16 %v4966, %v4965
        %v4988 = vpack.c.b16 %v4968, %v4967
        %v4989 = vpack.c.b16 %v4970, %v4969
        %v4990 = vpack.c.b16 %v4972, %v4971
        %v4991 = vpack.c.b16 %v4974, %v4973
        %v4992 = vpack.c.b16 %v4976, %v4975
        %v5001 = vunpack.c.l.b16 %v4905
        %v5002 = vunpack.c.l.b16 %v4906
        %v5003 = vunpack.c.l.b16 %v4907
        %v5004 = vunpack.c.l.b16 %v4908
        %v5005 = vunpack.c.l.b16 %v4909
        %v5006 = vunpack.c.l.b16 %v4910
        %v5007 = vunpack.c.l.b16 %v4911
        %v5008 = vunpack.c.l.b16 %v4912
        %v5009 = vpack.c.b16 %v5002, %v5001
        %v5010 = vpack.c.b16 %v5004, %v5003
        %v5011 = vpack.c.b16 %v5006, %v5005
        %v5012 = vpack.c.b16 %v5008, %v5007
        %v5018 = vsel %vm727, %v4977, 0
        %v5021 = vsel %vm727, %v4978, 0
        %v5024 = vsel %vm727, %v4979, 0
        %v5027 = vsel %vm727, %v4980, 0
        %v5030 = vsel %vm727, %v4981, 0
        %v5033 = vsel %vm727, %v4982, 0
        %v5036 = vsel %vm727, %v4983, 0
        %v5039 = vsel %vm727, %v4984, 0
        %v5042 = vsel %vm727, %v4985, 0
        %v5045 = vsel %vm727, %v4986, 0
        %v5048 = vsel %vm727, %v4987, 0
        %v5051 = vsel %vm727, %v4988, 0
        %v5054 = vsel %vm727, %v4989, 0
        %v5057 = vsel %vm727, %v4990, 0
        %v5060 = vsel %vm727, %v4991, 0
        %v5063 = vsel %vm727, %v4992, 0
        %5065 = vmatprep.subr.bf16.mxu0 0
        %5066 = vmatpush1.bf16.msra.mxu0 0
        %5067 = vmatprep.subr.bf16.mxu0 0
        %5068 = vmatpush1.bf16.msra.mxu0 0
        %5069 = vmatprep.subr.bf16.mxu0 0
        %5070 = vmatpush1.bf16.msra.mxu0 0
        %5071 = vmatprep.subr.bf16.mxu0 0
        %5072 = vmatpush1.bf16.msra.mxu0 0
        %5073 = vmatprep.subr.bf16.mxu0 0
        %5074 = vmatpush1.bf16.msra.mxu0 %v5012
        %5075 = vmatprep.subr.bf16.mxu0 0
        %5076 = vmatpush1.bf16.msra.mxu0 %v5011
        %5077 = vmatprep.subr.bf16.mxu0 0
        %5078 = vmatpush1.bf16.msra.mxu0 %v5010
        %5079 = vmatprep.subr.bf16.mxu0 0
        %5080 = vmatpush1.bf16.msra.mxu0 %v5009
        %5081 = vmatprep.subr.bf16.mxu0 0
        %5082 = vmatpush2.bf16.msra.mxu0 0
        %5083 = vmatprep.subr.bf16.mxu0 0
        %5084 = vmatpush2.bf16.msra.mxu0 0
        %5085 = vmatprep.subr.bf16.mxu0 0
        %5086 = vmatpush2.bf16.msra.mxu0 0
        %5087 = vmatprep.subr.bf16.mxu0 0
        %5088 = vmatpush2.bf16.msra.mxu0 0
        %5089 = vmatprep.subr.bf16.mxu0 0
        %5090 = vmatpush2.bf16.msra.mxu0 0
        %5091 = vmatprep.subr.bf16.mxu0 0
        %5092 = vmatpush2.bf16.msra.mxu0 0
        %5093 = vmatprep.subr.bf16.mxu0 0
        %5094 = vmatpush2.bf16.msra.mxu0 0
        %5095 = vmatprep.subr.bf16.mxu0 0
        %5096 = vmatpush2.bf16.msra.mxu0 0
        %5097 = vmatprep.mubr.bf16.mxu0 0
        %5098 = vmatmul.mubr.bf16.gmra.mxu0 %v5018
        %v5099 = vpop.f32.mrf.mxu0
        %v5100 = vadd.f32 0.0, %v5099
        %v5101 = vpop.f32.mrf.mxu0
        %v5102 = vpop.f32.mrf.mxu0
        %v5103 = vadd.f32 0.0, %v5102
        %v5104 = vpop.f32.mrf.mxu0
        %5105 = vmatprep.mubr.bf16.mxu0 0
        %5106 = vmatmul.mubr.bf16.gmra.mxu0 %v5021
        %v5107 = vpop.f32.mrf.mxu0
        %v5108 = vadd.f32 0.0, %v5107
        %v5109 = vpop.f32.mrf.mxu0
        %v5110 = vpop.f32.mrf.mxu0
        %v5111 = vadd.f32 0.0, %v5110
        %v5112 = vpop.f32.mrf.mxu0
        %5113 = vmatprep.mubr.bf16.mxu0 0
        %5114 = vmatmul.mubr.bf16.gmra.mxu0 %v5024
        %v5115 = vpop.f32.mrf.mxu0
        %v5116 = vadd.f32 0.0, %v5115
        %v5117 = vpop.f32.mrf.mxu0
        %v5118 = vpop.f32.mrf.mxu0
        %v5119 = vadd.f32 0.0, %v5118
        %v5120 = vpop.f32.mrf.mxu0
        %5121 = vmatprep.mubr.bf16.mxu0 0
        %5122 = vmatmul.mubr.bf16.gmra.mxu0 %v5027
        %v5123 = vpop.f32.mrf.mxu0
        %v5124 = vadd.f32 0.0, %v5123
        %v5125 = vpop.f32.mrf.mxu0
        %v5126 = vpop.f32.mrf.mxu0
        %v5127 = vadd.f32 0.0, %v5126
        %v5128 = vpop.f32.mrf.mxu0
        %5129 = vmatprep.mubr.bf16.mxu0 0
        %5130 = vmatmul.mubr.bf16.gmra.mxu0 %v5030
        %v5131 = vpop.f32.mrf.mxu0
        %v5132 = vadd.f32 0.0, %v5131
        %v5133 = vpop.f32.mrf.mxu0
        %v5134 = vpop.f32.mrf.mxu0
        %v5135 = vadd.f32 0.0, %v5134
        %v5136 = vpop.f32.mrf.mxu0
        %5137 = vmatprep.mubr.bf16.mxu0 0
        %5138 = vmatmul.mubr.bf16.gmra.mxu0 %v5033
        %v5139 = vpop.f32.mrf.mxu0
        %v5140 = vadd.f32 0.0, %v5139
        %v5141 = vpop.f32.mrf.mxu0
        %v5142 = vpop.f32.mrf.mxu0
        %v5143 = vadd.f32 0.0, %v5142
        %v5144 = vpop.f32.mrf.mxu0
        %5145 = vmatprep.mubr.bf16.mxu0 0
        %5146 = vmatmul.mubr.bf16.gmra.mxu0 %v5036
        %v5147 = vpop.f32.mrf.mxu0
        %v5148 = vadd.f32 0.0, %v5147
        %v5149 = vpop.f32.mrf.mxu0
        %v5150 = vpop.f32.mrf.mxu0
        %v5151 = vadd.f32 0.0, %v5150
        %v5152 = vpop.f32.mrf.mxu0
        %5153 = vmatprep.mubr.bf16.mxu0 0
        %5154 = vmatmul.mubr.bf16.gmra.mxu0 %v5039
        %v5155 = vpop.f32.mrf.mxu0
        %v5156 = vadd.f32 0.0, %v5155
        %v5157 = vpop.f32.mrf.mxu0
        %v5158 = vpop.f32.mrf.mxu0
        %v5159 = vadd.f32 0.0, %v5158
        %v5160 = vpop.f32.mrf.mxu0
        %5161 = vmatprep.mubr.bf16.mxu0 0
        %5162 = vmatmul.mubr.bf16.gmra.mxu0 %v5042
        %v5163 = vpop.f32.mrf.mxu0
        %v5164 = vadd.f32 0.0, %v5163
        %v5165 = vpop.f32.mrf.mxu0
        %v5166 = vpop.f32.mrf.mxu0
        %v5167 = vadd.f32 0.0, %v5166
        %v5168 = vpop.f32.mrf.mxu0
        %5169 = vmatprep.mubr.bf16.mxu0 0
        %5170 = vmatmul.mubr.bf16.gmra.mxu0 %v5045
        %v5171 = vpop.f32.mrf.mxu0
        %v5172 = vadd.f32 0.0, %v5171
        %v5173 = vpop.f32.mrf.mxu0
        %v5174 = vpop.f32.mrf.mxu0
        %v5175 = vadd.f32 0.0, %v5174
        %v5176 = vpop.f32.mrf.mxu0
        %5177 = vmatprep.mubr.bf16.mxu0 0
        %5178 = vmatmul.mubr.bf16.gmra.mxu0 %v5048
        %v5179 = vpop.f32.mrf.mxu0
        %v5180 = vadd.f32 0.0, %v5179
        %v5181 = vpop.f32.mrf.mxu0
        %v5182 = vpop.f32.mrf.mxu0
        %v5183 = vadd.f32 0.0, %v5182
        %v5184 = vpop.f32.mrf.mxu0
        %5185 = vmatprep.mubr.bf16.mxu0 0
        %5186 = vmatmul.mubr.bf16.gmra.mxu0 %v5051
        %v5187 = vpop.f32.mrf.mxu0
        %v5188 = vadd.f32 0.0, %v5187
        %v5189 = vpop.f32.mrf.mxu0
        %v5190 = vpop.f32.mrf.mxu0
        %v5191 = vadd.f32 0.0, %v5190
        %v5192 = vpop.f32.mrf.mxu0
        %5193 = vmatprep.mubr.bf16.mxu0 0
        %5194 = vmatmul.mubr.bf16.gmra.mxu0 %v5054
        %v5195 = vpop.f32.mrf.mxu0
        %v5196 = vadd.f32 0.0, %v5195
        %v5197 = vpop.f32.mrf.mxu0
        %v5198 = vpop.f32.mrf.mxu0
        %v5199 = vadd.f32 0.0, %v5198
        %v5200 = vpop.f32.mrf.mxu0
        %5201 = vmatprep.mubr.bf16.mxu0 0
        %5202 = vmatmul.mubr.bf16.gmra.mxu0 %v5057
        %v5203 = vpop.f32.mrf.mxu0
        %v5204 = vadd.f32 0.0, %v5203
        %v5205 = vpop.f32.mrf.mxu0
        %v5206 = vpop.f32.mrf.mxu0
        %v5207 = vadd.f32 0.0, %v5206
        %v5208 = vpop.f32.mrf.mxu0
        %5209 = vmatprep.mubr.bf16.mxu0 0
        %5210 = vmatmul.mubr.bf16.gmra.mxu0 %v5060
        %v5211 = vpop.f32.mrf.mxu0
        %v5212 = vadd.f32 0.0, %v5211
        %v5213 = vpop.f32.mrf.mxu0
        %v5214 = vpop.f32.mrf.mxu0
        %v5215 = vadd.f32 0.0, %v5214
        %v5216 = vpop.f32.mrf.mxu0
        %5217 = vmatprep.mubr.bf16.mxu0 0
        %5218 = vmatmul.mubr.bf16.gmra.mxu0 %v5063
        %v5219 = vpop.f32.mrf.mxu0
        %v5220 = vadd.f32 0.0, %v5219
        %v5221 = vpop.f32.mrf.mxu0
        %v5222 = vpop.f32.mrf.mxu0
        %v5223 = vadd.f32 0.0, %v5222
        %v5224 = vpop.f32.mrf.mxu0
        %5225 = vdwg.mxu0
        %v5226 = vadd.f32 %v4840, %v5100
        %v5227 = vadd.f32 %v4841, %v5103
        %v5228 = vadd.f32 %v4842, %v5108
        %v5229 = vadd.f32 %v4843, %v5111
        %v5230 = vadd.f32 %v4844, %v5116
        %v5231 = vadd.f32 %v4845, %v5119
        %v5232 = vadd.f32 %v4846, %v5124
        %v5233 = vadd.f32 %v4847, %v5127
        %v5234 = vadd.f32 %v4848, %v5132
        %v5235 = vadd.f32 %v4849, %v5135
        %v5236 = vadd.f32 %v4850, %v5140
        %v5237 = vadd.f32 %v4851, %v5143
        %v5238 = vadd.f32 %v4852, %v5148
        %v5239 = vadd.f32 %v4853, %v5151
        %v5240 = vadd.f32 %v4854, %v5156
        %v5241 = vadd.f32 %v4855, %v5159
        %v5242 = vadd.f32 %v4856, %v5164
        %v5243 = vadd.f32 %v4857, %v5167
        %v5244 = vadd.f32 %v4858, %v5172
        %v5245 = vadd.f32 %v4859, %v5175
        %v5246 = vadd.f32 %v4860, %v5180
        %v5247 = vadd.f32 %v4861, %v5183
        %v5248 = vadd.f32 %v4862, %v5188
        %v5249 = vadd.f32 %v4863, %v5191
        %v5250 = vadd.f32 %v4864, %v5196
        %v5251 = vadd.f32 %v4865, %v5199
        %v5252 = vadd.f32 %v4866, %v5204
        %v5253 = vadd.f32 %v4867, %v5207
        %v5254 = vadd.f32 %v4868, %v5212
        %v5255 = vadd.f32 %v4869, %v5215
        %v5256 = vadd.f32 %v4870, %v5220
        %v5257 = vadd.f32 %v4871, %v5223
        %s5258 = scalar_lea.vmem %s1, 384
        %v5259 = vld [vmem:[%s5258] sm:$0xf]
        %v5260 = vld [vmem:[%s5258 + $0x4] sm:$0xf]
        %v5261 = vld [vmem:[%s5258 + $0x8] sm:$0xf]
        %v5262 = vld [vmem:[%s5258 + $0xc] sm:$0xf]
        %v5263 = vld [vmem:[%s5258 + $0x10] sm:$0xf]
        %v5264 = vld [vmem:[%s5258 + $0x14] sm:$0xf]
        %v5265 = vld [vmem:[%s5258 + $0x18] sm:$0xf]
        %v5266 = vld [vmem:[%s5258 + $0x1c] sm:$0xf]
        %s5267 = scalar_lea.vmem %s1, 416
        %v5268 = vld [vmem:[%s5267] sm:$0xf]
        %v5269 = vld [vmem:[%s5267 + $0x4] sm:$0xf]
        %v5270 = vld [vmem:[%s5267 + $0x8] sm:$0xf]
        %v5271 = vld [vmem:[%s5267 + $0xc] sm:$0xf]
        %v5272 = vld [vmem:[%s5267 + $0x10] sm:$0xf]
        %v5273 = vld [vmem:[%s5267 + $0x14] sm:$0xf]
        %v5274 = vld [vmem:[%s5267 + $0x18] sm:$0xf]
        %v5275 = vld [vmem:[%s5267 + $0x1c] sm:$0xf]
        %v5284 = vunpack.c.l.b16 %v5268
        %v5285 = vunpack.c.l.b16 %v5269
        %v5286 = vunpack.c.l.b16 %v5270
        %v5287 = vunpack.c.l.b16 %v5271
        %v5288 = vunpack.c.l.b16 %v5272
        %v5289 = vunpack.c.l.b16 %v5273
        %v5290 = vunpack.c.l.b16 %v5274
        %v5291 = vunpack.c.l.b16 %v5275
        %v5292 = vpack.c.b16 %v5285, %v5284
        %v5293 = vpack.c.b16 %v5287, %v5286
        %v5294 = vpack.c.b16 %v5289, %v5288
        %v5295 = vpack.c.b16 %v5291, %v5290
        %5300 = vmatprep.subr.bf16.mxu0 0
        %5301 = vmatpush1.bf16.msra.mxu0 0
        %5302 = vmatprep.subr.bf16.mxu0 0
        %5303 = vmatpush1.bf16.msra.mxu0 0
        %5304 = vmatprep.subr.bf16.mxu0 0
        %5305 = vmatpush1.bf16.msra.mxu0 0
        %5306 = vmatprep.subr.bf16.mxu0 0
        %5307 = vmatpush1.bf16.msra.mxu0 0
        %5308 = vmatprep.subr.bf16.mxu0 0
        %5309 = vmatpush1.bf16.msra.mxu0 %v5295
        %5310 = vmatprep.subr.bf16.mxu0 0
        %5311 = vmatpush1.bf16.msra.mxu0 %v5294
        %5312 = vmatprep.subr.bf16.mxu0 0
        %5313 = vmatpush1.bf16.msra.mxu0 %v5293
        %5314 = vmatprep.subr.bf16.mxu0 0
        %5315 = vmatpush1.bf16.msra.mxu0 %v5292
        %5316 = vmatprep.subr.bf16.mxu0 0
        %5317 = vmatpush2.bf16.msra.mxu0 0
        %5318 = vmatprep.subr.bf16.mxu0 0
        %5319 = vmatpush2.bf16.msra.mxu0 0
        %5320 = vmatprep.subr.bf16.mxu0 0
        %5321 = vmatpush2.bf16.msra.mxu0 0
        %5322 = vmatprep.subr.bf16.mxu0 0
        %5323 = vmatpush2.bf16.msra.mxu0 0
        %5324 = vmatprep.subr.bf16.mxu0 0
        %5325 = vmatpush2.bf16.msra.mxu0 0
        %5326 = vmatprep.subr.bf16.mxu0 0
        %5327 = vmatpush2.bf16.msra.mxu0 0
        %5328 = vmatprep.subr.bf16.mxu0 0
        %5329 = vmatpush2.bf16.msra.mxu0 0
        %5330 = vmatprep.subr.bf16.mxu0 0
        %5331 = vmatpush2.bf16.msra.mxu0 0
        %5332 = vmatprep.mubr.bf16.mxu0 0
        %5333 = vmatmul.mubr.bf16.gmra.mxu0 %v2612
        %v5334 = vpop.f32.mrf.mxu0
        %v5335 = vadd.f32 0.0, %v5334
        %v5336 = vpop.f32.mrf.mxu0
        %v5337 = vpop.f32.mrf.mxu0
        %v5338 = vadd.f32 0.0, %v5337
        %v5339 = vpop.f32.mrf.mxu0
        %5340 = vmatprep.mubr.bf16.mxu0 0
        %5341 = vmatmul.mubr.bf16.gmra.mxu0 %v2615
        %v5342 = vpop.f32.mrf.mxu0
        %v5343 = vadd.f32 0.0, %v5342
        %v5344 = vpop.f32.mrf.mxu0
        %v5345 = vpop.f32.mrf.mxu0
        %v5346 = vadd.f32 0.0, %v5345
        %v5347 = vpop.f32.mrf.mxu0
        %5348 = vmatprep.mubr.bf16.mxu0 0
        %5349 = vmatmul.mubr.bf16.gmra.mxu0 %v2618
        %v5350 = vpop.f32.mrf.mxu0
        %v5351 = vadd.f32 0.0, %v5350
        %v5352 = vpop.f32.mrf.mxu0
        %v5353 = vpop.f32.mrf.mxu0
        %v5354 = vadd.f32 0.0, %v5353
        %v5355 = vpop.f32.mrf.mxu0
        %5356 = vmatprep.mubr.bf16.mxu0 0
        %5357 = vmatmul.mubr.bf16.gmra.mxu0 %v2621
        %v5358 = vpop.f32.mrf.mxu0
        %v5359 = vadd.f32 0.0, %v5358
        %v5360 = vpop.f32.mrf.mxu0
        %v5361 = vpop.f32.mrf.mxu0
        %v5362 = vadd.f32 0.0, %v5361
        %v5363 = vpop.f32.mrf.mxu0
        %5364 = vmatprep.mubr.bf16.mxu0 0
        %5365 = vmatmul.mubr.bf16.gmra.mxu0 %v2624
        %v5366 = vpop.f32.mrf.mxu0
        %v5367 = vadd.f32 0.0, %v5366
        %v5368 = vpop.f32.mrf.mxu0
        %v5369 = vpop.f32.mrf.mxu0
        %v5370 = vadd.f32 0.0, %v5369
        %v5371 = vpop.f32.mrf.mxu0
        %5372 = vmatprep.mubr.bf16.mxu0 0
        %5373 = vmatmul.mubr.bf16.gmra.mxu0 %v2627
        %v5374 = vpop.f32.mrf.mxu0
        %v5375 = vadd.f32 0.0, %v5374
        %v5376 = vpop.f32.mrf.mxu0
        %v5377 = vpop.f32.mrf.mxu0
        %v5378 = vadd.f32 0.0, %v5377
        %v5379 = vpop.f32.mrf.mxu0
        %5380 = vmatprep.mubr.bf16.mxu0 0
        %5381 = vmatmul.mubr.bf16.gmra.mxu0 %v2630
        %v5382 = vpop.f32.mrf.mxu0
        %v5383 = vadd.f32 0.0, %v5382
        %v5384 = vpop.f32.mrf.mxu0
        %v5385 = vpop.f32.mrf.mxu0
        %v5386 = vadd.f32 0.0, %v5385
        %v5387 = vpop.f32.mrf.mxu0
        %5388 = vmatprep.mubr.bf16.mxu0 0
        %5389 = vmatmul.mubr.bf16.gmra.mxu0 %v2633
        %v5390 = vpop.f32.mrf.mxu0
        %v5391 = vadd.f32 0.0, %v5390
        %v5392 = vpop.f32.mrf.mxu0
        %v5393 = vpop.f32.mrf.mxu0
        %v5394 = vadd.f32 0.0, %v5393
        %v5395 = vpop.f32.mrf.mxu0
        %5396 = vmatprep.mubr.bf16.mxu0 0
        %5397 = vmatmul.mubr.bf16.gmra.mxu0 %v2636
        %v5398 = vpop.f32.mrf.mxu0
        %v5399 = vadd.f32 0.0, %v5398
        %v5400 = vpop.f32.mrf.mxu0
        %v5401 = vpop.f32.mrf.mxu0
        %v5402 = vadd.f32 0.0, %v5401
        %v5403 = vpop.f32.mrf.mxu0
        %5404 = vmatprep.mubr.bf16.mxu0 0
        %5405 = vmatmul.mubr.bf16.gmra.mxu0 %v2639
        %v5406 = vpop.f32.mrf.mxu0
        %v5407 = vadd.f32 0.0, %v5406
        %v5408 = vpop.f32.mrf.mxu0
        %v5409 = vpop.f32.mrf.mxu0
        %v5410 = vadd.f32 0.0, %v5409
        %v5411 = vpop.f32.mrf.mxu0
        %5412 = vmatprep.mubr.bf16.mxu0 0
        %5413 = vmatmul.mubr.bf16.gmra.mxu0 %v2642
        %v5414 = vpop.f32.mrf.mxu0
        %v5415 = vadd.f32 0.0, %v5414
        %v5416 = vpop.f32.mrf.mxu0
        %v5417 = vpop.f32.mrf.mxu0
        %v5418 = vadd.f32 0.0, %v5417
        %v5419 = vpop.f32.mrf.mxu0
        %5420 = vmatprep.mubr.bf16.mxu0 0
        %5421 = vmatmul.mubr.bf16.gmra.mxu0 %v2645
        %v5422 = vpop.f32.mrf.mxu0
        %v5423 = vadd.f32 0.0, %v5422
        %v5424 = vpop.f32.mrf.mxu0
        %v5425 = vpop.f32.mrf.mxu0
        %v5426 = vadd.f32 0.0, %v5425
        %v5427 = vpop.f32.mrf.mxu0
        %5428 = vmatprep.mubr.bf16.mxu0 0
        %5429 = vmatmul.mubr.bf16.gmra.mxu0 %v2648
        %v5430 = vpop.f32.mrf.mxu0
        %v5431 = vadd.f32 0.0, %v5430
        %v5432 = vpop.f32.mrf.mxu0
        %v5433 = vpop.f32.mrf.mxu0
        %v5434 = vadd.f32 0.0, %v5433
        %v5435 = vpop.f32.mrf.mxu0
        %5436 = vmatprep.mubr.bf16.mxu0 0
        %5437 = vmatmul.mubr.bf16.gmra.mxu0 %v2651
        %v5438 = vpop.f32.mrf.mxu0
        %v5439 = vadd.f32 0.0, %v5438
        %v5440 = vpop.f32.mrf.mxu0
        %v5441 = vpop.f32.mrf.mxu0
        %v5442 = vadd.f32 0.0, %v5441
        %v5443 = vpop.f32.mrf.mxu0
        %5444 = vmatprep.mubr.bf16.mxu0 0
        %5445 = vmatmul.mubr.bf16.gmra.mxu0 %v2654
        %v5446 = vpop.f32.mrf.mxu0
        %v5447 = vadd.f32 0.0, %v5446
        %v5448 = vpop.f32.mrf.mxu0
        %v5449 = vpop.f32.mrf.mxu0
        %v5450 = vadd.f32 0.0, %v5449
        %v5451 = vpop.f32.mrf.mxu0
        %5452 = vmatprep.mubr.bf16.mxu0 0
        %5453 = vmatmul.mubr.bf16.gmra.mxu0 %v2657
        %v5454 = vpop.f32.mrf.mxu0
        %v5455 = vadd.f32 0.0, %v5454
        %v5456 = vpop.f32.mrf.mxu0
        %v5457 = vpop.f32.mrf.mxu0
        %v5458 = vadd.f32 0.0, %v5457
        %v5459 = vpop.f32.mrf.mxu0
        %5460 = vdwg.mxu0
        %v5469 = vunpack.c.l.b16 %v5259
        %v5470 = vunpack.c.l.b16 %v5260
        %v5471 = vunpack.c.l.b16 %v5261
        %v5472 = vunpack.c.l.b16 %v5262
        %v5473 = vunpack.c.l.b16 %v5263
        %v5474 = vunpack.c.l.b16 %v5264
        %v5475 = vunpack.c.l.b16 %v5265
        %v5476 = vunpack.c.l.b16 %v5266
        %v5477 = vpack.c.b16 %v5470, %v5469
        %v5478 = vpack.c.b16 %v5472, %v5471
        %v5479 = vpack.c.b16 %v5474, %v5473
        %v5480 = vpack.c.b16 %v5476, %v5475
        %5485 = vmatprep.subr.bf16.mxu0 0
        %5486 = vmatpush1.bf16.msra.mxu0 0
        %5487 = vmatprep.subr.bf16.mxu0 0
        %5488 = vmatpush1.bf16.msra.mxu0 0
        %5489 = vmatprep.subr.bf16.mxu0 0
        %5490 = vmatpush1.bf16.msra.mxu0 0
        %5491 = vmatprep.subr.bf16.mxu0 0
        %5492 = vmatpush1.bf16.msra.mxu0 0
        %5493 = vmatprep.subr.bf16.mxu0 0
        %5494 = vmatpush1.bf16.msra.mxu0 %v5480
        %5495 = vmatprep.subr.bf16.mxu0 0
        %5496 = vmatpush1.bf16.msra.mxu0 %v5479
        %5497 = vmatprep.subr.bf16.mxu0 0
        %5498 = vmatpush1.bf16.msra.mxu0 %v5478
        %5499 = vmatprep.subr.bf16.mxu0 0
        %5500 = vmatpush1.bf16.msra.mxu0 %v5477
        %5501 = vmatprep.subr.bf16.mxu0 0
        %5502 = vmatpush2.bf16.msra.mxu0 0
        %5503 = vmatprep.subr.bf16.mxu0 0
        %5504 = vmatpush2.bf16.msra.mxu0 0
        %5505 = vmatprep.subr.bf16.mxu0 0
        %5506 = vmatpush2.bf16.msra.mxu0 0
        %5507 = vmatprep.subr.bf16.mxu0 0
        %5508 = vmatpush2.bf16.msra.mxu0 0
        %5509 = vmatprep.subr.bf16.mxu0 0
        %5510 = vmatpush2.bf16.msra.mxu0 0
        %5511 = vmatprep.subr.bf16.mxu0 0
        %5512 = vmatpush2.bf16.msra.mxu0 0
        %5513 = vmatprep.subr.bf16.mxu0 0
        %5514 = vmatpush2.bf16.msra.mxu0 0
        %5515 = vmatprep.subr.bf16.mxu0 0
        %5516 = vmatpush2.bf16.msra.mxu0 0
        %5517 = vmatprep.mubr.bf16.mxu0 0
        %5518 = vmatmul.mubr.bf16.gmra.mxu0 %v1010
        %v5519 = vpop.f32.mrf.mxu0
        %v5520 = vadd.f32 %v5335, %v5519
        %v5521 = vpop.f32.mrf.mxu0
        %v5522 = vpop.f32.mrf.mxu0
        %v5523 = vadd.f32 %v5338, %v5522
        %v5524 = vpop.f32.mrf.mxu0
        %5525 = vmatprep.mubr.bf16.mxu0 0
        %5526 = vmatmul.mubr.bf16.gmra.mxu0 %v1013
        %v5527 = vpop.f32.mrf.mxu0
        %v5528 = vadd.f32 %v5343, %v5527
        %v5529 = vpop.f32.mrf.mxu0
        %v5530 = vpop.f32.mrf.mxu0
        %v5531 = vadd.f32 %v5346, %v5530
        %v5532 = vpop.f32.mrf.mxu0
        %5533 = vmatprep.mubr.bf16.mxu0 0
        %5534 = vmatmul.mubr.bf16.gmra.mxu0 %v1016
        %v5535 = vpop.f32.mrf.mxu0
        %v5536 = vadd.f32 %v5351, %v5535
        %v5537 = vpop.f32.mrf.mxu0
        %v5538 = vpop.f32.mrf.mxu0
        %v5539 = vadd.f32 %v5354, %v5538
        %v5540 = vpop.f32.mrf.mxu0
        %5541 = vmatprep.mubr.bf16.mxu0 0
        %5542 = vmatmul.mubr.bf16.gmra.mxu0 %v1019
        %v5543 = vpop.f32.mrf.mxu0
        %v5544 = vadd.f32 %v5359, %v5543
        %v5545 = vpop.f32.mrf.mxu0
        %v5546 = vpop.f32.mrf.mxu0
        %v5547 = vadd.f32 %v5362, %v5546
        %v5548 = vpop.f32.mrf.mxu0
        %5549 = vmatprep.mubr.bf16.mxu0 0
        %5550 = vmatmul.mubr.bf16.gmra.mxu0 %v1022
        %v5551 = vpop.f32.mrf.mxu0
        %v5552 = vadd.f32 %v5367, %v5551
        %v5553 = vpop.f32.mrf.mxu0
        %v5554 = vpop.f32.mrf.mxu0
        %v5555 = vadd.f32 %v5370, %v5554
        %v5556 = vpop.f32.mrf.mxu0
        %5557 = vmatprep.mubr.bf16.mxu0 0
        %5558 = vmatmul.mubr.bf16.gmra.mxu0 %v1025
        %v5559 = vpop.f32.mrf.mxu0
        %v5560 = vadd.f32 %v5375, %v5559
        %v5561 = vpop.f32.mrf.mxu0
        %v5562 = vpop.f32.mrf.mxu0
        %v5563 = vadd.f32 %v5378, %v5562
        %v5564 = vpop.f32.mrf.mxu0
        %5565 = vmatprep.mubr.bf16.mxu0 0
        %5566 = vmatmul.mubr.bf16.gmra.mxu0 %v1028
        %v5567 = vpop.f32.mrf.mxu0
        %v5568 = vadd.f32 %v5383, %v5567
        %v5569 = vpop.f32.mrf.mxu0
        %v5570 = vpop.f32.mrf.mxu0
        %v5571 = vadd.f32 %v5386, %v5570
        %v5572 = vpop.f32.mrf.mxu0
        %5573 = vmatprep.mubr.bf16.mxu0 0
        %5574 = vmatmul.mubr.bf16.gmra.mxu0 %v1031
        %v5575 = vpop.f32.mrf.mxu0
        %v5576 = vadd.f32 %v5391, %v5575
        %v5577 = vpop.f32.mrf.mxu0
        %v5578 = vpop.f32.mrf.mxu0
        %v5579 = vadd.f32 %v5394, %v5578
        %v5580 = vpop.f32.mrf.mxu0
        %5581 = vmatprep.mubr.bf16.mxu0 0
        %5582 = vmatmul.mubr.bf16.gmra.mxu0 %v1034
        %v5583 = vpop.f32.mrf.mxu0
        %v5584 = vadd.f32 %v5399, %v5583
        %v5585 = vpop.f32.mrf.mxu0
        %v5586 = vpop.f32.mrf.mxu0
        %v5587 = vadd.f32 %v5402, %v5586
        %v5588 = vpop.f32.mrf.mxu0
        %5589 = vmatprep.mubr.bf16.mxu0 0
        %5590 = vmatmul.mubr.bf16.gmra.mxu0 %v1037
        %v5591 = vpop.f32.mrf.mxu0
        %v5592 = vadd.f32 %v5407, %v5591
        %v5593 = vpop.f32.mrf.mxu0
        %v5594 = vpop.f32.mrf.mxu0
        %v5595 = vadd.f32 %v5410, %v5594
        %v5596 = vpop.f32.mrf.mxu0
        %5597 = vmatprep.mubr.bf16.mxu0 0
        %5598 = vmatmul.mubr.bf16.gmra.mxu0 %v1040
        %v5599 = vpop.f32.mrf.mxu0
        %v5600 = vadd.f32 %v5415, %v5599
        %v5601 = vpop.f32.mrf.mxu0
        %v5602 = vpop.f32.mrf.mxu0
        %v5603 = vadd.f32 %v5418, %v5602
        %v5604 = vpop.f32.mrf.mxu0
        %5605 = vmatprep.mubr.bf16.mxu0 0
        %5606 = vmatmul.mubr.bf16.gmra.mxu0 %v1043
        %v5607 = vpop.f32.mrf.mxu0
        %v5608 = vadd.f32 %v5423, %v5607
        %v5609 = vpop.f32.mrf.mxu0
        %v5610 = vpop.f32.mrf.mxu0
        %v5611 = vadd.f32 %v5426, %v5610
        %v5612 = vpop.f32.mrf.mxu0
        %5613 = vmatprep.mubr.bf16.mxu0 0
        %5614 = vmatmul.mubr.bf16.gmra.mxu0 %v1046
        %v5615 = vpop.f32.mrf.mxu0
        %v5616 = vadd.f32 %v5431, %v5615
        %v5617 = vpop.f32.mrf.mxu0
        %v5618 = vpop.f32.mrf.mxu0
        %v5619 = vadd.f32 %v5434, %v5618
        %v5620 = vpop.f32.mrf.mxu0
        %5621 = vmatprep.mubr.bf16.mxu0 0
        %5622 = vmatmul.mubr.bf16.gmra.mxu0 %v1049
        %v5623 = vpop.f32.mrf.mxu0
        %v5624 = vadd.f32 %v5439, %v5623
        %v5625 = vpop.f32.mrf.mxu0
        %v5626 = vpop.f32.mrf.mxu0
        %v5627 = vadd.f32 %v5442, %v5626
        %v5628 = vpop.f32.mrf.mxu0
        %5629 = vmatprep.mubr.bf16.mxu0 0
        %5630 = vmatmul.mubr.bf16.gmra.mxu0 %v1052
        %v5631 = vpop.f32.mrf.mxu0
        %v5632 = vadd.f32 %v5447, %v5631
        %v5633 = vpop.f32.mrf.mxu0
        %v5634 = vpop.f32.mrf.mxu0
        %v5635 = vadd.f32 %v5450, %v5634
        %v5636 = vpop.f32.mrf.mxu0
        %5637 = vmatprep.mubr.bf16.mxu0 0
        %5638 = vmatmul.mubr.bf16.gmra.mxu0 %v1055
        %v5639 = vpop.f32.mrf.mxu0
        %v5640 = vadd.f32 %v5455, %v5639
        %v5641 = vpop.f32.mrf.mxu0
        %v5642 = vpop.f32.mrf.mxu0
        %v5643 = vadd.f32 %v5458, %v5642
        %v5644 = vpop.f32.mrf.mxu0
        %5645 = vdwg.mxu0
        %s5646 = scalar_lea.vmem %s1, 448
        %v5647 = vld [vmem:[%s5646] sm:$0xf]
        %v5648 = vld [vmem:[%s5646 + $0x4] sm:$0xf]
        %v5649 = vld [vmem:[%s5646 + $0x8] sm:$0xf]
        %v5650 = vld [vmem:[%s5646 + $0xc] sm:$0xf]
        %v5651 = vld [vmem:[%s5646 + $0x10] sm:$0xf]
        %v5652 = vld [vmem:[%s5646 + $0x14] sm:$0xf]
        %v5653 = vld [vmem:[%s5646 + $0x18] sm:$0xf]
        %v5654 = vld [vmem:[%s5646 + $0x1c] sm:$0xf]
        %v5663 = vunpack.c.l.b16 %v5647
        %v5664 = vunpack.c.l.b16 %v5648
        %v5665 = vunpack.c.l.b16 %v5649
        %v5666 = vunpack.c.l.b16 %v5650
        %v5667 = vunpack.c.l.b16 %v5651
        %v5668 = vunpack.c.l.b16 %v5652
        %v5669 = vunpack.c.l.b16 %v5653
        %v5670 = vunpack.c.l.b16 %v5654
        %v5671 = vpack.c.b16 %v5664, %v5663
        %v5672 = vpack.c.b16 %v5666, %v5665
        %v5673 = vpack.c.b16 %v5668, %v5667
        %v5674 = vpack.c.b16 %v5670, %v5669
        %5679 = vmatprep.subr.bf16.mxu0 0
        %5680 = vmatpush1.bf16.msra.mxu0 0
        %5681 = vmatprep.subr.bf16.mxu0 0
        %5682 = vmatpush1.bf16.msra.mxu0 0
        %5683 = vmatprep.subr.bf16.mxu0 0
        %5684 = vmatpush1.bf16.msra.mxu0 0
        %5685 = vmatprep.subr.bf16.mxu0 0
        %5686 = vmatpush1.bf16.msra.mxu0 0
        %5687 = vmatprep.subr.bf16.mxu0 0
        %5688 = vmatpush1.bf16.msra.mxu0 %v5674
        %5689 = vmatprep.subr.bf16.mxu0 0
        %5690 = vmatpush1.bf16.msra.mxu0 %v5673
        %5691 = vmatprep.subr.bf16.mxu0 0
        %5692 = vmatpush1.bf16.msra.mxu0 %v5672
        %5693 = vmatprep.subr.bf16.mxu0 0
        %5694 = vmatpush1.bf16.msra.mxu0 %v5671
        %5695 = vmatprep.subr.bf16.mxu0 0
        %5696 = vmatpush2.bf16.msra.mxu0 0
        %5697 = vmatprep.subr.bf16.mxu0 0
        %5698 = vmatpush2.bf16.msra.mxu0 0
        %5699 = vmatprep.subr.bf16.mxu0 0
        %5700 = vmatpush2.bf16.msra.mxu0 0
        %5701 = vmatprep.subr.bf16.mxu0 0
        %5702 = vmatpush2.bf16.msra.mxu0 0
        %5703 = vmatprep.subr.bf16.mxu0 0
        %5704 = vmatpush2.bf16.msra.mxu0 0
        %5705 = vmatprep.subr.bf16.mxu0 0
        %5706 = vmatpush2.bf16.msra.mxu0 0
        %5707 = vmatprep.subr.bf16.mxu0 0
        %5708 = vmatpush2.bf16.msra.mxu0 0
        %5709 = vmatprep.subr.bf16.mxu0 0
        %5710 = vmatpush2.bf16.msra.mxu0 0
        %5711 = vmatprep.mubr.bf16.mxu0 0
        %5712 = vmatmul.mubr.bf16.gmra.mxu0 %v4632
        %v5713 = vpop.f32.mrf.mxu0
        %v5714 = vadd.f32 0.0, %v5713
        %v5715 = vpop.f32.mrf.mxu0
        %v5716 = vpop.f32.mrf.mxu0
        %v5717 = vadd.f32 0.0, %v5716
        %v5718 = vpop.f32.mrf.mxu0
        %5719 = vmatprep.mubr.bf16.mxu0 0
        %5720 = vmatmul.mubr.bf16.gmra.mxu0 %v4635
        %v5721 = vpop.f32.mrf.mxu0
        %v5722 = vadd.f32 0.0, %v5721
        %v5723 = vpop.f32.mrf.mxu0
        %v5724 = vpop.f32.mrf.mxu0
        %v5725 = vadd.f32 0.0, %v5724
        %v5726 = vpop.f32.mrf.mxu0
        %5727 = vmatprep.mubr.bf16.mxu0 0
        %5728 = vmatmul.mubr.bf16.gmra.mxu0 %v4638
        %v5729 = vpop.f32.mrf.mxu0
        %v5730 = vadd.f32 0.0, %v5729
        %v5731 = vpop.f32.mrf.mxu0
        %v5732 = vpop.f32.mrf.mxu0
        %v5733 = vadd.f32 0.0, %v5732
        %v5734 = vpop.f32.mrf.mxu0
        %5735 = vmatprep.mubr.bf16.mxu0 0
        %5736 = vmatmul.mubr.bf16.gmra.mxu0 %v4641
        %v5737 = vpop.f32.mrf.mxu0
        %v5738 = vadd.f32 0.0, %v5737
        %v5739 = vpop.f32.mrf.mxu0
        %v5740 = vpop.f32.mrf.mxu0
        %v5741 = vadd.f32 0.0, %v5740
        %v5742 = vpop.f32.mrf.mxu0
        %5743 = vmatprep.mubr.bf16.mxu0 0
        %5744 = vmatmul.mubr.bf16.gmra.mxu0 %v4644
        %v5745 = vpop.f32.mrf.mxu0
        %v5746 = vadd.f32 0.0, %v5745
        %v5747 = vpop.f32.mrf.mxu0
        %v5748 = vpop.f32.mrf.mxu0
        %v5749 = vadd.f32 0.0, %v5748
        %v5750 = vpop.f32.mrf.mxu0
        %5751 = vmatprep.mubr.bf16.mxu0 0
        %5752 = vmatmul.mubr.bf16.gmra.mxu0 %v4647
        %v5753 = vpop.f32.mrf.mxu0
        %v5754 = vadd.f32 0.0, %v5753
        %v5755 = vpop.f32.mrf.mxu0
        %v5756 = vpop.f32.mrf.mxu0
        %v5757 = vadd.f32 0.0, %v5756
        %v5758 = vpop.f32.mrf.mxu0
        %5759 = vmatprep.mubr.bf16.mxu0 0
        %5760 = vmatmul.mubr.bf16.gmra.mxu0 %v4650
        %v5761 = vpop.f32.mrf.mxu0
        %v5762 = vadd.f32 0.0, %v5761
        %v5763 = vpop.f32.mrf.mxu0
        %v5764 = vpop.f32.mrf.mxu0
        %v5765 = vadd.f32 0.0, %v5764
        %v5766 = vpop.f32.mrf.mxu0
        %5767 = vmatprep.mubr.bf16.mxu0 0
        %5768 = vmatmul.mubr.bf16.gmra.mxu0 %v4653
        %v5769 = vpop.f32.mrf.mxu0
        %v5770 = vadd.f32 0.0, %v5769
        %v5771 = vpop.f32.mrf.mxu0
        %v5772 = vpop.f32.mrf.mxu0
        %v5773 = vadd.f32 0.0, %v5772
        %v5774 = vpop.f32.mrf.mxu0
        %5775 = vmatprep.mubr.bf16.mxu0 0
        %5776 = vmatmul.mubr.bf16.gmra.mxu0 %v4656
        %v5777 = vpop.f32.mrf.mxu0
        %v5778 = vadd.f32 0.0, %v5777
        %v5779 = vpop.f32.mrf.mxu0
        %v5780 = vpop.f32.mrf.mxu0
        %v5781 = vadd.f32 0.0, %v5780
        %v5782 = vpop.f32.mrf.mxu0
        %5783 = vmatprep.mubr.bf16.mxu0 0
        %5784 = vmatmul.mubr.bf16.gmra.mxu0 %v4659
        %v5785 = vpop.f32.mrf.mxu0
        %v5786 = vadd.f32 0.0, %v5785
        %v5787 = vpop.f32.mrf.mxu0
        %v5788 = vpop.f32.mrf.mxu0
        %v5789 = vadd.f32 0.0, %v5788
        %v5790 = vpop.f32.mrf.mxu0
        %5791 = vmatprep.mubr.bf16.mxu0 0
        %5792 = vmatmul.mubr.bf16.gmra.mxu0 %v4662
        %v5793 = vpop.f32.mrf.mxu0
        %v5794 = vadd.f32 0.0, %v5793
        %v5795 = vpop.f32.mrf.mxu0
        %v5796 = vpop.f32.mrf.mxu0
        %v5797 = vadd.f32 0.0, %v5796
        %v5798 = vpop.f32.mrf.mxu0
        %5799 = vmatprep.mubr.bf16.mxu0 0
        %5800 = vmatmul.mubr.bf16.gmra.mxu0 %v4665
        %v5801 = vpop.f32.mrf.mxu0
        %v5802 = vadd.f32 0.0, %v5801
        %v5803 = vpop.f32.mrf.mxu0
        %v5804 = vpop.f32.mrf.mxu0
        %v5805 = vadd.f32 0.0, %v5804
        %v5806 = vpop.f32.mrf.mxu0
        %5807 = vmatprep.mubr.bf16.mxu0 0
        %5808 = vmatmul.mubr.bf16.gmra.mxu0 %v4668
        %v5809 = vpop.f32.mrf.mxu0
        %v5810 = vadd.f32 0.0, %v5809
        %v5811 = vpop.f32.mrf.mxu0
        %v5812 = vpop.f32.mrf.mxu0
        %v5813 = vadd.f32 0.0, %v5812
        %v5814 = vpop.f32.mrf.mxu0
        %5815 = vmatprep.mubr.bf16.mxu0 0
        %5816 = vmatmul.mubr.bf16.gmra.mxu0 %v4671
        %v5817 = vpop.f32.mrf.mxu0
        %v5818 = vadd.f32 0.0, %v5817
        %v5819 = vpop.f32.mrf.mxu0
        %v5820 = vpop.f32.mrf.mxu0
        %v5821 = vadd.f32 0.0, %v5820
        %v5822 = vpop.f32.mrf.mxu0
        %5823 = vmatprep.mubr.bf16.mxu0 0
        %5824 = vmatmul.mubr.bf16.gmra.mxu0 %v4674
        %v5825 = vpop.f32.mrf.mxu0
        %v5826 = vadd.f32 0.0, %v5825
        %v5827 = vpop.f32.mrf.mxu0
        %v5828 = vpop.f32.mrf.mxu0
        %v5829 = vadd.f32 0.0, %v5828
        %v5830 = vpop.f32.mrf.mxu0
        %5831 = vmatprep.mubr.bf16.mxu0 0
        %5832 = vmatmul.mubr.bf16.gmra.mxu0 %v4677
        %v5833 = vpop.f32.mrf.mxu0
        %v5834 = vadd.f32 0.0, %v5833
        %v5835 = vpop.f32.mrf.mxu0
        %v5836 = vpop.f32.mrf.mxu0
        %v5837 = vadd.f32 0.0, %v5836
        %v5838 = vpop.f32.mrf.mxu0
        %5839 = vdwg.mxu0
        %v5840 = vadd.f32 %v5520, %v5714
        %v5841 = vadd.f32 %v5523, %v5717
        %v5842 = vadd.f32 %v5528, %v5722
        %v5843 = vadd.f32 %v5531, %v5725
        %v5844 = vadd.f32 %v5536, %v5730
        %v5845 = vadd.f32 %v5539, %v5733
        %v5846 = vadd.f32 %v5544, %v5738
        %v5847 = vadd.f32 %v5547, %v5741
        %v5848 = vadd.f32 %v5552, %v5746
        %v5849 = vadd.f32 %v5555, %v5749
        %v5850 = vadd.f32 %v5560, %v5754
        %v5851 = vadd.f32 %v5563, %v5757
        %v5852 = vadd.f32 %v5568, %v5762
        %v5853 = vadd.f32 %v5571, %v5765
        %v5854 = vadd.f32 %v5576, %v5770
        %v5855 = vadd.f32 %v5579, %v5773
        %v5856 = vadd.f32 %v5584, %v5778
        %v5857 = vadd.f32 %v5587, %v5781
        %v5858 = vadd.f32 %v5592, %v5786
        %v5859 = vadd.f32 %v5595, %v5789
        %v5860 = vadd.f32 %v5600, %v5794
        %v5861 = vadd.f32 %v5603, %v5797
        %v5862 = vadd.f32 %v5608, %v5802
        %v5863 = vadd.f32 %v5611, %v5805
        %v5864 = vadd.f32 %v5616, %v5810
        %v5865 = vadd.f32 %v5619, %v5813
        %v5866 = vadd.f32 %v5624, %v5818
        %v5867 = vadd.f32 %v5627, %v5821
        %v5868 = vadd.f32 %v5632, %v5826
        %v5869 = vadd.f32 %v5635, %v5829
        %v5870 = vadd.f32 %v5640, %v5834
        %v5871 = vadd.f32 %v5643, %v5837
        %v5872 = vld [vmem:[%s4117] sm:$0xe]
        %v5873 = vld [vmem:[%s4117 + $0xc] sm:$0xe]
        %v5874 = vld [vmem:[%s4117 + $0x18] sm:$0xe]
        %v5875 = vld [vmem:[%s4117 + $0x24] sm:$0xe]
        %v5876 = vld [vmem:[%s4117 + $0x30] sm:$0xe]
        %v5877 = vld [vmem:[%s4117 + $0x3c] sm:$0xe]
        %v5878 = vld [vmem:[%s4117 + $0x48] sm:$0xe]
        %v5879 = vld [vmem:[%s4117 + $0x54] sm:$0xe]
        %v5880 = vld [vmem:[%s4117 + $0x60] sm:$0xe]
        %v5881 = vld [vmem:[%s4117 + $0x6c] sm:$0xe]
        %v5882 = vld [vmem:[%s4117 + $0x78] sm:$0xe]
        %v5883 = vld [vmem:[%s4117 + $0x84] sm:$0xe]
        %v5884 = vld [vmem:[%s4117 + $0x90] sm:$0xe]
        %v5885 = vld [vmem:[%s4117 + $0x9c] sm:$0xe]
        %v5886 = vld [vmem:[%s4117 + $0xa8] sm:$0xe]
        %v5887 = vld [vmem:[%s4117 + $0xb4] sm:$0xe]
        %v5936 = vrot.slane %v5872, 5
        %v5937 = vrot.slane %v5936, 4
        %v5938 = vrot.slane %v4119, 5
        %v5939 = vsel %vm2417, %v5937, %v5938
        %v5940 = vrot.slane %v5938, 4
        %v5941 = vrot.slane %v4120, 5
        %v5942 = vsel %vm2417, %v5940, %v5941
        %v5943 = vrot.slane %v5873, 5
        %v5944 = vrot.slane %v5943, 4
        %v5945 = vrot.slane %v4122, 5
        %v5946 = vsel %vm2417, %v5944, %v5945
        %v5947 = vrot.slane %v5945, 4
        %v5948 = vrot.slane %v4123, 5
        %v5949 = vsel %vm2417, %v5947, %v5948
        %v5950 = vrot.slane %v5874, 5
        %v5951 = vrot.slane %v5950, 4
        %v5952 = vrot.slane %v4125, 5
        %v5953 = vsel %vm2417, %v5951, %v5952
        %v5954 = vrot.slane %v5952, 4
        %v5955 = vrot.slane %v4126, 5
        %v5956 = vsel %vm2417, %v5954, %v5955
        %v5957 = vrot.slane %v5875, 5
        %v5958 = vrot.slane %v5957, 4
        %v5959 = vrot.slane %v4128, 5
        %v5960 = vsel %vm2417, %v5958, %v5959
        %v5961 = vrot.slane %v5959, 4
        %v5962 = vrot.slane %v4129, 5
        %v5963 = vsel %vm2417, %v5961, %v5962
        %v5964 = vrot.slane %v5876, 5
        %v5965 = vrot.slane %v5964, 4
        %v5966 = vrot.slane %v4131, 5
        %v5967 = vsel %vm2417, %v5965, %v5966
        %v5968 = vrot.slane %v5966, 4
        %v5969 = vrot.slane %v4132, 5
        %v5970 = vsel %vm2417, %v5968, %v5969
        %v5971 = vrot.slane %v5877, 5
        %v5972 = vrot.slane %v5971, 4
        %v5973 = vrot.slane %v4134, 5
        %v5974 = vsel %vm2417, %v5972, %v5973
        %v5975 = vrot.slane %v5973, 4
        %v5976 = vrot.slane %v4135, 5
        %v5977 = vsel %vm2417, %v5975, %v5976
        %v5978 = vrot.slane %v5878, 5
        %v5979 = vrot.slane %v5978, 4
        %v5980 = vrot.slane %v4137, 5
        %v5981 = vsel %vm2417, %v5979, %v5980
        %v5982 = vrot.slane %v5980, 4
        %v5983 = vrot.slane %v4138, 5
        %v5984 = vsel %vm2417, %v5982, %v5983
        %v5985 = vrot.slane %v5879, 5
        %v5986 = vrot.slane %v5985, 4
        %v5987 = vrot.slane %v4140, 5
        %v5988 = vsel %vm2417, %v5986, %v5987
        %v5989 = vrot.slane %v5987, 4
        %v5990 = vrot.slane %v4141, 5
        %v5991 = vsel %vm2417, %v5989, %v5990
        %v5992 = vrot.slane %v5880, 5
        %v5993 = vrot.slane %v5992, 4
        %v5994 = vrot.slane %v4143, 5
        %v5995 = vsel %vm2417, %v5993, %v5994
        %v5996 = vrot.slane %v5994, 4
        %v5997 = vrot.slane %v4144, 5
        %v5998 = vsel %vm2417, %v5996, %v5997
        %v5999 = vrot.slane %v5881, 5
        %v6000 = vrot.slane %v5999, 4
        %v6001 = vrot.slane %v4146, 5
        %v6002 = vsel %vm2417, %v6000, %v6001
        %v6003 = vrot.slane %v6001, 4
        %v6004 = vrot.slane %v4147, 5
        %v6005 = vsel %vm2417, %v6003, %v6004
        %v6006 = vrot.slane %v5882, 5
        %v6007 = vrot.slane %v6006, 4
        %v6008 = vrot.slane %v4149, 5
        %v6009 = vsel %vm2417, %v6007, %v6008
        %v6010 = vrot.slane %v6008, 4
        %v6011 = vrot.slane %v4150, 5
        %v6012 = vsel %vm2417, %v6010, %v6011
        %v6013 = vrot.slane %v5883, 5
        %v6014 = vrot.slane %v6013, 4
        %v6015 = vrot.slane %v4152, 5
        %v6016 = vsel %vm2417, %v6014, %v6015
        %v6017 = vrot.slane %v6015, 4
        %v6018 = vrot.slane %v4153, 5
        %v6019 = vsel %vm2417, %v6017, %v6018
        %v6020 = vrot.slane %v5884, 5
        %v6021 = vrot.slane %v6020, 4
        %v6022 = vrot.slane %v4155, 5
        %v6023 = vsel %vm2417, %v6021, %v6022
        %v6024 = vrot.slane %v6022, 4
        %v6025 = vrot.slane %v4156, 5
        %v6026 = vsel %vm2417, %v6024, %v6025
        %v6027 = vrot.slane %v5885, 5
        %v6028 = vrot.slane %v6027, 4
        %v6029 = vrot.slane %v4158, 5
        %v6030 = vsel %vm2417, %v6028, %v6029
        %v6031 = vrot.slane %v6029, 4
        %v6032 = vrot.slane %v4159, 5
        %v6033 = vsel %vm2417, %v6031, %v6032
        %v6034 = vrot.slane %v5886, 5
        %v6035 = vrot.slane %v6034, 4
        %v6036 = vrot.slane %v4161, 5
        %v6037 = vsel %vm2417, %v6035, %v6036
        %v6038 = vrot.slane %v6036, 4
        %v6039 = vrot.slane %v4162, 5
        %v6040 = vsel %vm2417, %v6038, %v6039
        %v6041 = vrot.slane %v5887, 5
        %v6042 = vrot.slane %v6041, 4
        %v6043 = vrot.slane %v4164, 5
        %v6044 = vsel %vm2417, %v6042, %v6043
        %v6045 = vrot.slane %v6043, 4
        %v6046 = vrot.slane %v4165, 5
        %v6047 = vsel %vm2417, %v6045, %v6046
        %s6048 = scalar_lea.vmem %s1, 480
        %v6049 = vld [vmem:[%s6048] sm:$0xf]
        %v6050 = vld [vmem:[%s6048 + $0x4] sm:$0xf]
        %v6051 = vld [vmem:[%s6048 + $0x8] sm:$0xf]
        %v6052 = vld [vmem:[%s6048 + $0xc] sm:$0xf]
        %v6053 = vld [vmem:[%s6048 + $0x10] sm:$0xf]
        %v6054 = vld [vmem:[%s6048 + $0x14] sm:$0xf]
        %v6055 = vld [vmem:[%s6048 + $0x18] sm:$0xf]
        %v6056 = vld [vmem:[%s6048 + $0x1c] sm:$0xf]
        %v6057 = vunpack.c.l.b16 %v5939
        %v6058 = vunpack.c.l.b16 %v5942
        %v6059 = vunpack.c.l.b16 %v5946
        %v6060 = vunpack.c.l.b16 %v5949
        %v6061 = vunpack.c.l.b16 %v5953
        %v6062 = vunpack.c.l.b16 %v5956
        %v6063 = vunpack.c.l.b16 %v5960
        %v6064 = vunpack.c.l.b16 %v5963
        %v6065 = vunpack.c.l.b16 %v5967
        %v6066 = vunpack.c.l.b16 %v5970
        %v6067 = vunpack.c.l.b16 %v5974
        %v6068 = vunpack.c.l.b16 %v5977
        %v6069 = vunpack.c.l.b16 %v5981
        %v6070 = vunpack.c.l.b16 %v5984
        %v6071 = vunpack.c.l.b16 %v5988
        %v6072 = vunpack.c.l.b16 %v5991
        %v6073 = vunpack.c.l.b16 %v5995
        %v6074 = vunpack.c.l.b16 %v5998
        %v6075 = vunpack.c.l.b16 %v6002
        %v6076 = vunpack.c.l.b16 %v6005
        %v6077 = vunpack.c.l.b16 %v6009
        %v6078 = vunpack.c.l.b16 %v6012
        %v6079 = vunpack.c.l.b16 %v6016
        %v6080 = vunpack.c.l.b16 %v6019
        %v6081 = vunpack.c.l.b16 %v6023
        %v6082 = vunpack.c.l.b16 %v6026
        %v6083 = vunpack.c.l.b16 %v6030
        %v6084 = vunpack.c.l.b16 %v6033
        %v6085 = vunpack.c.l.b16 %v6037
        %v6086 = vunpack.c.l.b16 %v6040
        %v6087 = vunpack.c.l.b16 %v6044
        %v6088 = vunpack.c.l.b16 %v6047
        %v6089 = vpack.c.b16 %v6058, %v6057
        %v6090 = vpack.c.b16 %v6060, %v6059
        %v6091 = vpack.c.b16 %v6062, %v6061
        %v6092 = vpack.c.b16 %v6064, %v6063
        %v6093 = vpack.c.b16 %v6066, %v6065
        %v6094 = vpack.c.b16 %v6068, %v6067
        %v6095 = vpack.c.b16 %v6070, %v6069
        %v6096 = vpack.c.b16 %v6072, %v6071
        %v6097 = vpack.c.b16 %v6074, %v6073
        %v6098 = vpack.c.b16 %v6076, %v6075
        %v6099 = vpack.c.b16 %v6078, %v6077
        %v6100 = vpack.c.b16 %v6080, %v6079
        %v6101 = vpack.c.b16 %v6082, %v6081
        %v6102 = vpack.c.b16 %v6084, %v6083
        %v6103 = vpack.c.b16 %v6086, %v6085
        %v6104 = vpack.c.b16 %v6088, %v6087
        %v6113 = vunpack.c.l.b16 %v6049
        %v6114 = vunpack.c.l.b16 %v6050
        %v6115 = vunpack.c.l.b16 %v6051
        %v6116 = vunpack.c.l.b16 %v6052
        %v6117 = vunpack.c.l.b16 %v6053
        %v6118 = vunpack.c.l.b16 %v6054
        %v6119 = vunpack.c.l.b16 %v6055
        %v6120 = vunpack.c.l.b16 %v6056
        %v6121 = vpack.c.b16 %v6114, %v6113
        %v6122 = vpack.c.b16 %v6116, %v6115
        %v6123 = vpack.c.b16 %v6118, %v6117
        %v6124 = vpack.c.b16 %v6120, %v6119
        %v6130 = vsel %vm727, %v6089, 0
        %v6133 = vsel %vm727, %v6090, 0
        %v6136 = vsel %vm727, %v6091, 0
        %v6139 = vsel %vm727, %v6092, 0
        %v6142 = vsel %vm727, %v6093, 0
        %v6145 = vsel %vm727, %v6094, 0
        %v6148 = vsel %vm727, %v6095, 0
        %v6151 = vsel %vm727, %v6096, 0
        %v6154 = vsel %vm727, %v6097, 0
        %v6157 = vsel %vm727, %v6098, 0
        %v6160 = vsel %vm727, %v6099, 0
        %v6163 = vsel %vm727, %v6100, 0
        %v6166 = vsel %vm727, %v6101, 0
        %v6169 = vsel %vm727, %v6102, 0
        %v6172 = vsel %vm727, %v6103, 0
        %v6175 = vsel %vm727, %v6104, 0
        %6177 = vmatprep.subr.bf16.mxu0 0
        %6178 = vmatpush1.bf16.msra.mxu0 0
        %6179 = vmatprep.subr.bf16.mxu0 0
        %6180 = vmatpush1.bf16.msra.mxu0 0
        %6181 = vmatprep.subr.bf16.mxu0 0
        %6182 = vmatpush1.bf16.msra.mxu0 0
        %6183 = vmatprep.subr.bf16.mxu0 0
        %6184 = vmatpush1.bf16.msra.mxu0 0
        %6185 = vmatprep.subr.bf16.mxu0 0
        %6186 = vmatpush1.bf16.msra.mxu0 %v6124
        %6187 = vmatprep.subr.bf16.mxu0 0
        %6188 = vmatpush1.bf16.msra.mxu0 %v6123
        %6189 = vmatprep.subr.bf16.mxu0 0
        %6190 = vmatpush1.bf16.msra.mxu0 %v6122
        %6191 = vmatprep.subr.bf16.mxu0 0
        %6192 = vmatpush1.bf16.msra.mxu0 %v6121
        %6193 = vmatprep.subr.bf16.mxu0 0
        %6194 = vmatpush2.bf16.msra.mxu0 0
        %6195 = vmatprep.subr.bf16.mxu0 0
        %6196 = vmatpush2.bf16.msra.mxu0 0
        %6197 = vmatprep.subr.bf16.mxu0 0
        %6198 = vmatpush2.bf16.msra.mxu0 0
        %6199 = vmatprep.subr.bf16.mxu0 0
        %6200 = vmatpush2.bf16.msra.mxu0 0
        %6201 = vmatprep.subr.bf16.mxu0 0
        %6202 = vmatpush2.bf16.msra.mxu0 0
        %6203 = vmatprep.subr.bf16.mxu0 0
        %6204 = vmatpush2.bf16.msra.mxu0 0
        %6205 = vmatprep.subr.bf16.mxu0 0
        %6206 = vmatpush2.bf16.msra.mxu0 0
        %6207 = vmatprep.subr.bf16.mxu0 0
        %6208 = vmatpush2.bf16.msra.mxu0 0
        %6209 = vmatprep.mubr.bf16.mxu0 0
        %6210 = vmatmul.mubr.bf16.gmra.mxu0 %v6130
        %v6211 = vpop.f32.mrf.mxu0
        %v6212 = vadd.f32 0.0, %v6211
        %v6213 = vpop.f32.mrf.mxu0
        %v6214 = vpop.f32.mrf.mxu0
        %v6215 = vadd.f32 0.0, %v6214
        %v6216 = vpop.f32.mrf.mxu0
        %6217 = vmatprep.mubr.bf16.mxu0 0
        %6218 = vmatmul.mubr.bf16.gmra.mxu0 %v6133
        %v6219 = vpop.f32.mrf.mxu0
        %v6220 = vadd.f32 0.0, %v6219
        %v6221 = vpop.f32.mrf.mxu0
        %v6222 = vpop.f32.mrf.mxu0
        %v6223 = vadd.f32 0.0, %v6222
        %v6224 = vpop.f32.mrf.mxu0
        %6225 = vmatprep.mubr.bf16.mxu0 0
        %6226 = vmatmul.mubr.bf16.gmra.mxu0 %v6136
        %v6227 = vpop.f32.mrf.mxu0
        %v6228 = vadd.f32 0.0, %v6227
        %v6229 = vpop.f32.mrf.mxu0
        %v6230 = vpop.f32.mrf.mxu0
        %v6231 = vadd.f32 0.0, %v6230
        %v6232 = vpop.f32.mrf.mxu0
        %6233 = vmatprep.mubr.bf16.mxu0 0
        %6234 = vmatmul.mubr.bf16.gmra.mxu0 %v6139
        %v6235 = vpop.f32.mrf.mxu0
        %v6236 = vadd.f32 0.0, %v6235
        %v6237 = vpop.f32.mrf.mxu0
        %v6238 = vpop.f32.mrf.mxu0
        %v6239 = vadd.f32 0.0, %v6238
        %v6240 = vpop.f32.mrf.mxu0
        %6241 = vmatprep.mubr.bf16.mxu0 0
        %6242 = vmatmul.mubr.bf16.gmra.mxu0 %v6142
        %v6243 = vpop.f32.mrf.mxu0
        %v6244 = vadd.f32 0.0, %v6243
        %v6245 = vpop.f32.mrf.mxu0
        %v6246 = vpop.f32.mrf.mxu0
        %v6247 = vadd.f32 0.0, %v6246
        %v6248 = vpop.f32.mrf.mxu0
        %6249 = vmatprep.mubr.bf16.mxu0 0
        %6250 = vmatmul.mubr.bf16.gmra.mxu0 %v6145
        %v6251 = vpop.f32.mrf.mxu0
        %v6252 = vadd.f32 0.0, %v6251
        %v6253 = vpop.f32.mrf.mxu0
        %v6254 = vpop.f32.mrf.mxu0
        %v6255 = vadd.f32 0.0, %v6254
        %v6256 = vpop.f32.mrf.mxu0
        %6257 = vmatprep.mubr.bf16.mxu0 0
        %6258 = vmatmul.mubr.bf16.gmra.mxu0 %v6148
        %v6259 = vpop.f32.mrf.mxu0
        %v6260 = vadd.f32 0.0, %v6259
        %v6261 = vpop.f32.mrf.mxu0
        %v6262 = vpop.f32.mrf.mxu0
        %v6263 = vadd.f32 0.0, %v6262
        %v6264 = vpop.f32.mrf.mxu0
        %6265 = vmatprep.mubr.bf16.mxu0 0
        %6266 = vmatmul.mubr.bf16.gmra.mxu0 %v6151
        %v6267 = vpop.f32.mrf.mxu0
        %v6268 = vadd.f32 0.0, %v6267
        %v6269 = vpop.f32.mrf.mxu0
        %v6270 = vpop.f32.mrf.mxu0
        %v6271 = vadd.f32 0.0, %v6270
        %v6272 = vpop.f32.mrf.mxu0
        %6273 = vmatprep.mubr.bf16.mxu0 0
        %6274 = vmatmul.mubr.bf16.gmra.mxu0 %v6154
        %v6275 = vpop.f32.mrf.mxu0
        %v6276 = vadd.f32 0.0, %v6275
        %v6277 = vpop.f32.mrf.mxu0
        %v6278 = vpop.f32.mrf.mxu0
        %v6279 = vadd.f32 0.0, %v6278
        %v6280 = vpop.f32.mrf.mxu0
        %6281 = vmatprep.mubr.bf16.mxu0 0
        %6282 = vmatmul.mubr.bf16.gmra.mxu0 %v6157
        %v6283 = vpop.f32.mrf.mxu0
        %v6284 = vadd.f32 0.0, %v6283
        %v6285 = vpop.f32.mrf.mxu0
        %v6286 = vpop.f32.mrf.mxu0
        %v6287 = vadd.f32 0.0, %v6286
        %v6288 = vpop.f32.mrf.mxu0
        %6289 = vmatprep.mubr.bf16.mxu0 0
        %6290 = vmatmul.mubr.bf16.gmra.mxu0 %v6160
        %v6291 = vpop.f32.mrf.mxu0
        %v6292 = vadd.f32 0.0, %v6291
        %v6293 = vpop.f32.mrf.mxu0
        %v6294 = vpop.f32.mrf.mxu0
        %v6295 = vadd.f32 0.0, %v6294
        %v6296 = vpop.f32.mrf.mxu0
        %6297 = vmatprep.mubr.bf16.mxu0 0
        %6298 = vmatmul.mubr.bf16.gmra.mxu0 %v6163
        %v6299 = vpop.f32.mrf.mxu0
        %v6300 = vadd.f32 0.0, %v6299
        %v6301 = vpop.f32.mrf.mxu0
        %v6302 = vpop.f32.mrf.mxu0
        %v6303 = vadd.f32 0.0, %v6302
        %v6304 = vpop.f32.mrf.mxu0
        %6305 = vmatprep.mubr.bf16.mxu0 0
        %6306 = vmatmul.mubr.bf16.gmra.mxu0 %v6166
        %v6307 = vpop.f32.mrf.mxu0
        %v6308 = vadd.f32 0.0, %v6307
        %v6309 = vpop.f32.mrf.mxu0
        %v6310 = vpop.f32.mrf.mxu0
        %v6311 = vadd.f32 0.0, %v6310
        %v6312 = vpop.f32.mrf.mxu0
        %6313 = vmatprep.mubr.bf16.mxu0 0
        %6314 = vmatmul.mubr.bf16.gmra.mxu0 %v6169
        %v6315 = vpop.f32.mrf.mxu0
        %v6316 = vadd.f32 0.0, %v6315
        %v6317 = vpop.f32.mrf.mxu0
        %v6318 = vpop.f32.mrf.mxu0
        %v6319 = vadd.f32 0.0, %v6318
        %v6320 = vpop.f32.mrf.mxu0
        %6321 = vmatprep.mubr.bf16.mxu0 0
        %6322 = vmatmul.mubr.bf16.gmra.mxu0 %v6172
        %v6323 = vpop.f32.mrf.mxu0
        %v6324 = vadd.f32 0.0, %v6323
        %v6325 = vpop.f32.mrf.mxu0
        %v6326 = vpop.f32.mrf.mxu0
        %v6327 = vadd.f32 0.0, %v6326
        %v6328 = vpop.f32.mrf.mxu0
        %6329 = vmatprep.mubr.bf16.mxu0 0
        %6330 = vmatmul.mubr.bf16.gmra.mxu0 %v6175
        %v6331 = vpop.f32.mrf.mxu0
        %v6332 = vadd.f32 0.0, %v6331
        %v6333 = vpop.f32.mrf.mxu0
        %v6334 = vpop.f32.mrf.mxu0
        %v6335 = vadd.f32 0.0, %v6334
        %v6336 = vpop.f32.mrf.mxu0
        %6337 = vdwg.mxu0
        %v6338 = vadd.f32 %v5840, %v6212
        %v6339 = vadd.f32 %v5841, %v6215
        %v6340 = vadd.f32 %v5842, %v6220
        %v6341 = vadd.f32 %v5843, %v6223
        %v6342 = vadd.f32 %v5844, %v6228
        %v6343 = vadd.f32 %v5845, %v6231
        %v6344 = vadd.f32 %v5846, %v6236
        %v6345 = vadd.f32 %v5847, %v6239
        %v6346 = vadd.f32 %v5848, %v6244
        %v6347 = vadd.f32 %v5849, %v6247
        %v6348 = vadd.f32 %v5850, %v6252
        %v6349 = vadd.f32 %v5851, %v6255
        %v6350 = vadd.f32 %v5852, %v6260
        %v6351 = vadd.f32 %v5853, %v6263
        %v6352 = vadd.f32 %v5854, %v6268
        %v6353 = vadd.f32 %v5855, %v6271
        %v6354 = vadd.f32 %v5856, %v6276
        %v6355 = vadd.f32 %v5857, %v6279
        %v6356 = vadd.f32 %v5858, %v6284
        %v6357 = vadd.f32 %v5859, %v6287
        %v6358 = vadd.f32 %v5860, %v6292
        %v6359 = vadd.f32 %v5861, %v6295
        %v6360 = vadd.f32 %v5862, %v6300
        %v6361 = vadd.f32 %v5863, %v6303
        %v6362 = vadd.f32 %v5864, %v6308
        %v6363 = vadd.f32 %v5865, %v6311
        %v6364 = vadd.f32 %v5866, %v6316
        %v6365 = vadd.f32 %v5867, %v6319
        %v6366 = vadd.f32 %v5868, %v6324
        %v6367 = vadd.f32 %v5869, %v6327
        %v6368 = vadd.f32 %v5870, %v6332
        %v6369 = vadd.f32 %v5871, %v6335
        %6402 = vrot.lane.b32.xlu0 %v3697, 32
        %v6403 = vpop.permute.xlu0 %6402
        %6404 = vrot.lane.b32.xlu0 %v3698, 32
        %v6405 = vpop.permute.xlu0 %6404
        %6406 = vrot.lane.b32.xlu0 %v3699, 32
        %v6407 = vpop.permute.xlu0 %6406
        %6408 = vrot.lane.b32.xlu0 %v3700, 32
        %v6409 = vpop.permute.xlu0 %6408
        %6410 = vrot.lane.b32.xlu0 %v3701, 32
        %v6411 = vpop.permute.xlu0 %6410
        %6412 = vrot.lane.b32.xlu0 %v3702, 32
        %v6413 = vpop.permute.xlu0 %6412
        %6414 = vrot.lane.b32.xlu0 %v3703, 32
        %v6415 = vpop.permute.xlu0 %6414
        %6416 = vrot.lane.b32.xlu0 %v3704, 32
        %v6417 = vpop.permute.xlu0 %6416
        %6418 = vrot.lane.b32.xlu0 %v3705, 32
        %v6419 = vpop.permute.xlu0 %6418
        %6420 = vrot.lane.b32.xlu0 %v3706, 32
        %v6421 = vpop.permute.xlu0 %6420
        %6422 = vrot.lane.b32.xlu0 %v3707, 32
        %v6423 = vpop.permute.xlu0 %6422
        %6424 = vrot.lane.b32.xlu0 %v3708, 32
        %v6425 = vpop.permute.xlu0 %6424
        %6426 = vrot.lane.b32.xlu0 %v3709, 32
        %v6427 = vpop.permute.xlu0 %6426
        %6428 = vrot.lane.b32.xlu0 %v3710, 32
        %v6429 = vpop.permute.xlu0 %6428
        %6430 = vrot.lane.b32.xlu0 %v3711, 32
        %v6431 = vpop.permute.xlu0 %6430
        %6432 = vrot.lane.b32.xlu0 %v3712, 32
        %v6433 = vpop.permute.xlu0 %6432
        %6434 = vrot.lane.b32.xlu0 %v3713, 32
        %v6435 = vpop.permute.xlu0 %6434
        %6436 = vrot.lane.b32.xlu0 %v3714, 32
        %v6437 = vpop.permute.xlu0 %6436
        %6438 = vrot.lane.b32.xlu0 %v3715, 32
        %v6439 = vpop.permute.xlu0 %6438
        %6440 = vrot.lane.b32.xlu0 %v3716, 32
        %v6441 = vpop.permute.xlu0 %6440
        %6442 = vrot.lane.b32.xlu0 %v3717, 32
        %v6443 = vpop.permute.xlu0 %6442
        %6444 = vrot.lane.b32.xlu0 %v3718, 32
        %v6445 = vpop.permute.xlu0 %6444
        %6446 = vrot.lane.b32.xlu0 %v3719, 32
        %v6447 = vpop.permute.xlu0 %6446
        %6448 = vrot.lane.b32.xlu0 %v3720, 32
        %v6449 = vpop.permute.xlu0 %6448
        %6450 = vrot.lane.b32.xlu0 %v3721, 32
        %v6451 = vpop.permute.xlu0 %6450
        %6452 = vrot.lane.b32.xlu0 %v3722, 32
        %v6453 = vpop.permute.xlu0 %6452
        %6454 = vrot.lane.b32.xlu0 %v3723, 32
        %v6455 = vpop.permute.xlu0 %6454
        %6456 = vrot.lane.b32.xlu0 %v3724, 32
        %v6457 = vpop.permute.xlu0 %6456
        %6458 = vrot.lane.b32.xlu0 %v3725, 32
        %v6459 = vpop.permute.xlu0 %6458
        %6460 = vrot.lane.b32.xlu0 %v3726, 32
        %v6461 = vpop.permute.xlu0 %6460
        %6462 = vrot.lane.b32.xlu0 %v3727, 32
        %v6463 = vpop.permute.xlu0 %6462
        %6464 = vrot.lane.b32.xlu0 %v3728, 32
        %v6465 = vpop.permute.xlu0 %6464
        %6530 = vrot.lane.b32.xlu0 %v5226, 64
        %v6531 = vpop.permute.xlu0 %6530
        %6532 = vrot.lane.b32.xlu0 %v5227, 64
        %v6533 = vpop.permute.xlu0 %6532
        %6534 = vrot.lane.b32.xlu0 %v5228, 64
        %v6535 = vpop.permute.xlu0 %6534
        %6536 = vrot.lane.b32.xlu0 %v5229, 64
        %v6537 = vpop.permute.xlu0 %6536
        %6538 = vrot.lane.b32.xlu0 %v5230, 64
        %v6539 = vpop.permute.xlu0 %6538
        %6540 = vrot.lane.b32.xlu0 %v5231, 64
        %v6541 = vpop.permute.xlu0 %6540
        %6542 = vrot.lane.b32.xlu0 %v5232, 64
        %v6543 = vpop.permute.xlu0 %6542
        %6544 = vrot.lane.b32.xlu0 %v5233, 64
        %v6545 = vpop.permute.xlu0 %6544
        %6546 = vrot.lane.b32.xlu0 %v5234, 64
        %v6547 = vpop.permute.xlu0 %6546
        %6548 = vrot.lane.b32.xlu0 %v5235, 64
        %v6549 = vpop.permute.xlu0 %6548
        %6550 = vrot.lane.b32.xlu0 %v5236, 64
        %v6551 = vpop.permute.xlu0 %6550
        %6552 = vrot.lane.b32.xlu0 %v5237, 64
        %v6553 = vpop.permute.xlu0 %6552
        %6554 = vrot.lane.b32.xlu0 %v5238, 64
        %v6555 = vpop.permute.xlu0 %6554
        %6556 = vrot.lane.b32.xlu0 %v5239, 64
        %v6557 = vpop.permute.xlu0 %6556
        %6558 = vrot.lane.b32.xlu0 %v5240, 64
        %v6559 = vpop.permute.xlu0 %6558
        %6560 = vrot.lane.b32.xlu0 %v5241, 64
        %v6561 = vpop.permute.xlu0 %6560
        %6562 = vrot.lane.b32.xlu0 %v5242, 64
        %v6563 = vpop.permute.xlu0 %6562
        %6564 = vrot.lane.b32.xlu0 %v5243, 64
        %v6565 = vpop.permute.xlu0 %6564
        %6566 = vrot.lane.b32.xlu0 %v5244, 64
        %v6567 = vpop.permute.xlu0 %6566
        %6568 = vrot.lane.b32.xlu0 %v5245, 64
        %v6569 = vpop.permute.xlu0 %6568
        %6570 = vrot.lane.b32.xlu0 %v5246, 64
        %v6571 = vpop.permute.xlu0 %6570
        %6572 = vrot.lane.b32.xlu0 %v5247, 64
        %v6573 = vpop.permute.xlu0 %6572
        %6574 = vrot.lane.b32.xlu0 %v5248, 64
        %v6575 = vpop.permute.xlu0 %6574
        %6576 = vrot.lane.b32.xlu0 %v5249, 64
        %v6577 = vpop.permute.xlu0 %6576
        %6578 = vrot.lane.b32.xlu0 %v5250, 64
        %v6579 = vpop.permute.xlu0 %6578
        %6580 = vrot.lane.b32.xlu0 %v5251, 64
        %v6581 = vpop.permute.xlu0 %6580
        %6582 = vrot.lane.b32.xlu0 %v5252, 64
        %v6583 = vpop.permute.xlu0 %6582
        %6584 = vrot.lane.b32.xlu0 %v5253, 64
        %v6585 = vpop.permute.xlu0 %6584
        %6586 = vrot.lane.b32.xlu0 %v5254, 64
        %v6587 = vpop.permute.xlu0 %6586
        %6588 = vrot.lane.b32.xlu0 %v5255, 64
        %v6589 = vpop.permute.xlu0 %6588
        %6590 = vrot.lane.b32.xlu0 %v5256, 64
        %v6591 = vpop.permute.xlu0 %6590
        %6592 = vrot.lane.b32.xlu0 %v5257, 64
        %v6593 = vpop.permute.xlu0 %6592
        %6658 = vrot.lane.b32.xlu0 %v6338, 96
        %v6659 = vpop.permute.xlu0 %6658
        %6660 = vrot.lane.b32.xlu0 %v6339, 96
        %v6661 = vpop.permute.xlu0 %6660
        %6662 = vrot.lane.b32.xlu0 %v6340, 96
        %v6663 = vpop.permute.xlu0 %6662
        %6664 = vrot.lane.b32.xlu0 %v6341, 96
        %v6665 = vpop.permute.xlu0 %6664
        %6666 = vrot.lane.b32.xlu0 %v6342, 96
        %v6667 = vpop.permute.xlu0 %6666
        %6668 = vrot.lane.b32.xlu0 %v6343, 96
        %v6669 = vpop.permute.xlu0 %6668
        %6670 = vrot.lane.b32.xlu0 %v6344, 96
        %v6671 = vpop.permute.xlu0 %6670
        %6672 = vrot.lane.b32.xlu0 %v6345, 96
        %v6673 = vpop.permute.xlu0 %6672
        %6674 = vrot.lane.b32.xlu0 %v6346, 96
        %v6675 = vpop.permute.xlu0 %6674
        %6676 = vrot.lane.b32.xlu0 %v6347, 96
        %v6677 = vpop.permute.xlu0 %6676
        %6678 = vrot.lane.b32.xlu0 %v6348, 96
        %v6679 = vpop.permute.xlu0 %6678
        %6680 = vrot.lane.b32.xlu0 %v6349, 96
        %v6681 = vpop.permute.xlu0 %6680
        %6682 = vrot.lane.b32.xlu0 %v6350, 96
        %v6683 = vpop.permute.xlu0 %6682
        %6684 = vrot.lane.b32.xlu0 %v6351, 96
        %v6685 = vpop.permute.xlu0 %6684
        %6686 = vrot.lane.b32.xlu0 %v6352, 96
        %v6687 = vpop.permute.xlu0 %6686
        %6688 = vrot.lane.b32.xlu0 %v6353, 96
        %v6689 = vpop.permute.xlu0 %6688
        %6690 = vrot.lane.b32.xlu0 %v6354, 96
        %v6691 = vpop.permute.xlu0 %6690
        %6692 = vrot.lane.b32.xlu0 %v6355, 96
        %v6693 = vpop.permute.xlu0 %6692
        %6694 = vrot.lane.b32.xlu0 %v6356, 96
        %v6695 = vpop.permute.xlu0 %6694
        %6696 = vrot.lane.b32.xlu0 %v6357, 96
        %v6697 = vpop.permute.xlu0 %6696
        %6698 = vrot.lane.b32.xlu0 %v6358, 96
        %v6699 = vpop.permute.xlu0 %6698
        %6700 = vrot.lane.b32.xlu0 %v6359, 96
        %v6701 = vpop.permute.xlu0 %6700
        %6702 = vrot.lane.b32.xlu0 %v6360, 96
        %v6703 = vpop.permute.xlu0 %6702
        %6704 = vrot.lane.b32.xlu0 %v6361, 96
        %v6705 = vpop.permute.xlu0 %6704
        %6706 = vrot.lane.b32.xlu0 %v6362, 96
        %v6707 = vpop.permute.xlu0 %6706
        %6708 = vrot.lane.b32.xlu0 %v6363, 96
        %v6709 = vpop.permute.xlu0 %6708
        %6710 = vrot.lane.b32.xlu0 %v6364, 96
        %v6711 = vpop.permute.xlu0 %6710
        %6712 = vrot.lane.b32.xlu0 %v6365, 96
        %v6713 = vpop.permute.xlu0 %6712
        %6714 = vrot.lane.b32.xlu0 %v6366, 96
        %v6715 = vpop.permute.xlu0 %6714
        %6716 = vrot.lane.b32.xlu0 %v6367, 96
        %v6717 = vpop.permute.xlu0 %6716
        %6718 = vrot.lane.b32.xlu0 %v6368, 96
        %v6719 = vpop.permute.xlu0 %6718
        %6720 = vrot.lane.b32.xlu0 %v6369, 96
        %v6721 = vpop.permute.xlu0 %6720
        %vm6754 = vcmask 261120
        %v6755 = vsel %vm6754, %v2326, %v6403
        %v6756 = vsel %vm6754, %v2327, %v6405
        %v6757 = vsel %vm6754, %v2328, %v6407
        %v6758 = vsel %vm6754, %v2329, %v6409
        %v6759 = vsel %vm6754, %v2330, %v6411
        %v6760 = vsel %vm6754, %v2331, %v6413
        %v6761 = vsel %vm6754, %v2332, %v6415
        %v6762 = vsel %vm6754, %v2333, %v6417
        %v6763 = vsel %vm6754, %v2334, %v6419
        %v6764 = vsel %vm6754, %v2335, %v6421
        %v6765 = vsel %vm6754, %v2336, %v6423
        %v6766 = vsel %vm6754, %v2337, %v6425
        %v6767 = vsel %vm6754, %v2338, %v6427
        %v6768 = vsel %vm6754, %v2339, %v6429
        %v6769 = vsel %vm6754, %v2340, %v6431
        %v6770 = vsel %vm6754, %v2341, %v6433
        %v6771 = vsel %vm6754, %v2342, %v6435
        %v6772 = vsel %vm6754, %v2343, %v6437
        %v6773 = vsel %vm6754, %v2344, %v6439
        %v6774 = vsel %vm6754, %v2345, %v6441
        %v6775 = vsel %vm6754, %v2346, %v6443
        %v6776 = vsel %vm6754, %v2347, %v6445
        %v6777 = vsel %vm6754, %v2348, %v6447
        %v6778 = vsel %vm6754, %v2349, %v6449
        %v6779 = vsel %vm6754, %v2350, %v6451
        %v6780 = vsel %vm6754, %v2351, %v6453
        %v6781 = vsel %vm6754, %v2352, %v6455
        %v6782 = vsel %vm6754, %v2353, %v6457
        %v6783 = vsel %vm6754, %v2354, %v6459
        %v6784 = vsel %vm6754, %v2355, %v6461
        %v6785 = vsel %vm6754, %v2356, %v6463
        %v6786 = vsel %vm6754, %v2357, %v6465
        %v6787 = vsel %vm727, %v6755, %v6531
        %v6788 = vsel %vm727, %v6756, %v6533
        %v6789 = vsel %vm727, %v6757, %v6535
        %v6790 = vsel %vm727, %v6758, %v6537
        %v6791 = vsel %vm727, %v6759, %v6539
        %v6792 = vsel %vm727, %v6760, %v6541
        %v6793 = vsel %vm727, %v6761, %v6543
        %v6794 = vsel %vm727, %v6762, %v6545
        %v6795 = vsel %vm727, %v6763, %v6547
        %v6796 = vsel %vm727, %v6764, %v6549
        %v6797 = vsel %vm727, %v6765, %v6551
        %v6798 = vsel %vm727, %v6766, %v6553
        %v6799 = vsel %vm727, %v6767, %v6555
        %v6800 = vsel %vm727, %v6768, %v6557
        %v6801 = vsel %vm727, %v6769, %v6559
        %v6802 = vsel %vm727, %v6770, %v6561
        %v6803 = vsel %vm727, %v6771, %v6563
        %v6804 = vsel %vm727, %v6772, %v6565
        %v6805 = vsel %vm727, %v6773, %v6567
        %v6806 = vsel %vm727, %v6774, %v6569
        %v6807 = vsel %vm727, %v6775, %v6571
        %v6808 = vsel %vm727, %v6776, %v6573
        %v6809 = vsel %vm727, %v6777, %v6575
        %v6810 = vsel %vm727, %v6778, %v6577
        %v6811 = vsel %vm727, %v6779, %v6579
        %v6812 = vsel %vm727, %v6780, %v6581
        %v6813 = vsel %vm727, %v6781, %v6583
        %v6814 = vsel %vm727, %v6782, %v6585
        %v6815 = vsel %vm727, %v6783, %v6587
        %v6816 = vsel %vm727, %v6784, %v6589
        %v6817 = vsel %vm727, %v6785, %v6591
        %v6818 = vsel %vm727, %v6786, %v6593
        %vm6819 = vcmask 785408
        %v6820 = vsel %vm6819, %v6787, %v6659
        %v6821 = vsel %vm6819, %v6788, %v6661
        %v6822 = vsel %vm6819, %v6789, %v6663
        %v6823 = vsel %vm6819, %v6790, %v6665
        %v6824 = vsel %vm6819, %v6791, %v6667
        %v6825 = vsel %vm6819, %v6792, %v6669
        %v6826 = vsel %vm6819, %v6793, %v6671
        %v6827 = vsel %vm6819, %v6794, %v6673
        %v6828 = vsel %vm6819, %v6795, %v6675
        %v6829 = vsel %vm6819, %v6796, %v6677
        %v6830 = vsel %vm6819, %v6797, %v6679
        %v6831 = vsel %vm6819, %v6798, %v6681
        %v6832 = vsel %vm6819, %v6799, %v6683
        %v6833 = vsel %vm6819, %v6800, %v6685
        %v6834 = vsel %vm6819, %v6801, %v6687
        %v6835 = vsel %vm6819, %v6802, %v6689
        %v6836 = vsel %vm6819, %v6803, %v6691
        %v6837 = vsel %vm6819, %v6804, %v6693
        %v6838 = vsel %vm6819, %v6805, %v6695
        %v6839 = vsel %vm6819, %v6806, %v6697
        %v6840 = vsel %vm6819, %v6807, %v6699
        %v6841 = vsel %vm6819, %v6808, %v6701
        %v6842 = vsel %vm6819, %v6809, %v6703
        %v6843 = vsel %vm6819, %v6810, %v6705
        %v6844 = vsel %vm6819, %v6811, %v6707
        %v6845 = vsel %vm6819, %v6812, %v6709
        %v6846 = vsel %vm6819, %v6813, %v6711
        %v6847 = vsel %vm6819, %v6814, %v6713
        %v6848 = vsel %vm6819, %v6815, %v6715
        %v6849 = vsel %vm6819, %v6816, %v6717
        %v6850 = vsel %vm6819, %v6817, %v6719
        %v6851 = vsel %vm6819, %v6818, %v6721
        %v6852 = vld [vmem:[%s2] sm:$0x1]
        %v6854 = vlaneseq
        %v6855 = vshrl.u32 %v6854, 7
        %v6856 = vsub.s32 0, %v6855
        %v6857 = vrot.slane %v6852, %v6856
        %v6859 = vadd.f32 %v6820, %v6857
        %v6860 = vadd.f32 %v6821, %v6857
        %v6861 = vadd.f32 %v6822, %v6857
        %v6862 = vadd.f32 %v6823, %v6857
        %v6863 = vadd.f32 %v6824, %v6857
        %v6864 = vadd.f32 %v6825, %v6857
        %v6865 = vadd.f32 %v6826, %v6857
        %v6866 = vadd.f32 %v6827, %v6857
        %v6867 = vadd.f32 %v6828, %v6857
        %v6868 = vadd.f32 %v6829, %v6857
        %v6869 = vadd.f32 %v6830, %v6857
        %v6870 = vadd.f32 %v6831, %v6857
        %v6871 = vadd.f32 %v6832, %v6857
        %v6872 = vadd.f32 %v6833, %v6857
        %v6873 = vadd.f32 %v6834, %v6857
        %v6874 = vadd.f32 %v6835, %v6857
        %v6875 = vadd.f32 %v6836, %v6857
        %v6876 = vadd.f32 %v6837, %v6857
        %v6877 = vadd.f32 %v6838, %v6857
        %v6878 = vadd.f32 %v6839, %v6857
        %v6879 = vadd.f32 %v6840, %v6857
        %v6880 = vadd.f32 %v6841, %v6857
        %v6881 = vadd.f32 %v6842, %v6857
        %v6882 = vadd.f32 %v6843, %v6857
        %v6883 = vadd.f32 %v6844, %v6857
        %v6884 = vadd.f32 %v6845, %v6857
        %v6885 = vadd.f32 %v6846, %v6857
        %v6886 = vadd.f32 %v6847, %v6857
        %v6887 = vadd.f32 %v6848, %v6857
        %v6888 = vadd.f32 %v6849, %v6857
        %v6889 = vadd.f32 %v6850, %v6857
        %v6890 = vadd.f32 %v6851, %v6857
        %v6891 = vtanh.pop %v6859
        %v6892 = vtanh.pop %v6860
        %v6893 = vtanh.pop %v6861
        %v6894 = vtanh.pop %v6862
        %v6895 = vtanh.pop %v6863
        %v6896 = vtanh.pop %v6864
        %v6897 = vtanh.pop %v6865
        %v6898 = vtanh.pop %v6866
        %v6899 = vtanh.pop %v6867
        %v6900 = vtanh.pop %v6868
        %v6901 = vtanh.pop %v6869
        %v6902 = vtanh.pop %v6870
        %v6903 = vtanh.pop %v6871
        %v6904 = vtanh.pop %v6872
        %v6905 = vtanh.pop %v6873
        %v6906 = vtanh.pop %v6874
        %v6907 = vtanh.pop %v6875
        %v6908 = vtanh.pop %v6876
        %v6909 = vtanh.pop %v6877
        %v6910 = vtanh.pop %v6878
        %v6911 = vtanh.pop %v6879
        %v6912 = vtanh.pop %v6880
        %v6913 = vtanh.pop %v6881
        %v6914 = vtanh.pop %v6882
        %v6915 = vtanh.pop %v6883
        %v6916 = vtanh.pop %v6884
        %v6917 = vtanh.pop %v6885
        %v6918 = vtanh.pop %v6886
        %v6919 = vtanh.pop %v6887
        %v6920 = vtanh.pop %v6888
        %v6921 = vtanh.pop %v6889
        %v6922 = vtanh.pop %v6890
        %v6923 = vpack.c.bf16 %v6892, %v6891
        %v6924 = vpack.c.bf16 %v6894, %v6893
        %v6925 = vpack.c.bf16 %v6896, %v6895
        %v6926 = vpack.c.bf16 %v6898, %v6897
        %v6927 = vpack.c.bf16 %v6900, %v6899
        %v6928 = vpack.c.bf16 %v6902, %v6901
        %v6929 = vpack.c.bf16 %v6904, %v6903
        %v6930 = vpack.c.bf16 %v6906, %v6905
        %v6931 = vpack.c.bf16 %v6908, %v6907
        %v6932 = vpack.c.bf16 %v6910, %v6909
        %v6933 = vpack.c.bf16 %v6912, %v6911
        %v6934 = vpack.c.bf16 %v6914, %v6913
        %v6935 = vpack.c.bf16 %v6916, %v6915
        %v6936 = vpack.c.bf16 %v6918, %v6917
        %v6937 = vpack.c.bf16 %v6920, %v6919
        %v6938 = vpack.c.bf16 %v6922, %v6921
        %v6955 = vunpack.c.l.b16 %v6923
        %v6956 = vunpack.c.h.b16 %v6923
        %v6957 = vunpack.c.l.b16 %v6924
        %v6958 = vunpack.c.h.b16 %v6924
        %v6959 = vunpack.c.l.b16 %v6925
        %v6960 = vunpack.c.h.b16 %v6925
        %v6961 = vunpack.c.l.b16 %v6926
        %v6962 = vunpack.c.h.b16 %v6926
        %v6963 = vunpack.c.l.b16 %v6927
        %v6964 = vunpack.c.h.b16 %v6927
        %v6965 = vunpack.c.l.b16 %v6928
        %v6966 = vunpack.c.h.b16 %v6928
        %v6967 = vunpack.c.l.b16 %v6929
        %v6968 = vunpack.c.h.b16 %v6929
        %v6969 = vunpack.c.l.b16 %v6930
        %v6970 = vunpack.c.h.b16 %v6930
        %v6971 = vunpack.c.l.b16 %v6931
        %v6972 = vunpack.c.h.b16 %v6931
        %v6973 = vunpack.c.l.b16 %v6932
        %v6974 = vunpack.c.h.b16 %v6932
        %v6975 = vunpack.c.l.b16 %v6933
        %v6976 = vunpack.c.h.b16 %v6933
        %v6977 = vunpack.c.l.b16 %v6934
        %v6978 = vunpack.c.h.b16 %v6934
        %v6979 = vunpack.c.l.b16 %v6935
        %v6980 = vunpack.c.h.b16 %v6935
        %v6981 = vunpack.c.l.b16 %v6936
        %v6982 = vunpack.c.h.b16 %v6936
        %v6983 = vunpack.c.l.b16 %v6937
        %v6984 = vunpack.c.h.b16 %v6937
        %v6985 = vunpack.c.l.b16 %v6938
        %v6986 = vunpack.c.h.b16 %v6938
        %v6987 = vpack.c.b16 %v6955, %v6955
        %v6988 = vpack.c.b16 %v6956, %v6956
        %v6989 = vpack.c.b16 %v6957, %v6957
        %v6990 = vpack.c.b16 %v6958, %v6958
        %v6991 = vpack.c.b16 %v6959, %v6959
        %v6992 = vpack.c.b16 %v6960, %v6960
        %v6993 = vpack.c.b16 %v6961, %v6961
        %v6994 = vpack.c.b16 %v6962, %v6962
        %v6995 = vpack.c.b16 %v6963, %v6963
        %v6996 = vpack.c.b16 %v6964, %v6964
        %v6997 = vpack.c.b16 %v6965, %v6965
        %v6998 = vpack.c.b16 %v6966, %v6966
        %v6999 = vpack.c.b16 %v6967, %v6967
        %v7000 = vpack.c.b16 %v6968, %v6968
        %v7001 = vpack.c.b16 %v6969, %v6969
        %v7002 = vpack.c.b16 %v6970, %v6970
        %v7003 = vpack.c.b16 %v6971, %v6971
        %v7004 = vpack.c.b16 %v6972, %v6972
        %v7005 = vpack.c.b16 %v6973, %v6973
        %v7006 = vpack.c.b16 %v6974, %v6974
        %v7007 = vpack.c.b16 %v6975, %v6975
        %v7008 = vpack.c.b16 %v6976, %v6976
        %v7009 = vpack.c.b16 %v6977, %v6977
        %v7010 = vpack.c.b16 %v6978, %v6978
        %v7011 = vpack.c.b16 %v6979, %v6979
        %v7012 = vpack.c.b16 %v6980, %v6980
        %v7013 = vpack.c.b16 %v6981, %v6981
        %v7014 = vpack.c.b16 %v6982, %v6982
        %v7015 = vpack.c.b16 %v6983, %v6983
        %v7016 = vpack.c.b16 %v6984, %v6984
        %v7017 = vpack.c.b16 %v6985, %v6985
        %v7018 = vpack.c.b16 %v6986, %v6986
        %7051 = vst [vmem:[%s163] sm:$0xf] %v6987
        %7052 = vst [vmem:[%s163 + $0x4] sm:$0xf] %v6988
        %7053 = vst [vmem:[%s163 + $0x8] sm:$0xf] %v6989
        %7054 = vst [vmem:[%s163 + $0xc] sm:$0xf] %v6990
        %7055 = vst [vmem:[%s163 + $0x10] sm:$0xf] %v6991
        %7056 = vst [vmem:[%s163 + $0x14] sm:$0xf] %v6992
        %7057 = vst [vmem:[%s163 + $0x18] sm:$0xf] %v6993
        %7058 = vst [vmem:[%s163 + $0x1c] sm:$0xf] %v6994
        %7059 = vst [vmem:[%s163 + $0x20] sm:$0xf] %v6995
        %7060 = vst [vmem:[%s163 + $0x24] sm:$0xf] %v6996
        %7061 = vst [vmem:[%s163 + $0x28] sm:$0xf] %v6997
        %7062 = vst [vmem:[%s163 + $0x2c] sm:$0xf] %v6998
        %7063 = vst [vmem:[%s163 + $0x30] sm:$0xf] %v6999
        %7064 = vst [vmem:[%s163 + $0x34] sm:$0xf] %v7000
        %7065 = vst [vmem:[%s163 + $0x38] sm:$0xf] %v7001
        %7066 = vst [vmem:[%s163 + $0x3c] sm:$0xf] %v7002
        %7067 = vst [vmem:[%s163 + $0x40] sm:$0xf] %v7003
        %7068 = vst [vmem:[%s163 + $0x44] sm:$0xf] %v7004
        %7069 = vst [vmem:[%s163 + $0x48] sm:$0xf] %v7005
        %7070 = vst [vmem:[%s163 + $0x4c] sm:$0xf] %v7006
        %7071 = vst [vmem:[%s163 + $0x50] sm:$0xf] %v7007
        %7072 = vst [vmem:[%s163 + $0x54] sm:$0xf] %v7008
        %7073 = vst [vmem:[%s163 + $0x58] sm:$0xf] %v7009
        %7074 = vst [vmem:[%s163 + $0x5c] sm:$0xf] %v7010
        %7075 = vst [vmem:[%s163 + $0x60] sm:$0xf] %v7011
        %7076 = vst [vmem:[%s163 + $0x64] sm:$0xf] %v7012
        %7077 = vst [vmem:[%s163 + $0x68] sm:$0xf] %v7013
        %7078 = vst [vmem:[%s163 + $0x6c] sm:$0xf] %v7014
        %7079 = vst [vmem:[%s163 + $0x70] sm:$0xf] %v7015
        %7080 = vst [vmem:[%s163 + $0x74] sm:$0xf] %v7016
        %7081 = vst [vmem:[%s163 + $0x78] sm:$0xf] %v7017
        %7082 = vst [vmem:[%s163 + $0x7c] sm:$0xf] %v7018
        %s7083 = sand.u32 %s93, 1
        %s7084 = scalar_lea.sflag [#allocation3], %s7083
        %s7085 = sand.u32 %s93, 1
        %s7086 = smul.addr %s7085, 128
        %s7087 = scalar_lea.vmem [#allocation2], %s7086
        // Predicated region
        $region33: #{tpu_custom_call.1} parent=31 // pred_check
          %p7088 = pneg %p103
        $region34: #{tpu_custom_call.1} parent=31 // pred_check_branch
          %7090 = sbr.rel (%p7088) target = $region36
        $region35: #{tpu_custom_call.1} parent=31 // pred_region
          %s7092 = ssub.s32 2048, 2048
          %7093 = vsyncadd %s7084, %s7092
          %s7094 = smul.addr %s17, 32
          %s7095 = smul.addr %s7094, 64
          %s7096 = scalar_lea.hbm %s3, %s7095
          %s7097 = sshll.u32 %s7087, 4
          %s7098 = int_to_ptr.vmem [resolvable:$true] %s7097
          %7103 = dma.vmem_to_hbm [thread:$0]  %s7098, 2048, %s7096, %s7084, 64, 64, 4
        $region36: #{tpu_custom_call.1} parent=31 // pred_fallthru
          _
      $region32: #{tpu_custom_call.1} parent=5 // pred_fallthru
        _
      %p7104 = scmp.le.s32.totalorder 2, %s12
      // Predicated region
      $region37: #{tpu_custom_call.1} parent=5 // pred_check
        %p7105 = pneg %p7104
      $region38: #{tpu_custom_call.1} parent=5 // pred_check_branch
        %7107 = sbr.rel (%p7105) target = $region40
      $region39: #{tpu_custom_call.1} parent=5 // pred_region
        %s7108 = ssub.s32 %s12, 2
        // Predicated region
        $region41: #{tpu_custom_call.1} parent=39 // pred_check
          %p7109 = pneg %p109
        $region42: #{tpu_custom_call.1} parent=39 // pred_check_branch
          %7111 = sbr.rel (%p7109) target = $region44
        $region43: #{tpu_custom_call.1} parent=39 // pred_region
          %s7112 = sand.u32 %s94, 1
          %s7113 = scalar_lea.sflag [#allocation3], %s7112
          %s7114 = sand.u32 %s94, 1
          %s7115 = smul.addr %s7114, 128
          %s7116 = scalar_lea.vmem [#allocation2], %s7115
          %7117 = dma.done %s7113, 2048
        $region44: #{tpu_custom_call.1} parent=39 // pred_fallthru
          _
      $region40: #{tpu_custom_call.1} parent=5 // pred_fallthru
        _
    $region6: #{tpu_custom_call.1} parent=1 // loop_footer
      %s16 = sadd.s32 1, %s12
    $region7: #{tpu_custom_call.1} parent=1 // loop_footer_branch
      %11 = sbr.rel target = $region3
    $region8: #{tpu_custom_call.1} parent=1 // loop_exit
      _
    %7118 = vsyncpa [#allocation3], 1
    %s7119 = scalar_lea.sflag [#allocation3], 1
    %7120 = vsyncpa %s7119, 1

</llo_original>
